<compile_context>
chip_gen: v6e
topology: v6e:2x2x1
jax: 0.10.0
libtpu: 0.0.40
codegen_flags: <defaults>
</compile_context>

<pallas_src>
import jax
import jax.numpy as jnp
from jax.experimental import pallas as pl
from jax.experimental.pallas import tpu as pltpu

# ----------------------------- problem sizes --------------------------------
B = 2            # batch
H = W = 16       # spatial
C = 4            # channels
HW = H * W

N_SHAPE = 100    # FLAME shape coeffs  (DECA 'shape')
N_EXP = 50       # FLAME expression coeffs (DECA 'exp')
N_POSE = 6       # FLAME pose coeffs (DECA 'pose')
N_PARAMS = N_SHAPE + N_EXP + N_POSE

N_VERT = 128     # (small synthetic FLAME mesh; real FLAME has 5023 verts)
V3 = N_VERT * 3


# ------------------------------- Pallas kernel ------------------------------
def pl_loss_kernel(imgs_ref,      # (B, 3C, HW)  per-batch channel rows: [src|tgt|swp]
                   w_ref,         # (2C, V3)     folded encoder+blendshape weights
                   out_ref):      # (1, 1)       scalar loss, SMEM

    # Global average pool over the spatial (lane) axis -> (B, 3C).
    pooled = jnp.mean(imgs_ref[...], axis=-1)

    # Column layout: [source c0..c3 | target c0..c3 | swap c0..c3].
    d1 = pooled[:, 0:C] - pooled[:, 2 * C:3 * C]      # src - swp  -> shape coeffs
    d2 = pooled[:, C:2 * C] - pooled[:, 2 * C:3 * C]  # tgt - swp  -> exp/pose coeffs

    w = w_ref[...]                                    # (2C, V3)

    # vert_true - vert_fake = d1 @ W_sh + d2 @ W_ep, as 2C VPU broadcast-FMAs
    # (K = 8: no tiny MXU call; v_template and the encoder bias cancel exactly).
    vdiff = d1[:, 0:1] * w[0:1, :]                    # (B, V3)
    for c in range(1, C):
        vdiff = vdiff + d1[:, c:c + 1] * w[c:c + 1, :]
    for c in range(C):
        vdiff = vdiff + d2[:, c:c + 1] * w[C + c:C + c + 1, :]

    loss = jnp.sum(jnp.abs(vdiff)) * (1.0 / (B * V3))
    out_ref[0, 0] = loss


def pl_loss(source, target, swap, w_fold):
    """source/target/swap: (B, H, W, C) float32 images.  w_fold: (2C, V3)."""
    # Per-call layout plumbing (unavoidable: images change every call, ~24 KiB):
    # pack the three images as (B, 3C, HW) so HW sits on the 128-lane axis.
    imgs = jnp.concatenate([source, target, swap], axis=-1)     # (B, H, W, 3C)
    imgs = jnp.transpose(imgs, (0, 3, 1, 2)).reshape(B, 3 * C, HW)

    vmem = pl.BlockSpec(memory_space=pltpu.MemorySpace.VMEM)
    out = pl.pallas_call(
        pl_loss_kernel,
        out_shape=jax.ShapeDtypeStruct((1, 1), jnp.float32),
        in_specs=[vmem, vmem],
        out_specs=pl.BlockSpec(memory_space=pltpu.MemorySpace.SMEM),
        compiler_params=pltpu.CompilerParams(
            vmem_limit_bytes=8 * 1024 * 1024),
    )(imgs, w_fold)
    return out[0, 0]


# -------------------------- deterministic parameters -------------------------
def init_params():
    keys = jax.random.split(jax.random.PRNGKey(42), 6)
    return {
        "w_enc":      0.05 * jax.random.normal(keys[0], (C, N_PARAMS), jnp.float32),
        "b_enc":      0.01 * jax.random.normal(keys[1], (1, N_PARAMS), jnp.float32),
        "v_template": jax.random.normal(keys[2], (1, V3), jnp.float32),
        "shapedirs":  0.02 * jax.random.normal(keys[3], (N_SHAPE, V3), jnp.float32),
        "expdirs":    0.02 * jax.random.normal(keys[4], (N_EXP, V3), jnp.float32),
        "posedirs":   0.02 * jax.random.normal(keys[5], (N_POSE, V3), jnp.float32),
    }


def fold_params(p):
    """One-time offline fold (weights are frozen in PLLoss).

    Returns W = [w_enc[:, :100] @ shapedirs ; w_enc[:, 100:] @ [expdirs; posedirs]]
    of shape (2C, V3).  b_enc and v_template cancel in vert_true - vert_fake.
    """
    w_sh = p["w_enc"][:, :N_SHAPE] @ p["shapedirs"]                       # (C, V3)
    w_ep = p["w_enc"][:, N_SHAPE:] @ jnp.concatenate(
        [p["expdirs"], p["posedirs"]], axis=0)                            # (C, V3)
    # TODO(synk): cast to bf16 here (and d1/d2 in-kernel) at real FLAME size to
    #             halve the weight stream; kept f32 at toy size for exactness.
    return jnp.concatenate([w_sh, w_ep], axis=0)                          # (2C, V3)


# ------------------------------ reference (JAX) ------------------------------
def pl_loss_ref(source, target, swap, p):
    """Un-simplified reference: full encode + full FLAME with template & bias."""
    def encode(img):
        pooled = jnp.mean(img.reshape(B, HW, C), axis=1)
        prm = pooled @ p["w_enc"] + p["b_enc"]
        return (prm[:, :N_SHAPE],
                prm[:, N_SHAPE:N_SHAPE + N_EXP],
                prm[:, N_SHAPE + N_EXP:])

    s_sh, s_ex, s_po = encode(source)
    t_sh, t_ex, t_po = encode(target)
    w_sh, w_ex, w_po = encode(swap)

    def flame(sh, ex, po):
        return (sh @ p["shapedirs"] + ex @ p["expdirs"] + po @ p["posedirs"]
                + p["v_template"])

    vt = flame(s_sh, t_ex, t_po)
    vf = flame(w_sh, w_ex, w_po)
    return jnp.mean(jnp.abs(vt - vf))


if __name__ == "__main__":
    key = jax.random.PRNGKey(0)
    k1, k2, k3 = jax.random.split(key, 3)
    source = jax.random.normal(k1, (B, H, W, C), jnp.float32)
    target = jax.random.normal(k2, (B, H, W, C), jnp.float32)
    swap = jax.random.normal(k3, (B, H, W, C), jnp.float32)

    params = init_params()
    # Hoisted out of the call path: folding runs ONCE at init, not per call.
    w_fold = jax.block_until_ready(fold_params(params))

    loss = jax.block_until_ready(pl_loss(source, target, swap, w_fold))
    ref = jax.block_until_ready(pl_loss_ref(source, target, swap, params))

    assert jnp.isfinite(loss), "kernel produced non-finite loss"
    assert jnp.allclose(loss, ref, rtol=1e-4, atol=1e-5), (loss, ref)
    print("KERNEL_OK")
</pallas_src>

<mosaic_0001>
module attributes {stable_mosaic.version = 11 : i64} {
  func.func @pl_loss_kernel(%arg0: memref<2x12x256xf32, #tpu.memory_space<vmem>>, %arg1: memref<8x384xf32, #tpu.memory_space<vmem>>, %arg2: memref<1x1xf32, #tpu.memory_space<smem>>) attributes {dimension_semantics = [], scalar_prefetch = 0 : i64, scratch_operands = 0 : i64, tpu.core_type = #tpu.core_type<tc>} {
    %c0 = arith.constant 0 : index
    %c0_0 = arith.constant 0 : index
    %c0_1 = arith.constant 0 : index
    %0 = vector.load %arg0[%c0, %c0_0, %c0_1] : memref<2x12x256xf32, #tpu.memory_space<vmem>>, vector<2x12x256xf32>
    %cst = arith.constant dense<0.000000e+00> : vector<2x12xf32>
    %1 = vector.multi_reduction <add>, %0, %cst [2] : vector<2x12x256xf32> to vector<2x12xf32>
    %cst_2 = arith.constant 2.560000e+02 : f32
    %2 = vector.broadcast %cst_2 : f32 to vector<2x12xf32>
    %3 = arith.divf %1, %2 : vector<2x12xf32>
    %4 = vector.extract_strided_slice %3 {offsets = [0, 0], sizes = [2, 4], strides = [1, 1]} : vector<2x12xf32> to vector<2x4xf32>
    %5 = vector.extract_strided_slice %3 {offsets = [0, 8], sizes = [2, 4], strides = [1, 1]} : vector<2x12xf32> to vector<2x4xf32>
    %6 = arith.subf %4, %5 : vector<2x4xf32>
    %7 = vector.extract_strided_slice %3 {offsets = [0, 4], sizes = [2, 4], strides = [1, 1]} : vector<2x12xf32> to vector<2x4xf32>
    %8 = vector.extract_strided_slice %3 {offsets = [0, 8], sizes = [2, 4], strides = [1, 1]} : vector<2x12xf32> to vector<2x4xf32>
    %9 = arith.subf %7, %8 : vector<2x4xf32>
    %c0_3 = arith.constant 0 : index
    %c0_4 = arith.constant 0 : index
    %10 = vector.load %arg1[%c0_3, %c0_4] : memref<8x384xf32, #tpu.memory_space<vmem>>, vector<8x384xf32>
    %11 = vector.extract_strided_slice %6 {offsets = [0, 0], sizes = [2, 1], strides = [1, 1]} : vector<2x4xf32> to vector<2x1xf32>
    %12 = vector.extract_strided_slice %10 {offsets = [0, 0], sizes = [1, 384], strides = [1, 1]} : vector<8x384xf32> to vector<1x384xf32>
    %13 = vector.broadcast %11 : vector<2x1xf32> to vector<2x384xf32>
    %14 = vector.broadcast %12 : vector<1x384xf32> to vector<2x384xf32>
    %15 = arith.mulf %13, %14 : vector<2x384xf32>
    %16 = vector.extract_strided_slice %6 {offsets = [0, 1], sizes = [2, 1], strides = [1, 1]} : vector<2x4xf32> to vector<2x1xf32>
    %17 = vector.extract_strided_slice %10 {offsets = [1, 0], sizes = [1, 384], strides = [1, 1]} : vector<8x384xf32> to vector<1x384xf32>
    %18 = vector.broadcast %16 : vector<2x1xf32> to vector<2x384xf32>
    %19 = vector.broadcast %17 : vector<1x384xf32> to vector<2x384xf32>
    %20 = arith.mulf %18, %19 : vector<2x384xf32>
    %21 = arith.addf %15, %20 : vector<2x384xf32>
    %22 = vector.extract_strided_slice %6 {offsets = [0, 2], sizes = [2, 1], strides = [1, 1]} : vector<2x4xf32> to vector<2x1xf32>
    %23 = vector.extract_strided_slice %10 {offsets = [2, 0], sizes = [1, 384], strides = [1, 1]} : vector<8x384xf32> to vector<1x384xf32>
    %24 = vector.broadcast %22 : vector<2x1xf32> to vector<2x384xf32>
    %25 = vector.broadcast %23 : vector<1x384xf32> to vector<2x384xf32>
    %26 = arith.mulf %24, %25 : vector<2x384xf32>
    %27 = arith.addf %21, %26 : vector<2x384xf32>
    %28 = vector.extract_strided_slice %6 {offsets = [0, 3], sizes = [2, 1], strides = [1, 1]} : vector<2x4xf32> to vector<2x1xf32>
    %29 = vector.extract_strided_slice %10 {offsets = [3, 0], sizes = [1, 384], strides = [1, 1]} : vector<8x384xf32> to vector<1x384xf32>
    %30 = vector.broadcast %28 : vector<2x1xf32> to vector<2x384xf32>
    %31 = vector.broadcast %29 : vector<1x384xf32> to vector<2x384xf32>
    %32 = arith.mulf %30, %31 : vector<2x384xf32>
    %33 = arith.addf %27, %32 : vector<2x384xf32>
    %34 = vector.extract_strided_slice %9 {offsets = [0, 0], sizes = [2, 1], strides = [1, 1]} : vector<2x4xf32> to vector<2x1xf32>
    %35 = vector.extract_strided_slice %10 {offsets = [4, 0], sizes = [1, 384], strides = [1, 1]} : vector<8x384xf32> to vector<1x384xf32>
    %36 = vector.broadcast %34 : vector<2x1xf32> to vector<2x384xf32>
    %37 = vector.broadcast %35 : vector<1x384xf32> to vector<2x384xf32>
    %38 = arith.mulf %36, %37 : vector<2x384xf32>
    %39 = arith.addf %33, %38 : vector<2x384xf32>
    %40 = vector.extract_strided_slice %9 {offsets = [0, 1], sizes = [2, 1], strides = [1, 1]} : vector<2x4xf32> to vector<2x1xf32>
    %41 = vector.extract_strided_slice %10 {offsets = [5, 0], sizes = [1, 384], strides = [1, 1]} : vector<8x384xf32> to vector<1x384xf32>
    %42 = vector.broadcast %40 : vector<2x1xf32> to vector<2x384xf32>
    %43 = vector.broadcast %41 : vector<1x384xf32> to vector<2x384xf32>
    %44 = arith.mulf %42, %43 : vector<2x384xf32>
    %45 = arith.addf %39, %44 : vector<2x384xf32>
    %46 = vector.extract_strided_slice %9 {offsets = [0, 2], sizes = [2, 1], strides = [1, 1]} : vector<2x4xf32> to vector<2x1xf32>
    %47 = vector.extract_strided_slice %10 {offsets = [6, 0], sizes = [1, 384], strides = [1, 1]} : vector<8x384xf32> to vector<1x384xf32>
    %48 = vector.broadcast %46 : vector<2x1xf32> to vector<2x384xf32>
    %49 = vector.broadcast %47 : vector<1x384xf32> to vector<2x384xf32>
    %50 = arith.mulf %48, %49 : vector<2x384xf32>
    %51 = arith.addf %45, %50 : vector<2x384xf32>
    %52 = vector.extract_strided_slice %9 {offsets = [0, 3], sizes = [2, 1], strides = [1, 1]} : vector<2x4xf32> to vector<2x1xf32>
    %53 = vector.extract_strided_slice %10 {offsets = [7, 0], sizes = [1, 384], strides = [1, 1]} : vector<8x384xf32> to vector<1x384xf32>
    %54 = vector.broadcast %52 : vector<2x1xf32> to vector<2x384xf32>
    %55 = vector.broadcast %53 : vector<1x384xf32> to vector<2x384xf32>
    %56 = arith.mulf %54, %55 : vector<2x384xf32>
    %57 = arith.addf %51, %56 : vector<2x384xf32>
    %58 = math.absf %57 : vector<2x384xf32>
    %59 = vector.shape_cast %58 : vector<2x384xf32> to vector<1x2x384xf32>
    %cst_5 = arith.constant dense<0.000000e+00> : vector<1xf32>
    %60 = vector.multi_reduction <add>, %59, %cst_5 [1, 2] : vector<1x2x384xf32> to vector<1xf32>
    %61 = vector.shape_cast %60 : vector<1xf32> to vector<1x1x1xf32>
    %62 = vector.extract %61[0, 0, 0] : f32 from vector<1x1x1xf32>
    %cst_6 = arith.constant 0.00130208337 : f32
    %63 = arith.mulf %62, %cst_6 : f32
    %c0_7 = arith.constant 0 : index
    %c0_8 = arith.constant 0 : index
    %64 = memref.load %arg2[%c0_7, %c0_8] : memref<1x1xf32, #tpu.memory_space<smem>>
    memref.store %63, %arg2[%c0_7, %c0_8] : memref<1x1xf32, #tpu.memory_space<smem>>
    return
  }
}

</mosaic_0001>

<llo_original>
// kernel: tpu_custom_call.1
$region0: #{tpu_custom_call.1}
  #allocation0 [shape = 'u32[]', space=smem, size = 0x4, offset = 0x4, fixed_abs, tag = 'smem constant byte address 0x4 - core index']
  #allocation1 [shape = 'u32[144,128]{1,0:T(1,128)}', space=vmem, size = 0x12000, scoped, tag = 'internal scratch']
  %s0 = inlined_call_operand.vmem [shape: f32[2,12,256], index: 0, kind: input, shape index: {}]
  %s1 = inlined_call_operand.vmem [shape: f32[8,384], index: 1, kind: input, shape index: {}]
  %s2 = inlined_call_operand.hbm [shape: f32[1,1], index: 2, kind: output, shape index: {}]
  %s3 = sld [smem:[#allocation0]]
  $region18: #{tpu_custom_call.1} parent=0
    _
  %s5 = ssub.s32 1, %s3
  %s6 = scalar_select 0, %s5, %s3
  $region1: #{tpu_custom_call.1} parent=0
    #allocation2 [shape = 'u8[512]{0}', space=smem, size = 0x200, scoped, tag = 'output window, operand 0, single buffered']
    #allocation3 [shape = 's32[1]{0}', space=sflag, size = 0x4, scoped, tag = 'scoped memory for tpu_custom_call.1']
    %7 = vsyncpa [#allocation3], 0
    // Predicated region
    $region2: #{tpu_custom_call.1} parent=1 // pred_check
      _
    $region3: #{tpu_custom_call.1} parent=1 // pred_check_branch
      %9 = sbr.rel (0) target = $region5
    $region4: #{tpu_custom_call.1} parent=1 // pred_region
      _
    $region5: #{tpu_custom_call.1} parent=1 // pred_fallthru
      _
    // Predicated region
    $region6: #{tpu_custom_call.1} parent=1 // pred_check
      _
    $region7: #{tpu_custom_call.1} parent=1 // pred_check_branch
      %11 = sbr.rel (0) target = $region9
    $region8: #{tpu_custom_call.1} parent=1 // pred_region
      _
    $region9: #{tpu_custom_call.1} parent=1 // pred_fallthru
      _
    %v12 = vld [vmem:[%s0] sm:$0xff]
    %v13 = vld [vmem:[%s0 + $0x8] sm:$0xff]
    %v14 = vld [vmem:[%s0 + $0x10] sm:$0xf]
    %v15 = vld [vmem:[%s0 + $0x18] sm:$0xf]
    %v16 = vld [vmem:[%s0 + $0x20] sm:$0xff]
    %v17 = vld [vmem:[%s0 + $0x28] sm:$0xff]
    %v18 = vld [vmem:[%s0 + $0x30] sm:$0xf]
    %v19 = vld [vmem:[%s0 + $0x38] sm:$0xf]
    %v20 = vadd.f32 %v12, %v13
    %21 = vadd.xlane.f32.xlu0 %v20
    %v22 = vpop.xlane.xlu0 %21
    %vm23 = vcmask 1043456
    %v24 = vsel %vm23, %v14, 0.0
    %v25 = vsel %vm23, %v15, 0.0
    %v26 = vadd.f32 %v24, %v25
    %27 = vadd.xlane.f32.xlu0 %v26
    %v28 = vpop.xlane.xlu0 %27
    %v29 = vadd.f32 %v16, %v17
    %30 = vadd.xlane.f32.xlu0 %v29
    %v31 = vpop.xlane.xlu0 %30
    %v32 = vsel %vm23, %v18, 0.0
    %v33 = vsel %vm23, %v19, 0.0
    %v34 = vadd.f32 %v32, %v33
    %35 = vadd.xlane.f32.xlu0 %v34
    %v36 = vpop.xlane.xlu0 %35
    %v37 = vrcp.pop 256.0
    %v38 = vmul.f32 %v22, %v37
    %v39 = vmul.f32 %v28, %v37
    %v40 = vmul.f32 %v31, %v37
    %v41 = vmul.f32 %v36, %v37
    %v42 = vsub.f32 %v38, %v39
    %v43 = vsub.f32 %v40, %v41
    %v46 = vrot.slane %v39, 4
    %v47 = vrot.slane %v41, 4
    %v50 = vsub.f32 %v38, %v46
    %v51 = vsub.f32 %v40, %v47
    %v52 = vld [vmem:[%s1] sm:$0xff]
    %v53 = vld [vmem:[%s1 + $0x8] sm:$0xff]
    %v54 = vld [vmem:[%s1 + $0x10] sm:$0xff]
    %v55 = vlaneseq
    %v56 = vshrl.u32 %v55, 7
    %v57 = vsub.s32 0, %v56
    %v58 = vrot.slane %v42, %v57
    %v59 = vlaneseq
    %v60 = vshrl.u32 %v59, 7
    %v61 = vsub.s32 0, %v60
    %v62 = vrot.slane %v43, %v61
    %v63 = vlaneseq
    %v64 = vshrl.u32 %v63, 7
    %v65 = vsub.s32 0, %v64
    %v66 = vrot.slane %v52, %v65
    %v67 = vlaneseq
    %v68 = vshrl.u32 %v67, 7
    %v69 = vsub.s32 0, %v68
    %v70 = vrot.slane %v53, %v69
    %v71 = vlaneseq
    %v72 = vshrl.u32 %v71, 7
    %v73 = vsub.s32 0, %v72
    %v74 = vrot.slane %v54, %v73
    %79 = vbcast.lane.b32.xlu0 %v66, 256
    %v80 = vpop.permute.xlu0 %79
    %s82 = sor.u32 256, 8
    %83 = vbcast.lane.b32.xlu0 %v66, %s82
    %v84 = vpop.permute.xlu0 %83
    %s86 = sor.u32 256, 16
    %87 = vbcast.lane.b32.xlu0 %v66, %s86
    %v88 = vpop.permute.xlu0 %87
    %s90 = sor.u32 256, 24
    %91 = vbcast.lane.b32.xlu0 %v66, %s90
    %v92 = vpop.permute.xlu0 %91
    %s94 = sor.u32 256, 32
    %95 = vbcast.lane.b32.xlu0 %v66, %s94
    %v96 = vpop.permute.xlu0 %95
    %s98 = sor.u32 256, 40
    %99 = vbcast.lane.b32.xlu0 %v66, %s98
    %v100 = vpop.permute.xlu0 %99
    %s102 = sor.u32 256, 48
    %103 = vbcast.lane.b32.xlu0 %v66, %s102
    %v104 = vpop.permute.xlu0 %103
    %s106 = sor.u32 256, 56
    %107 = vbcast.lane.b32.xlu0 %v66, %s106
    %v108 = vpop.permute.xlu0 %107
    %s110 = sor.u32 256, 64
    %111 = vbcast.lane.b32.xlu0 %v66, %s110
    %v112 = vpop.permute.xlu0 %111
    %s114 = sor.u32 256, 72
    %115 = vbcast.lane.b32.xlu0 %v66, %s114
    %v116 = vpop.permute.xlu0 %115
    %s118 = sor.u32 256, 80
    %119 = vbcast.lane.b32.xlu0 %v66, %s118
    %v120 = vpop.permute.xlu0 %119
    %s122 = sor.u32 256, 88
    %123 = vbcast.lane.b32.xlu0 %v66, %s122
    %v124 = vpop.permute.xlu0 %123
    %s126 = sor.u32 256, 96
    %127 = vbcast.lane.b32.xlu0 %v66, %s126
    %v128 = vpop.permute.xlu0 %127
    %s130 = sor.u32 256, 104
    %131 = vbcast.lane.b32.xlu0 %v66, %s130
    %v132 = vpop.permute.xlu0 %131
    %s134 = sor.u32 256, 112
    %135 = vbcast.lane.b32.xlu0 %v66, %s134
    %v136 = vpop.permute.xlu0 %135
    %s138 = sor.u32 256, 120
    %139 = vbcast.lane.b32.xlu0 %v66, %s138
    %v140 = vpop.permute.xlu0 %139
    %142 = vbcast.lane.b32.xlu0 %v70, 256
    %v143 = vpop.permute.xlu0 %142
    %s145 = sor.u32 256, 8
    %146 = vbcast.lane.b32.xlu0 %v70, %s145
    %v147 = vpop.permute.xlu0 %146
    %s149 = sor.u32 256, 16
    %150 = vbcast.lane.b32.xlu0 %v70, %s149
    %v151 = vpop.permute.xlu0 %150
    %s153 = sor.u32 256, 24
    %154 = vbcast.lane.b32.xlu0 %v70, %s153
    %v155 = vpop.permute.xlu0 %154
    %s157 = sor.u32 256, 32
    %158 = vbcast.lane.b32.xlu0 %v70, %s157
    %v159 = vpop.permute.xlu0 %158
    %s161 = sor.u32 256, 40
    %162 = vbcast.lane.b32.xlu0 %v70, %s161
    %v163 = vpop.permute.xlu0 %162
    %s165 = sor.u32 256, 48
    %166 = vbcast.lane.b32.xlu0 %v70, %s165
    %v167 = vpop.permute.xlu0 %166
    %s169 = sor.u32 256, 56
    %170 = vbcast.lane.b32.xlu0 %v70, %s169
    %v171 = vpop.permute.xlu0 %170
    %s173 = sor.u32 256, 64
    %174 = vbcast.lane.b32.xlu0 %v70, %s173
    %v175 = vpop.permute.xlu0 %174
    %s177 = sor.u32 256, 72
    %178 = vbcast.lane.b32.xlu0 %v70, %s177
    %v179 = vpop.permute.xlu0 %178
    %s181 = sor.u32 256, 80
    %182 = vbcast.lane.b32.xlu0 %v70, %s181
    %v183 = vpop.permute.xlu0 %182
    %s185 = sor.u32 256, 88
    %186 = vbcast.lane.b32.xlu0 %v70, %s185
    %v187 = vpop.permute.xlu0 %186
    %s189 = sor.u32 256, 96
    %190 = vbcast.lane.b32.xlu0 %v70, %s189
    %v191 = vpop.permute.xlu0 %190
    %s193 = sor.u32 256, 104
    %194 = vbcast.lane.b32.xlu0 %v70, %s193
    %v195 = vpop.permute.xlu0 %194
    %s197 = sor.u32 256, 112
    %198 = vbcast.lane.b32.xlu0 %v70, %s197
    %v199 = vpop.permute.xlu0 %198
    %s201 = sor.u32 256, 120
    %202 = vbcast.lane.b32.xlu0 %v70, %s201
    %v203 = vpop.permute.xlu0 %202
    %205 = vbcast.lane.b32.xlu0 %v74, 256
    %v206 = vpop.permute.xlu0 %205
    %s208 = sor.u32 256, 8
    %209 = vbcast.lane.b32.xlu0 %v74, %s208
    %v210 = vpop.permute.xlu0 %209
    %s212 = sor.u32 256, 16
    %213 = vbcast.lane.b32.xlu0 %v74, %s212
    %v214 = vpop.permute.xlu0 %213
    %s216 = sor.u32 256, 24
    %217 = vbcast.lane.b32.xlu0 %v74, %s216
    %v218 = vpop.permute.xlu0 %217
    %s220 = sor.u32 256, 32
    %221 = vbcast.lane.b32.xlu0 %v74, %s220
    %v222 = vpop.permute.xlu0 %221
    %s224 = sor.u32 256, 40
    %225 = vbcast.lane.b32.xlu0 %v74, %s224
    %v226 = vpop.permute.xlu0 %225
    %s228 = sor.u32 256, 48
    %229 = vbcast.lane.b32.xlu0 %v74, %s228
    %v230 = vpop.permute.xlu0 %229
    %s232 = sor.u32 256, 56
    %233 = vbcast.lane.b32.xlu0 %v74, %s232
    %v234 = vpop.permute.xlu0 %233
    %s236 = sor.u32 256, 64
    %237 = vbcast.lane.b32.xlu0 %v74, %s236
    %v238 = vpop.permute.xlu0 %237
    %s240 = sor.u32 256, 72
    %241 = vbcast.lane.b32.xlu0 %v74, %s240
    %v242 = vpop.permute.xlu0 %241
    %s244 = sor.u32 256, 80
    %245 = vbcast.lane.b32.xlu0 %v74, %s244
    %v246 = vpop.permute.xlu0 %245
    %s248 = sor.u32 256, 88
    %249 = vbcast.lane.b32.xlu0 %v74, %s248
    %v250 = vpop.permute.xlu0 %249
    %s252 = sor.u32 256, 96
    %253 = vbcast.lane.b32.xlu0 %v74, %s252
    %v254 = vpop.permute.xlu0 %253
    %s256 = sor.u32 256, 104
    %257 = vbcast.lane.b32.xlu0 %v74, %s256
    %v258 = vpop.permute.xlu0 %257
    %s260 = sor.u32 256, 112
    %261 = vbcast.lane.b32.xlu0 %v74, %s260
    %v262 = vpop.permute.xlu0 %261
    %s264 = sor.u32 256, 120
    %265 = vbcast.lane.b32.xlu0 %v74, %s264
    %v266 = vpop.permute.xlu0 %265
    %v315 = vmul.f32 %v58, %v80
    %v316 = vmul.f32 %v58, %v84
    %v317 = vmul.f32 %v58, %v88
    %v318 = vmul.f32 %v58, %v92
    %v319 = vmul.f32 %v58, %v96
    %v320 = vmul.f32 %v58, %v100
    %v321 = vmul.f32 %v58, %v104
    %v322 = vmul.f32 %v58, %v108
    %v323 = vmul.f32 %v58, %v112
    %v324 = vmul.f32 %v58, %v116
    %v325 = vmul.f32 %v58, %v120
    %v326 = vmul.f32 %v58, %v124
    %v327 = vmul.f32 %v58, %v128
    %v328 = vmul.f32 %v58, %v132
    %v329 = vmul.f32 %v58, %v136
    %v330 = vmul.f32 %v58, %v140
    %v331 = vmul.f32 %v58, %v143
    %v332 = vmul.f32 %v58, %v147
    %v333 = vmul.f32 %v58, %v151
    %v334 = vmul.f32 %v58, %v155
    %v335 = vmul.f32 %v58, %v159
    %v336 = vmul.f32 %v58, %v163
    %v337 = vmul.f32 %v58, %v167
    %v338 = vmul.f32 %v58, %v171
    %v339 = vmul.f32 %v58, %v175
    %v340 = vmul.f32 %v58, %v179
    %v341 = vmul.f32 %v58, %v183
    %v342 = vmul.f32 %v58, %v187
    %v343 = vmul.f32 %v58, %v191
    %v344 = vmul.f32 %v58, %v195
    %v345 = vmul.f32 %v58, %v199
    %v346 = vmul.f32 %v58, %v203
    %v347 = vmul.f32 %v58, %v206
    %v348 = vmul.f32 %v58, %v210
    %v349 = vmul.f32 %v58, %v214
    %v350 = vmul.f32 %v58, %v218
    %v351 = vmul.f32 %v58, %v222
    %v352 = vmul.f32 %v58, %v226
    %v353 = vmul.f32 %v58, %v230
    %v354 = vmul.f32 %v58, %v234
    %v355 = vmul.f32 %v58, %v238
    %v356 = vmul.f32 %v58, %v242
    %v357 = vmul.f32 %v58, %v246
    %v358 = vmul.f32 %v58, %v250
    %v359 = vmul.f32 %v58, %v254
    %v360 = vmul.f32 %v58, %v258
    %v361 = vmul.f32 %v58, %v262
    %v362 = vmul.f32 %v58, %v266
    %v363 = vmul.f32 %v62, %v80
    %v364 = vmul.f32 %v62, %v84
    %v365 = vmul.f32 %v62, %v88
    %v366 = vmul.f32 %v62, %v92
    %v367 = vmul.f32 %v62, %v96
    %v368 = vmul.f32 %v62, %v100
    %v369 = vmul.f32 %v62, %v104
    %v370 = vmul.f32 %v62, %v108
    %v371 = vmul.f32 %v62, %v112
    %v372 = vmul.f32 %v62, %v116
    %v373 = vmul.f32 %v62, %v120
    %v374 = vmul.f32 %v62, %v124
    %v375 = vmul.f32 %v62, %v128
    %v376 = vmul.f32 %v62, %v132
    %v377 = vmul.f32 %v62, %v136
    %v378 = vmul.f32 %v62, %v140
    %v379 = vmul.f32 %v62, %v143
    %v380 = vmul.f32 %v62, %v147
    %v381 = vmul.f32 %v62, %v151
    %v382 = vmul.f32 %v62, %v155
    %v383 = vmul.f32 %v62, %v159
    %v384 = vmul.f32 %v62, %v163
    %v385 = vmul.f32 %v62, %v167
    %v386 = vmul.f32 %v62, %v171
    %v387 = vmul.f32 %v62, %v175
    %v388 = vmul.f32 %v62, %v179
    %v389 = vmul.f32 %v62, %v183
    %v390 = vmul.f32 %v62, %v187
    %v391 = vmul.f32 %v62, %v191
    %v392 = vmul.f32 %v62, %v195
    %v393 = vmul.f32 %v62, %v199
    %v394 = vmul.f32 %v62, %v203
    %v395 = vmul.f32 %v62, %v206
    %v396 = vmul.f32 %v62, %v210
    %v397 = vmul.f32 %v62, %v214
    %v398 = vmul.f32 %v62, %v218
    %v399 = vmul.f32 %v62, %v222
    %v400 = vmul.f32 %v62, %v226
    %v401 = vmul.f32 %v62, %v230
    %v402 = vmul.f32 %v62, %v234
    %v403 = vmul.f32 %v62, %v238
    %v404 = vmul.f32 %v62, %v242
    %v405 = vmul.f32 %v62, %v246
    %v406 = vmul.f32 %v62, %v250
    %v407 = vmul.f32 %v62, %v254
    %v408 = vmul.f32 %v62, %v258
    %v409 = vmul.f32 %v62, %v262
    %v410 = vmul.f32 %v62, %v266
    %v411 = vlaneseq
    %v412 = vshrl.u32 %v411, 7
    %v413 = vsub.s32 1, %v412
    %v414 = vrot.slane %v42, %v413
    %v415 = vlaneseq
    %v416 = vshrl.u32 %v415, 7
    %v417 = vsub.s32 1, %v416
    %v418 = vrot.slane %v43, %v417
    %v419 = vlaneseq
    %v420 = vshrl.u32 %v419, 7
    %v421 = vsub.s32 1, %v420
    %v422 = vrot.slane %v52, %v421
    %v423 = vlaneseq
    %v424 = vshrl.u32 %v423, 7
    %v425 = vsub.s32 1, %v424
    %v426 = vrot.slane %v53, %v425
    %v427 = vlaneseq
    %v428 = vshrl.u32 %v427, 7
    %v429 = vsub.s32 1, %v428
    %v430 = vrot.slane %v54, %v429
    %435 = vbcast.lane.b32.xlu0 %v422, 256
    %v436 = vpop.permute.xlu0 %435
    %s438 = sor.u32 256, 8
    %439 = vbcast.lane.b32.xlu0 %v422, %s438
    %v440 = vpop.permute.xlu0 %439
    %s442 = sor.u32 256, 16
    %443 = vbcast.lane.b32.xlu0 %v422, %s442
    %v444 = vpop.permute.xlu0 %443
    %s446 = sor.u32 256, 24
    %447 = vbcast.lane.b32.xlu0 %v422, %s446
    %v448 = vpop.permute.xlu0 %447
    %s450 = sor.u32 256, 32
    %451 = vbcast.lane.b32.xlu0 %v422, %s450
    %v452 = vpop.permute.xlu0 %451
    %s454 = sor.u32 256, 40
    %455 = vbcast.lane.b32.xlu0 %v422, %s454
    %v456 = vpop.permute.xlu0 %455
    %s458 = sor.u32 256, 48
    %459 = vbcast.lane.b32.xlu0 %v422, %s458
    %v460 = vpop.permute.xlu0 %459
    %s462 = sor.u32 256, 56
    %463 = vbcast.lane.b32.xlu0 %v422, %s462
    %v464 = vpop.permute.xlu0 %463
    %s466 = sor.u32 256, 64
    %467 = vbcast.lane.b32.xlu0 %v422, %s466
    %v468 = vpop.permute.xlu0 %467
    %s470 = sor.u32 256, 72
    %471 = vbcast.lane.b32.xlu0 %v422, %s470
    %v472 = vpop.permute.xlu0 %471
    %s474 = sor.u32 256, 80
    %475 = vbcast.lane.b32.xlu0 %v422, %s474
    %v476 = vpop.permute.xlu0 %475
    %s478 = sor.u32 256, 88
    %479 = vbcast.lane.b32.xlu0 %v422, %s478
    %v480 = vpop.permute.xlu0 %479
    %s482 = sor.u32 256, 96
    %483 = vbcast.lane.b32.xlu0 %v422, %s482
    %v484 = vpop.permute.xlu0 %483
    %s486 = sor.u32 256, 104
    %487 = vbcast.lane.b32.xlu0 %v422, %s486
    %v488 = vpop.permute.xlu0 %487
    %s490 = sor.u32 256, 112
    %491 = vbcast.lane.b32.xlu0 %v422, %s490
    %v492 = vpop.permute.xlu0 %491
    %s494 = sor.u32 256, 120
    %495 = vbcast.lane.b32.xlu0 %v422, %s494
    %v496 = vpop.permute.xlu0 %495
    %498 = vbcast.lane.b32.xlu0 %v426, 256
    %v499 = vpop.permute.xlu0 %498
    %s501 = sor.u32 256, 8
    %502 = vbcast.lane.b32.xlu0 %v426, %s501
    %v503 = vpop.permute.xlu0 %502
    %s505 = sor.u32 256, 16
    %506 = vbcast.lane.b32.xlu0 %v426, %s505
    %v507 = vpop.permute.xlu0 %506
    %s509 = sor.u32 256, 24
    %510 = vbcast.lane.b32.xlu0 %v426, %s509
    %v511 = vpop.permute.xlu0 %510
    %s513 = sor.u32 256, 32
    %514 = vbcast.lane.b32.xlu0 %v426, %s513
    %v515 = vpop.permute.xlu0 %514
    %s517 = sor.u32 256, 40
    %518 = vbcast.lane.b32.xlu0 %v426, %s517
    %v519 = vpop.permute.xlu0 %518
    %s521 = sor.u32 256, 48
    %522 = vbcast.lane.b32.xlu0 %v426, %s521
    %v523 = vpop.permute.xlu0 %522
    %s525 = sor.u32 256, 56
    %526 = vbcast.lane.b32.xlu0 %v426, %s525
    %v527 = vpop.permute.xlu0 %526
    %s529 = sor.u32 256, 64
    %530 = vbcast.lane.b32.xlu0 %v426, %s529
    %v531 = vpop.permute.xlu0 %530
    %s533 = sor.u32 256, 72
    %534 = vbcast.lane.b32.xlu0 %v426, %s533
    %v535 = vpop.permute.xlu0 %534
    %s537 = sor.u32 256, 80
    %538 = vbcast.lane.b32.xlu0 %v426, %s537
    %v539 = vpop.permute.xlu0 %538
    %s541 = sor.u32 256, 88
    %542 = vbcast.lane.b32.xlu0 %v426, %s541
    %v543 = vpop.permute.xlu0 %542
    %s545 = sor.u32 256, 96
    %546 = vbcast.lane.b32.xlu0 %v426, %s545
    %v547 = vpop.permute.xlu0 %546
    %s549 = sor.u32 256, 104
    %550 = vbcast.lane.b32.xlu0 %v426, %s549
    %v551 = vpop.permute.xlu0 %550
    %s553 = sor.u32 256, 112
    %554 = vbcast.lane.b32.xlu0 %v426, %s553
    %v555 = vpop.permute.xlu0 %554
    %s557 = sor.u32 256, 120
    %558 = vbcast.lane.b32.xlu0 %v426, %s557
    %v559 = vpop.permute.xlu0 %558
    %561 = vbcast.lane.b32.xlu0 %v430, 256
    %v562 = vpop.permute.xlu0 %561
    %s564 = sor.u32 256, 8
    %565 = vbcast.lane.b32.xlu0 %v430, %s564
    %v566 = vpop.permute.xlu0 %565
    %s568 = sor.u32 256, 16
    %569 = vbcast.lane.b32.xlu0 %v430, %s568
    %v570 = vpop.permute.xlu0 %569
    %s572 = sor.u32 256, 24
    %573 = vbcast.lane.b32.xlu0 %v430, %s572
    %v574 = vpop.permute.xlu0 %573
    %s576 = sor.u32 256, 32
    %577 = vbcast.lane.b32.xlu0 %v430, %s576
    %v578 = vpop.permute.xlu0 %577
    %s580 = sor.u32 256, 40
    %581 = vbcast.lane.b32.xlu0 %v430, %s580
    %v582 = vpop.permute.xlu0 %581
    %s584 = sor.u32 256, 48
    %585 = vbcast.lane.b32.xlu0 %v430, %s584
    %v586 = vpop.permute.xlu0 %585
    %s588 = sor.u32 256, 56
    %589 = vbcast.lane.b32.xlu0 %v430, %s588
    %v590 = vpop.permute.xlu0 %589
    %s592 = sor.u32 256, 64
    %593 = vbcast.lane.b32.xlu0 %v430, %s592
    %v594 = vpop.permute.xlu0 %593
    %s596 = sor.u32 256, 72
    %597 = vbcast.lane.b32.xlu0 %v430, %s596
    %v598 = vpop.permute.xlu0 %597
    %s600 = sor.u32 256, 80
    %601 = vbcast.lane.b32.xlu0 %v430, %s600
    %v602 = vpop.permute.xlu0 %601
    %s604 = sor.u32 256, 88
    %605 = vbcast.lane.b32.xlu0 %v430, %s604
    %v606 = vpop.permute.xlu0 %605
    %s608 = sor.u32 256, 96
    %609 = vbcast.lane.b32.xlu0 %v430, %s608
    %v610 = vpop.permute.xlu0 %609
    %s612 = sor.u32 256, 104
    %613 = vbcast.lane.b32.xlu0 %v430, %s612
    %v614 = vpop.permute.xlu0 %613
    %s616 = sor.u32 256, 112
    %617 = vbcast.lane.b32.xlu0 %v430, %s616
    %v618 = vpop.permute.xlu0 %617
    %s620 = sor.u32 256, 120
    %621 = vbcast.lane.b32.xlu0 %v430, %s620
    %v622 = vpop.permute.xlu0 %621
    %v671 = vmul.f32 %v414, %v436
    %v672 = vmul.f32 %v414, %v440
    %v673 = vmul.f32 %v414, %v444
    %v674 = vmul.f32 %v414, %v448
    %v675 = vmul.f32 %v414, %v452
    %v676 = vmul.f32 %v414, %v456
    %v677 = vmul.f32 %v414, %v460
    %v678 = vmul.f32 %v414, %v464
    %v679 = vmul.f32 %v414, %v468
    %v680 = vmul.f32 %v414, %v472
    %v681 = vmul.f32 %v414, %v476
    %v682 = vmul.f32 %v414, %v480
    %v683 = vmul.f32 %v414, %v484
    %v684 = vmul.f32 %v414, %v488
    %v685 = vmul.f32 %v414, %v492
    %v686 = vmul.f32 %v414, %v496
    %v687 = vmul.f32 %v414, %v499
    %v688 = vmul.f32 %v414, %v503
    %v689 = vmul.f32 %v414, %v507
    %v690 = vmul.f32 %v414, %v511
    %v691 = vmul.f32 %v414, %v515
    %v692 = vmul.f32 %v414, %v519
    %v693 = vmul.f32 %v414, %v523
    %v694 = vmul.f32 %v414, %v527
    %v695 = vmul.f32 %v414, %v531
    %v696 = vmul.f32 %v414, %v535
    %v697 = vmul.f32 %v414, %v539
    %v698 = vmul.f32 %v414, %v543
    %v699 = vmul.f32 %v414, %v547
    %v700 = vmul.f32 %v414, %v551
    %v701 = vmul.f32 %v414, %v555
    %v702 = vmul.f32 %v414, %v559
    %v703 = vmul.f32 %v414, %v562
    %v704 = vmul.f32 %v414, %v566
    %v705 = vmul.f32 %v414, %v570
    %v706 = vmul.f32 %v414, %v574
    %v707 = vmul.f32 %v414, %v578
    %v708 = vmul.f32 %v414, %v582
    %v709 = vmul.f32 %v414, %v586
    %v710 = vmul.f32 %v414, %v590
    %v711 = vmul.f32 %v414, %v594
    %v712 = vmul.f32 %v414, %v598
    %v713 = vmul.f32 %v414, %v602
    %v714 = vmul.f32 %v414, %v606
    %v715 = vmul.f32 %v414, %v610
    %v716 = vmul.f32 %v414, %v614
    %v717 = vmul.f32 %v414, %v618
    %v718 = vmul.f32 %v414, %v622
    %v719 = vmul.f32 %v418, %v436
    %v720 = vmul.f32 %v418, %v440
    %v721 = vmul.f32 %v418, %v444
    %v722 = vmul.f32 %v418, %v448
    %v723 = vmul.f32 %v418, %v452
    %v724 = vmul.f32 %v418, %v456
    %v725 = vmul.f32 %v418, %v460
    %v726 = vmul.f32 %v418, %v464
    %v727 = vmul.f32 %v418, %v468
    %v728 = vmul.f32 %v418, %v472
    %v729 = vmul.f32 %v418, %v476
    %v730 = vmul.f32 %v418, %v480
    %v731 = vmul.f32 %v418, %v484
    %v732 = vmul.f32 %v418, %v488
    %v733 = vmul.f32 %v418, %v492
    %v734 = vmul.f32 %v418, %v496
    %v735 = vmul.f32 %v418, %v499
    %v736 = vmul.f32 %v418, %v503
    %v737 = vmul.f32 %v418, %v507
    %v738 = vmul.f32 %v418, %v511
    %v739 = vmul.f32 %v418, %v515
    %v740 = vmul.f32 %v418, %v519
    %v741 = vmul.f32 %v418, %v523
    %v742 = vmul.f32 %v418, %v527
    %v743 = vmul.f32 %v418, %v531
    %v744 = vmul.f32 %v418, %v535
    %v745 = vmul.f32 %v418, %v539
    %v746 = vmul.f32 %v418, %v543
    %v747 = vmul.f32 %v418, %v547
    %v748 = vmul.f32 %v418, %v551
    %v749 = vmul.f32 %v418, %v555
    %v750 = vmul.f32 %v418, %v559
    %v751 = vmul.f32 %v418, %v562
    %v752 = vmul.f32 %v418, %v566
    %v753 = vmul.f32 %v418, %v570
    %v754 = vmul.f32 %v418, %v574
    %v755 = vmul.f32 %v418, %v578
    %v756 = vmul.f32 %v418, %v582
    %v757 = vmul.f32 %v418, %v586
    %v758 = vmul.f32 %v418, %v590
    %v759 = vmul.f32 %v418, %v594
    %v760 = vmul.f32 %v418, %v598
    %v761 = vmul.f32 %v418, %v602
    %v762 = vmul.f32 %v418, %v606
    %v763 = vmul.f32 %v418, %v610
    %v764 = vmul.f32 %v418, %v614
    %v765 = vmul.f32 %v418, %v618
    %v766 = vmul.f32 %v418, %v622
    %v767 = vadd.f32 %v315, %v671
    %v768 = vadd.f32 %v316, %v672
    %v769 = vadd.f32 %v317, %v673
    %v770 = vadd.f32 %v318, %v674
    %v771 = vadd.f32 %v319, %v675
    %v772 = vadd.f32 %v320, %v676
    %v773 = vadd.f32 %v321, %v677
    %v774 = vadd.f32 %v322, %v678
    %v775 = vadd.f32 %v323, %v679
    %v776 = vadd.f32 %v324, %v680
    %v777 = vadd.f32 %v325, %v681
    %v778 = vadd.f32 %v326, %v682
    %v779 = vadd.f32 %v327, %v683
    %v780 = vadd.f32 %v328, %v684
    %v781 = vadd.f32 %v329, %v685
    %v782 = vadd.f32 %v330, %v686
    %v783 = vadd.f32 %v331, %v687
    %v784 = vadd.f32 %v332, %v688
    %v785 = vadd.f32 %v333, %v689
    %v786 = vadd.f32 %v334, %v690
    %v787 = vadd.f32 %v335, %v691
    %v788 = vadd.f32 %v336, %v692
    %v789 = vadd.f32 %v337, %v693
    %v790 = vadd.f32 %v338, %v694
    %v791 = vadd.f32 %v339, %v695
    %v792 = vadd.f32 %v340, %v696
    %v793 = vadd.f32 %v341, %v697
    %v794 = vadd.f32 %v342, %v698
    %v795 = vadd.f32 %v343, %v699
    %v796 = vadd.f32 %v344, %v700
    %v797 = vadd.f32 %v345, %v701
    %v798 = vadd.f32 %v346, %v702
    %v799 = vadd.f32 %v347, %v703
    %v800 = vadd.f32 %v348, %v704
    %v801 = vadd.f32 %v349, %v705
    %v802 = vadd.f32 %v350, %v706
    %v803 = vadd.f32 %v351, %v707
    %v804 = vadd.f32 %v352, %v708
    %v805 = vadd.f32 %v353, %v709
    %v806 = vadd.f32 %v354, %v710
    %v807 = vadd.f32 %v355, %v711
    %v808 = vadd.f32 %v356, %v712
    %v809 = vadd.f32 %v357, %v713
    %v810 = vadd.f32 %v358, %v714
    %v811 = vadd.f32 %v359, %v715
    %v812 = vadd.f32 %v360, %v716
    %v813 = vadd.f32 %v361, %v717
    %v814 = vadd.f32 %v362, %v718
    %v815 = vadd.f32 %v363, %v719
    %v816 = vadd.f32 %v364, %v720
    %v817 = vadd.f32 %v365, %v721
    %v818 = vadd.f32 %v366, %v722
    %v819 = vadd.f32 %v367, %v723
    %v820 = vadd.f32 %v368, %v724
    %v821 = vadd.f32 %v369, %v725
    %v822 = vadd.f32 %v370, %v726
    %v823 = vadd.f32 %v371, %v727
    %v824 = vadd.f32 %v372, %v728
    %v825 = vadd.f32 %v373, %v729
    %v826 = vadd.f32 %v374, %v730
    %v827 = vadd.f32 %v375, %v731
    %v828 = vadd.f32 %v376, %v732
    %v829 = vadd.f32 %v377, %v733
    %v830 = vadd.f32 %v378, %v734
    %v831 = vadd.f32 %v379, %v735
    %v832 = vadd.f32 %v380, %v736
    %v833 = vadd.f32 %v381, %v737
    %v834 = vadd.f32 %v382, %v738
    %v835 = vadd.f32 %v383, %v739
    %v836 = vadd.f32 %v384, %v740
    %v837 = vadd.f32 %v385, %v741
    %v838 = vadd.f32 %v386, %v742
    %v839 = vadd.f32 %v387, %v743
    %v840 = vadd.f32 %v388, %v744
    %v841 = vadd.f32 %v389, %v745
    %v842 = vadd.f32 %v390, %v746
    %v843 = vadd.f32 %v391, %v747
    %v844 = vadd.f32 %v392, %v748
    %v845 = vadd.f32 %v393, %v749
    %v846 = vadd.f32 %v394, %v750
    %v847 = vadd.f32 %v395, %v751
    %v848 = vadd.f32 %v396, %v752
    %v849 = vadd.f32 %v397, %v753
    %v850 = vadd.f32 %v398, %v754
    %v851 = vadd.f32 %v399, %v755
    %v852 = vadd.f32 %v400, %v756
    %v853 = vadd.f32 %v401, %v757
    %v854 = vadd.f32 %v402, %v758
    %v855 = vadd.f32 %v403, %v759
    %v856 = vadd.f32 %v404, %v760
    %v857 = vadd.f32 %v405, %v761
    %v858 = vadd.f32 %v406, %v762
    %v859 = vadd.f32 %v407, %v763
    %v860 = vadd.f32 %v408, %v764
    %v861 = vadd.f32 %v409, %v765
    %v862 = vadd.f32 %v410, %v766
    %v863 = vlaneseq
    %v864 = vshrl.u32 %v863, 7
    %v865 = vsub.s32 2, %v864
    %v866 = vrot.slane %v42, %v865
    %v867 = vlaneseq
    %v868 = vshrl.u32 %v867, 7
    %v869 = vsub.s32 2, %v868
    %v870 = vrot.slane %v43, %v869
    %v871 = vlaneseq
    %v872 = vshrl.u32 %v871, 7
    %v873 = vsub.s32 2, %v872
    %v874 = vrot.slane %v52, %v873
    %v875 = vlaneseq
    %v876 = vshrl.u32 %v875, 7
    %v877 = vsub.s32 2, %v876
    %v878 = vrot.slane %v53, %v877
    %v879 = vlaneseq
    %v880 = vshrl.u32 %v879, 7
    %v881 = vsub.s32 2, %v880
    %v882 = vrot.slane %v54, %v881
    %887 = vbcast.lane.b32.xlu0 %v874, 256
    %v888 = vpop.permute.xlu0 %887
    %s890 = sor.u32 256, 8
    %891 = vbcast.lane.b32.xlu0 %v874, %s890
    %v892 = vpop.permute.xlu0 %891
    %s894 = sor.u32 256, 16
    %895 = vbcast.lane.b32.xlu0 %v874, %s894
    %v896 = vpop.permute.xlu0 %895
    %s898 = sor.u32 256, 24
    %899 = vbcast.lane.b32.xlu0 %v874, %s898
    %v900 = vpop.permute.xlu0 %899
    %s902 = sor.u32 256, 32
    %903 = vbcast.lane.b32.xlu0 %v874, %s902
    %v904 = vpop.permute.xlu0 %903
    %s906 = sor.u32 256, 40
    %907 = vbcast.lane.b32.xlu0 %v874, %s906
    %v908 = vpop.permute.xlu0 %907
    %s910 = sor.u32 256, 48
    %911 = vbcast.lane.b32.xlu0 %v874, %s910
    %v912 = vpop.permute.xlu0 %911
    %s914 = sor.u32 256, 56
    %915 = vbcast.lane.b32.xlu0 %v874, %s914
    %v916 = vpop.permute.xlu0 %915
    %s918 = sor.u32 256, 64
    %919 = vbcast.lane.b32.xlu0 %v874, %s918
    %v920 = vpop.permute.xlu0 %919
    %s922 = sor.u32 256, 72
    %923 = vbcast.lane.b32.xlu0 %v874, %s922
    %v924 = vpop.permute.xlu0 %923
    %s926 = sor.u32 256, 80
    %927 = vbcast.lane.b32.xlu0 %v874, %s926
    %v928 = vpop.permute.xlu0 %927
    %s930 = sor.u32 256, 88
    %931 = vbcast.lane.b32.xlu0 %v874, %s930
    %v932 = vpop.permute.xlu0 %931
    %s934 = sor.u32 256, 96
    %935 = vbcast.lane.b32.xlu0 %v874, %s934
    %v936 = vpop.permute.xlu0 %935
    %s938 = sor.u32 256, 104
    %939 = vbcast.lane.b32.xlu0 %v874, %s938
    %v940 = vpop.permute.xlu0 %939
    %s942 = sor.u32 256, 112
    %943 = vbcast.lane.b32.xlu0 %v874, %s942
    %v944 = vpop.permute.xlu0 %943
    %s946 = sor.u32 256, 120
    %947 = vbcast.lane.b32.xlu0 %v874, %s946
    %v948 = vpop.permute.xlu0 %947
    %950 = vbcast.lane.b32.xlu0 %v878, 256
    %v951 = vpop.permute.xlu0 %950
    %s953 = sor.u32 256, 8
    %954 = vbcast.lane.b32.xlu0 %v878, %s953
    %v955 = vpop.permute.xlu0 %954
    %s957 = sor.u32 256, 16
    %958 = vbcast.lane.b32.xlu0 %v878, %s957
    %v959 = vpop.permute.xlu0 %958
    %s961 = sor.u32 256, 24
    %962 = vbcast.lane.b32.xlu0 %v878, %s961
    %v963 = vpop.permute.xlu0 %962
    %s965 = sor.u32 256, 32
    %966 = vbcast.lane.b32.xlu0 %v878, %s965
    %v967 = vpop.permute.xlu0 %966
    %s969 = sor.u32 256, 40
    %970 = vbcast.lane.b32.xlu0 %v878, %s969
    %v971 = vpop.permute.xlu0 %970
    %s973 = sor.u32 256, 48
    %974 = vbcast.lane.b32.xlu0 %v878, %s973
    %v975 = vpop.permute.xlu0 %974
    %s977 = sor.u32 256, 56
    %978 = vbcast.lane.b32.xlu0 %v878, %s977
    %v979 = vpop.permute.xlu0 %978
    %s981 = sor.u32 256, 64
    %982 = vbcast.lane.b32.xlu0 %v878, %s981
    %v983 = vpop.permute.xlu0 %982
    %s985 = sor.u32 256, 72
    %986 = vbcast.lane.b32.xlu0 %v878, %s985
    %v987 = vpop.permute.xlu0 %986
    %s989 = sor.u32 256, 80
    %990 = vbcast.lane.b32.xlu0 %v878, %s989
    %v991 = vpop.permute.xlu0 %990
    %s993 = sor.u32 256, 88
    %994 = vbcast.lane.b32.xlu0 %v878, %s993
    %v995 = vpop.permute.xlu0 %994
    %s997 = sor.u32 256, 96
    %998 = vbcast.lane.b32.xlu0 %v878, %s997
    %v999 = vpop.permute.xlu0 %998
    %s1001 = sor.u32 256, 104
    %1002 = vbcast.lane.b32.xlu0 %v878, %s1001
    %v1003 = vpop.permute.xlu0 %1002
    %s1005 = sor.u32 256, 112
    %1006 = vbcast.lane.b32.xlu0 %v878, %s1005
    %v1007 = vpop.permute.xlu0 %1006
    %s1009 = sor.u32 256, 120
    %1010 = vbcast.lane.b32.xlu0 %v878, %s1009
    %v1011 = vpop.permute.xlu0 %1010
    %1013 = vbcast.lane.b32.xlu0 %v882, 256
    %v1014 = vpop.permute.xlu0 %1013
    %s1016 = sor.u32 256, 8
    %1017 = vbcast.lane.b32.xlu0 %v882, %s1016
    %v1018 = vpop.permute.xlu0 %1017
    %s1020 = sor.u32 256, 16
    %1021 = vbcast.lane.b32.xlu0 %v882, %s1020
    %v1022 = vpop.permute.xlu0 %1021
    %s1024 = sor.u32 256, 24
    %1025 = vbcast.lane.b32.xlu0 %v882, %s1024
    %v1026 = vpop.permute.xlu0 %1025
    %s1028 = sor.u32 256, 32
    %1029 = vbcast.lane.b32.xlu0 %v882, %s1028
    %v1030 = vpop.permute.xlu0 %1029
    %s1032 = sor.u32 256, 40
    %1033 = vbcast.lane.b32.xlu0 %v882, %s1032
    %v1034 = vpop.permute.xlu0 %1033
    %s1036 = sor.u32 256, 48
    %1037 = vbcast.lane.b32.xlu0 %v882, %s1036
    %v1038 = vpop.permute.xlu0 %1037
    %s1040 = sor.u32 256, 56
    %1041 = vbcast.lane.b32.xlu0 %v882, %s1040
    %v1042 = vpop.permute.xlu0 %1041
    %s1044 = sor.u32 256, 64
    %1045 = vbcast.lane.b32.xlu0 %v882, %s1044
    %v1046 = vpop.permute.xlu0 %1045
    %s1048 = sor.u32 256, 72
    %1049 = vbcast.lane.b32.xlu0 %v882, %s1048
    %v1050 = vpop.permute.xlu0 %1049
    %s1052 = sor.u32 256, 80
    %1053 = vbcast.lane.b32.xlu0 %v882, %s1052
    %v1054 = vpop.permute.xlu0 %1053
    %s1056 = sor.u32 256, 88
    %1057 = vbcast.lane.b32.xlu0 %v882, %s1056
    %v1058 = vpop.permute.xlu0 %1057
    %s1060 = sor.u32 256, 96
    %1061 = vbcast.lane.b32.xlu0 %v882, %s1060
    %v1062 = vpop.permute.xlu0 %1061
    %s1064 = sor.u32 256, 104
    %1065 = vbcast.lane.b32.xlu0 %v882, %s1064
    %v1066 = vpop.permute.xlu0 %1065
    %s1068 = sor.u32 256, 112
    %1069 = vbcast.lane.b32.xlu0 %v882, %s1068
    %v1070 = vpop.permute.xlu0 %1069
    %s1072 = sor.u32 256, 120
    %1073 = vbcast.lane.b32.xlu0 %v882, %s1072
    %v1074 = vpop.permute.xlu0 %1073
    %v1123 = vmul.f32 %v866, %v888
    %v1124 = vmul.f32 %v866, %v892
    %v1125 = vmul.f32 %v866, %v896
    %v1126 = vmul.f32 %v866, %v900
    %v1127 = vmul.f32 %v866, %v904
    %v1128 = vmul.f32 %v866, %v908
    %v1129 = vmul.f32 %v866, %v912
    %v1130 = vmul.f32 %v866, %v916
    %v1131 = vmul.f32 %v866, %v920
    %v1132 = vmul.f32 %v866, %v924
    %v1133 = vmul.f32 %v866, %v928
    %v1134 = vmul.f32 %v866, %v932
    %v1135 = vmul.f32 %v866, %v936
    %v1136 = vmul.f32 %v866, %v940
    %v1137 = vmul.f32 %v866, %v944
    %v1138 = vmul.f32 %v866, %v948
    %v1139 = vmul.f32 %v866, %v951
    %v1140 = vmul.f32 %v866, %v955
    %v1141 = vmul.f32 %v866, %v959
    %v1142 = vmul.f32 %v866, %v963
    %v1143 = vmul.f32 %v866, %v967
    %v1144 = vmul.f32 %v866, %v971
    %v1145 = vmul.f32 %v866, %v975
    %v1146 = vmul.f32 %v866, %v979
    %v1147 = vmul.f32 %v866, %v983
    %v1148 = vmul.f32 %v866, %v987
    %v1149 = vmul.f32 %v866, %v991
    %v1150 = vmul.f32 %v866, %v995
    %v1151 = vmul.f32 %v866, %v999
    %v1152 = vmul.f32 %v866, %v1003
    %v1153 = vmul.f32 %v866, %v1007
    %v1154 = vmul.f32 %v866, %v1011
    %v1155 = vmul.f32 %v866, %v1014
    %v1156 = vmul.f32 %v866, %v1018
    %v1157 = vmul.f32 %v866, %v1022
    %v1158 = vmul.f32 %v866, %v1026
    %v1159 = vmul.f32 %v866, %v1030
    %v1160 = vmul.f32 %v866, %v1034
    %v1161 = vmul.f32 %v866, %v1038
    %v1162 = vmul.f32 %v866, %v1042
    %v1163 = vmul.f32 %v866, %v1046
    %v1164 = vmul.f32 %v866, %v1050
    %v1165 = vmul.f32 %v866, %v1054
    %v1166 = vmul.f32 %v866, %v1058
    %v1167 = vmul.f32 %v866, %v1062
    %v1168 = vmul.f32 %v866, %v1066
    %v1169 = vmul.f32 %v866, %v1070
    %v1170 = vmul.f32 %v866, %v1074
    %v1171 = vmul.f32 %v870, %v888
    %v1172 = vmul.f32 %v870, %v892
    %v1173 = vmul.f32 %v870, %v896
    %v1174 = vmul.f32 %v870, %v900
    %v1175 = vmul.f32 %v870, %v904
    %v1176 = vmul.f32 %v870, %v908
    %v1177 = vmul.f32 %v870, %v912
    %v1178 = vmul.f32 %v870, %v916
    %v1179 = vmul.f32 %v870, %v920
    %v1180 = vmul.f32 %v870, %v924
    %v1181 = vmul.f32 %v870, %v928
    %v1182 = vmul.f32 %v870, %v932
    %v1183 = vmul.f32 %v870, %v936
    %v1184 = vmul.f32 %v870, %v940
    %v1185 = vmul.f32 %v870, %v944
    %v1186 = vmul.f32 %v870, %v948
    %v1187 = vmul.f32 %v870, %v951
    %v1188 = vmul.f32 %v870, %v955
    %v1189 = vmul.f32 %v870, %v959
    %v1190 = vmul.f32 %v870, %v963
    %v1191 = vmul.f32 %v870, %v967
    %v1192 = vmul.f32 %v870, %v971
    %v1193 = vmul.f32 %v870, %v975
    %v1194 = vmul.f32 %v870, %v979
    %v1195 = vmul.f32 %v870, %v983
    %v1196 = vmul.f32 %v870, %v987
    %v1197 = vmul.f32 %v870, %v991
    %v1198 = vmul.f32 %v870, %v995
    %v1199 = vmul.f32 %v870, %v999
    %v1200 = vmul.f32 %v870, %v1003
    %v1201 = vmul.f32 %v870, %v1007
    %v1202 = vmul.f32 %v870, %v1011
    %v1203 = vmul.f32 %v870, %v1014
    %v1204 = vmul.f32 %v870, %v1018
    %v1205 = vmul.f32 %v870, %v1022
    %v1206 = vmul.f32 %v870, %v1026
    %v1207 = vmul.f32 %v870, %v1030
    %v1208 = vmul.f32 %v870, %v1034
    %v1209 = vmul.f32 %v870, %v1038
    %v1210 = vmul.f32 %v870, %v1042
    %v1211 = vmul.f32 %v870, %v1046
    %v1212 = vmul.f32 %v870, %v1050
    %v1213 = vmul.f32 %v870, %v1054
    %v1214 = vmul.f32 %v870, %v1058
    %v1215 = vmul.f32 %v870, %v1062
    %v1216 = vmul.f32 %v870, %v1066
    %v1217 = vmul.f32 %v870, %v1070
    %v1218 = vmul.f32 %v870, %v1074
    %v1219 = vadd.f32 %v767, %v1123
    %v1220 = vadd.f32 %v768, %v1124
    %v1221 = vadd.f32 %v769, %v1125
    %v1222 = vadd.f32 %v770, %v1126
    %v1223 = vadd.f32 %v771, %v1127
    %v1224 = vadd.f32 %v772, %v1128
    %v1225 = vadd.f32 %v773, %v1129
    %v1226 = vadd.f32 %v774, %v1130
    %v1227 = vadd.f32 %v775, %v1131
    %v1228 = vadd.f32 %v776, %v1132
    %v1229 = vadd.f32 %v777, %v1133
    %v1230 = vadd.f32 %v778, %v1134
    %v1231 = vadd.f32 %v779, %v1135
    %v1232 = vadd.f32 %v780, %v1136
    %v1233 = vadd.f32 %v781, %v1137
    %v1234 = vadd.f32 %v782, %v1138
    %v1235 = vadd.f32 %v783, %v1139
    %v1236 = vadd.f32 %v784, %v1140
    %v1237 = vadd.f32 %v785, %v1141
    %v1238 = vadd.f32 %v786, %v1142
    %v1239 = vadd.f32 %v787, %v1143
    %v1240 = vadd.f32 %v788, %v1144
    %v1241 = vadd.f32 %v789, %v1145
    %v1242 = vadd.f32 %v790, %v1146
    %v1243 = vadd.f32 %v791, %v1147
    %v1244 = vadd.f32 %v792, %v1148
    %v1245 = vadd.f32 %v793, %v1149
    %v1246 = vadd.f32 %v794, %v1150
    %v1247 = vadd.f32 %v795, %v1151
    %v1248 = vadd.f32 %v796, %v1152
    %v1249 = vadd.f32 %v797, %v1153
    %v1250 = vadd.f32 %v798, %v1154
    %v1251 = vadd.f32 %v799, %v1155
    %v1252 = vadd.f32 %v800, %v1156
    %v1253 = vadd.f32 %v801, %v1157
    %v1254 = vadd.f32 %v802, %v1158
    %v1255 = vadd.f32 %v803, %v1159
    %v1256 = vadd.f32 %v804, %v1160
    %v1257 = vadd.f32 %v805, %v1161
    %v1258 = vadd.f32 %v806, %v1162
    %v1259 = vadd.f32 %v807, %v1163
    %v1260 = vadd.f32 %v808, %v1164
    %v1261 = vadd.f32 %v809, %v1165
    %v1262 = vadd.f32 %v810, %v1166
    %v1263 = vadd.f32 %v811, %v1167
    %v1264 = vadd.f32 %v812, %v1168
    %v1265 = vadd.f32 %v813, %v1169
    %v1266 = vadd.f32 %v814, %v1170
    %v1267 = vadd.f32 %v815, %v1171
    %v1268 = vadd.f32 %v816, %v1172
    %v1269 = vadd.f32 %v817, %v1173
    %v1270 = vadd.f32 %v818, %v1174
    %v1271 = vadd.f32 %v819, %v1175
    %v1272 = vadd.f32 %v820, %v1176
    %v1273 = vadd.f32 %v821, %v1177
    %v1274 = vadd.f32 %v822, %v1178
    %v1275 = vadd.f32 %v823, %v1179
    %v1276 = vadd.f32 %v824, %v1180
    %v1277 = vadd.f32 %v825, %v1181
    %v1278 = vadd.f32 %v826, %v1182
    %v1279 = vadd.f32 %v827, %v1183
    %v1280 = vadd.f32 %v828, %v1184
    %v1281 = vadd.f32 %v829, %v1185
    %v1282 = vadd.f32 %v830, %v1186
    %v1283 = vadd.f32 %v831, %v1187
    %v1284 = vadd.f32 %v832, %v1188
    %v1285 = vadd.f32 %v833, %v1189
    %v1286 = vadd.f32 %v834, %v1190
    %v1287 = vadd.f32 %v835, %v1191
    %v1288 = vadd.f32 %v836, %v1192
    %v1289 = vadd.f32 %v837, %v1193
    %v1290 = vadd.f32 %v838, %v1194
    %v1291 = vadd.f32 %v839, %v1195
    %v1292 = vadd.f32 %v840, %v1196
    %v1293 = vadd.f32 %v841, %v1197
    %v1294 = vadd.f32 %v842, %v1198
    %v1295 = vadd.f32 %v843, %v1199
    %v1296 = vadd.f32 %v844, %v1200
    %v1297 = vadd.f32 %v845, %v1201
    %v1298 = vadd.f32 %v846, %v1202
    %v1299 = vadd.f32 %v847, %v1203
    %v1300 = vadd.f32 %v848, %v1204
    %v1301 = vadd.f32 %v849, %v1205
    %v1302 = vadd.f32 %v850, %v1206
    %v1303 = vadd.f32 %v851, %v1207
    %v1304 = vadd.f32 %v852, %v1208
    %v1305 = vadd.f32 %v853, %v1209
    %v1306 = vadd.f32 %v854, %v1210
    %v1307 = vadd.f32 %v855, %v1211
    %v1308 = vadd.f32 %v856, %v1212
    %v1309 = vadd.f32 %v857, %v1213
    %v1310 = vadd.f32 %v858, %v1214
    %v1311 = vadd.f32 %v859, %v1215
    %v1312 = vadd.f32 %v860, %v1216
    %v1313 = vadd.f32 %v861, %v1217
    %v1314 = vadd.f32 %v862, %v1218
    %v1315 = vlaneseq
    %v1316 = vshrl.u32 %v1315, 7
    %v1317 = vsub.s32 3, %v1316
    %v1318 = vrot.slane %v42, %v1317
    %v1319 = vlaneseq
    %v1320 = vshrl.u32 %v1319, 7
    %v1321 = vsub.s32 3, %v1320
    %v1322 = vrot.slane %v43, %v1321
    %v1323 = vlaneseq
    %v1324 = vshrl.u32 %v1323, 7
    %v1325 = vsub.s32 3, %v1324
    %v1326 = vrot.slane %v52, %v1325
    %v1327 = vlaneseq
    %v1328 = vshrl.u32 %v1327, 7
    %v1329 = vsub.s32 3, %v1328
    %v1330 = vrot.slane %v53, %v1329
    %v1331 = vlaneseq
    %v1332 = vshrl.u32 %v1331, 7
    %v1333 = vsub.s32 3, %v1332
    %v1334 = vrot.slane %v54, %v1333
    %1339 = vbcast.lane.b32.xlu0 %v1326, 256
    %v1340 = vpop.permute.xlu0 %1339
    %s1342 = sor.u32 256, 8
    %1343 = vbcast.lane.b32.xlu0 %v1326, %s1342
    %v1344 = vpop.permute.xlu0 %1343
    %s1346 = sor.u32 256, 16
    %1347 = vbcast.lane.b32.xlu0 %v1326, %s1346
    %v1348 = vpop.permute.xlu0 %1347
    %s1350 = sor.u32 256, 24
    %1351 = vbcast.lane.b32.xlu0 %v1326, %s1350
    %v1352 = vpop.permute.xlu0 %1351
    %s1354 = sor.u32 256, 32
    %1355 = vbcast.lane.b32.xlu0 %v1326, %s1354
    %v1356 = vpop.permute.xlu0 %1355
    %s1358 = sor.u32 256, 40
    %1359 = vbcast.lane.b32.xlu0 %v1326, %s1358
    %v1360 = vpop.permute.xlu0 %1359
    %s1362 = sor.u32 256, 48
    %1363 = vbcast.lane.b32.xlu0 %v1326, %s1362
    %v1364 = vpop.permute.xlu0 %1363
    %s1366 = sor.u32 256, 56
    %1367 = vbcast.lane.b32.xlu0 %v1326, %s1366
    %v1368 = vpop.permute.xlu0 %1367
    %s1370 = sor.u32 256, 64
    %1371 = vbcast.lane.b32.xlu0 %v1326, %s1370
    %v1372 = vpop.permute.xlu0 %1371
    %s1374 = sor.u32 256, 72
    %1375 = vbcast.lane.b32.xlu0 %v1326, %s1374
    %v1376 = vpop.permute.xlu0 %1375
    %s1378 = sor.u32 256, 80
    %1379 = vbcast.lane.b32.xlu0 %v1326, %s1378
    %v1380 = vpop.permute.xlu0 %1379
    %s1382 = sor.u32 256, 88
    %1383 = vbcast.lane.b32.xlu0 %v1326, %s1382
    %v1384 = vpop.permute.xlu0 %1383
    %s1386 = sor.u32 256, 96
    %1387 = vbcast.lane.b32.xlu0 %v1326, %s1386
    %v1388 = vpop.permute.xlu0 %1387
    %s1390 = sor.u32 256, 104
    %1391 = vbcast.lane.b32.xlu0 %v1326, %s1390
    %v1392 = vpop.permute.xlu0 %1391
    %s1394 = sor.u32 256, 112
    %1395 = vbcast.lane.b32.xlu0 %v1326, %s1394
    %v1396 = vpop.permute.xlu0 %1395
    %s1398 = sor.u32 256, 120
    %1399 = vbcast.lane.b32.xlu0 %v1326, %s1398
    %v1400 = vpop.permute.xlu0 %1399
    %1402 = vbcast.lane.b32.xlu0 %v1330, 256
    %v1403 = vpop.permute.xlu0 %1402
    %s1405 = sor.u32 256, 8
    %1406 = vbcast.lane.b32.xlu0 %v1330, %s1405
    %v1407 = vpop.permute.xlu0 %1406
    %s1409 = sor.u32 256, 16
    %1410 = vbcast.lane.b32.xlu0 %v1330, %s1409
    %v1411 = vpop.permute.xlu0 %1410
    %s1413 = sor.u32 256, 24
    %1414 = vbcast.lane.b32.xlu0 %v1330, %s1413
    %v1415 = vpop.permute.xlu0 %1414
    %s1417 = sor.u32 256, 32
    %1418 = vbcast.lane.b32.xlu0 %v1330, %s1417
    %v1419 = vpop.permute.xlu0 %1418
    %s1421 = sor.u32 256, 40
    %1422 = vbcast.lane.b32.xlu0 %v1330, %s1421
    %v1423 = vpop.permute.xlu0 %1422
    %s1425 = sor.u32 256, 48
    %1426 = vbcast.lane.b32.xlu0 %v1330, %s1425
    %v1427 = vpop.permute.xlu0 %1426
    %s1429 = sor.u32 256, 56
    %1430 = vbcast.lane.b32.xlu0 %v1330, %s1429
    %v1431 = vpop.permute.xlu0 %1430
    %s1433 = sor.u32 256, 64
    %1434 = vbcast.lane.b32.xlu0 %v1330, %s1433
    %v1435 = vpop.permute.xlu0 %1434
    %s1437 = sor.u32 256, 72
    %1438 = vbcast.lane.b32.xlu0 %v1330, %s1437
    %v1439 = vpop.permute.xlu0 %1438
    %s1441 = sor.u32 256, 80
    %1442 = vbcast.lane.b32.xlu0 %v1330, %s1441
    %v1443 = vpop.permute.xlu0 %1442
    %s1445 = sor.u32 256, 88
    %1446 = vbcast.lane.b32.xlu0 %v1330, %s1445
    %v1447 = vpop.permute.xlu0 %1446
    %s1449 = sor.u32 256, 96
    %1450 = vbcast.lane.b32.xlu0 %v1330, %s1449
    %v1451 = vpop.permute.xlu0 %1450
    %s1453 = sor.u32 256, 104
    %1454 = vbcast.lane.b32.xlu0 %v1330, %s1453
    %v1455 = vpop.permute.xlu0 %1454
    %s1457 = sor.u32 256, 112
    %1458 = vbcast.lane.b32.xlu0 %v1330, %s1457
    %v1459 = vpop.permute.xlu0 %1458
    %s1461 = sor.u32 256, 120
    %1462 = vbcast.lane.b32.xlu0 %v1330, %s1461
    %v1463 = vpop.permute.xlu0 %1462
    %1465 = vbcast.lane.b32.xlu0 %v1334, 256
    %v1466 = vpop.permute.xlu0 %1465
    %s1468 = sor.u32 256, 8
    %1469 = vbcast.lane.b32.xlu0 %v1334, %s1468
    %v1470 = vpop.permute.xlu0 %1469
    %s1472 = sor.u32 256, 16
    %1473 = vbcast.lane.b32.xlu0 %v1334, %s1472
    %v1474 = vpop.permute.xlu0 %1473
    %s1476 = sor.u32 256, 24
    %1477 = vbcast.lane.b32.xlu0 %v1334, %s1476
    %v1478 = vpop.permute.xlu0 %1477
    %s1480 = sor.u32 256, 32
    %1481 = vbcast.lane.b32.xlu0 %v1334, %s1480
    %v1482 = vpop.permute.xlu0 %1481
    %s1484 = sor.u32 256, 40
    %1485 = vbcast.lane.b32.xlu0 %v1334, %s1484
    %v1486 = vpop.permute.xlu0 %1485
    %s1488 = sor.u32 256, 48
    %1489 = vbcast.lane.b32.xlu0 %v1334, %s1488
    %v1490 = vpop.permute.xlu0 %1489
    %s1492 = sor.u32 256, 56
    %1493 = vbcast.lane.b32.xlu0 %v1334, %s1492
    %v1494 = vpop.permute.xlu0 %1493
    %s1496 = sor.u32 256, 64
    %1497 = vbcast.lane.b32.xlu0 %v1334, %s1496
    %v1498 = vpop.permute.xlu0 %1497
    %s1500 = sor.u32 256, 72
    %1501 = vbcast.lane.b32.xlu0 %v1334, %s1500
    %v1502 = vpop.permute.xlu0 %1501
    %s1504 = sor.u32 256, 80
    %1505 = vbcast.lane.b32.xlu0 %v1334, %s1504
    %v1506 = vpop.permute.xlu0 %1505
    %s1508 = sor.u32 256, 88
    %1509 = vbcast.lane.b32.xlu0 %v1334, %s1508
    %v1510 = vpop.permute.xlu0 %1509
    %s1512 = sor.u32 256, 96
    %1513 = vbcast.lane.b32.xlu0 %v1334, %s1512
    %v1514 = vpop.permute.xlu0 %1513
    %s1516 = sor.u32 256, 104
    %1517 = vbcast.lane.b32.xlu0 %v1334, %s1516
    %v1518 = vpop.permute.xlu0 %1517
    %s1520 = sor.u32 256, 112
    %1521 = vbcast.lane.b32.xlu0 %v1334, %s1520
    %v1522 = vpop.permute.xlu0 %1521
    %s1524 = sor.u32 256, 120
    %1525 = vbcast.lane.b32.xlu0 %v1334, %s1524
    %v1526 = vpop.permute.xlu0 %1525
    %v1575 = vmul.f32 %v1318, %v1340
    %v1576 = vmul.f32 %v1318, %v1344
    %v1577 = vmul.f32 %v1318, %v1348
    %v1578 = vmul.f32 %v1318, %v1352
    %v1579 = vmul.f32 %v1318, %v1356
    %v1580 = vmul.f32 %v1318, %v1360
    %v1581 = vmul.f32 %v1318, %v1364
    %v1582 = vmul.f32 %v1318, %v1368
    %v1583 = vmul.f32 %v1318, %v1372
    %v1584 = vmul.f32 %v1318, %v1376
    %v1585 = vmul.f32 %v1318, %v1380
    %v1586 = vmul.f32 %v1318, %v1384
    %v1587 = vmul.f32 %v1318, %v1388
    %v1588 = vmul.f32 %v1318, %v1392
    %v1589 = vmul.f32 %v1318, %v1396
    %v1590 = vmul.f32 %v1318, %v1400
    %v1591 = vmul.f32 %v1318, %v1403
    %v1592 = vmul.f32 %v1318, %v1407
    %v1593 = vmul.f32 %v1318, %v1411
    %v1594 = vmul.f32 %v1318, %v1415
    %v1595 = vmul.f32 %v1318, %v1419
    %v1596 = vmul.f32 %v1318, %v1423
    %v1597 = vmul.f32 %v1318, %v1427
    %v1598 = vmul.f32 %v1318, %v1431
    %v1599 = vmul.f32 %v1318, %v1435
    %v1600 = vmul.f32 %v1318, %v1439
    %v1601 = vmul.f32 %v1318, %v1443
    %v1602 = vmul.f32 %v1318, %v1447
    %v1603 = vmul.f32 %v1318, %v1451
    %v1604 = vmul.f32 %v1318, %v1455
    %v1605 = vmul.f32 %v1318, %v1459
    %v1606 = vmul.f32 %v1318, %v1463
    %v1607 = vmul.f32 %v1318, %v1466
    %v1608 = vmul.f32 %v1318, %v1470
    %v1609 = vmul.f32 %v1318, %v1474
    %v1610 = vmul.f32 %v1318, %v1478
    %v1611 = vmul.f32 %v1318, %v1482
    %v1612 = vmul.f32 %v1318, %v1486
    %v1613 = vmul.f32 %v1318, %v1490
    %v1614 = vmul.f32 %v1318, %v1494
    %v1615 = vmul.f32 %v1318, %v1498
    %v1616 = vmul.f32 %v1318, %v1502
    %v1617 = vmul.f32 %v1318, %v1506
    %v1618 = vmul.f32 %v1318, %v1510
    %v1619 = vmul.f32 %v1318, %v1514
    %v1620 = vmul.f32 %v1318, %v1518
    %v1621 = vmul.f32 %v1318, %v1522
    %v1622 = vmul.f32 %v1318, %v1526
    %v1623 = vmul.f32 %v1322, %v1340
    %v1624 = vmul.f32 %v1322, %v1344
    %v1625 = vmul.f32 %v1322, %v1348
    %v1626 = vmul.f32 %v1322, %v1352
    %v1627 = vmul.f32 %v1322, %v1356
    %v1628 = vmul.f32 %v1322, %v1360
    %v1629 = vmul.f32 %v1322, %v1364
    %v1630 = vmul.f32 %v1322, %v1368
    %v1631 = vmul.f32 %v1322, %v1372
    %v1632 = vmul.f32 %v1322, %v1376
    %v1633 = vmul.f32 %v1322, %v1380
    %v1634 = vmul.f32 %v1322, %v1384
    %v1635 = vmul.f32 %v1322, %v1388
    %v1636 = vmul.f32 %v1322, %v1392
    %v1637 = vmul.f32 %v1322, %v1396
    %v1638 = vmul.f32 %v1322, %v1400
    %v1639 = vmul.f32 %v1322, %v1403
    %v1640 = vmul.f32 %v1322, %v1407
    %v1641 = vmul.f32 %v1322, %v1411
    %v1642 = vmul.f32 %v1322, %v1415
    %v1643 = vmul.f32 %v1322, %v1419
    %v1644 = vmul.f32 %v1322, %v1423
    %v1645 = vmul.f32 %v1322, %v1427
    %v1646 = vmul.f32 %v1322, %v1431
    %v1647 = vmul.f32 %v1322, %v1435
    %v1648 = vmul.f32 %v1322, %v1439
    %v1649 = vmul.f32 %v1322, %v1443
    %v1650 = vmul.f32 %v1322, %v1447
    %v1651 = vmul.f32 %v1322, %v1451
    %v1652 = vmul.f32 %v1322, %v1455
    %v1653 = vmul.f32 %v1322, %v1459
    %v1654 = vmul.f32 %v1322, %v1463
    %v1655 = vmul.f32 %v1322, %v1466
    %v1656 = vmul.f32 %v1322, %v1470
    %v1657 = vmul.f32 %v1322, %v1474
    %v1658 = vmul.f32 %v1322, %v1478
    %v1659 = vmul.f32 %v1322, %v1482
    %v1660 = vmul.f32 %v1322, %v1486
    %v1661 = vmul.f32 %v1322, %v1490
    %v1662 = vmul.f32 %v1322, %v1494
    %v1663 = vmul.f32 %v1322, %v1498
    %v1664 = vmul.f32 %v1322, %v1502
    %v1665 = vmul.f32 %v1322, %v1506
    %v1666 = vmul.f32 %v1322, %v1510
    %v1667 = vmul.f32 %v1322, %v1514
    %v1668 = vmul.f32 %v1322, %v1518
    %v1669 = vmul.f32 %v1322, %v1522
    %v1670 = vmul.f32 %v1322, %v1526
    %v1671 = vadd.f32 %v1219, %v1575
    %v1672 = vadd.f32 %v1220, %v1576
    %v1673 = vadd.f32 %v1221, %v1577
    %v1674 = vadd.f32 %v1222, %v1578
    %v1675 = vadd.f32 %v1223, %v1579
    %v1676 = vadd.f32 %v1224, %v1580
    %v1677 = vadd.f32 %v1225, %v1581
    %v1678 = vadd.f32 %v1226, %v1582
    %v1679 = vadd.f32 %v1227, %v1583
    %v1680 = vadd.f32 %v1228, %v1584
    %v1681 = vadd.f32 %v1229, %v1585
    %v1682 = vadd.f32 %v1230, %v1586
    %v1683 = vadd.f32 %v1231, %v1587
    %v1684 = vadd.f32 %v1232, %v1588
    %v1685 = vadd.f32 %v1233, %v1589
    %v1686 = vadd.f32 %v1234, %v1590
    %v1687 = vadd.f32 %v1235, %v1591
    %v1688 = vadd.f32 %v1236, %v1592
    %v1689 = vadd.f32 %v1237, %v1593
    %v1690 = vadd.f32 %v1238, %v1594
    %v1691 = vadd.f32 %v1239, %v1595
    %v1692 = vadd.f32 %v1240, %v1596
    %v1693 = vadd.f32 %v1241, %v1597
    %v1694 = vadd.f32 %v1242, %v1598
    %v1695 = vadd.f32 %v1243, %v1599
    %v1696 = vadd.f32 %v1244, %v1600
    %v1697 = vadd.f32 %v1245, %v1601
    %v1698 = vadd.f32 %v1246, %v1602
    %v1699 = vadd.f32 %v1247, %v1603
    %v1700 = vadd.f32 %v1248, %v1604
    %v1701 = vadd.f32 %v1249, %v1605
    %v1702 = vadd.f32 %v1250, %v1606
    %v1703 = vadd.f32 %v1251, %v1607
    %v1704 = vadd.f32 %v1252, %v1608
    %v1705 = vadd.f32 %v1253, %v1609
    %v1706 = vadd.f32 %v1254, %v1610
    %v1707 = vadd.f32 %v1255, %v1611
    %v1708 = vadd.f32 %v1256, %v1612
    %v1709 = vadd.f32 %v1257, %v1613
    %v1710 = vadd.f32 %v1258, %v1614
    %v1711 = vadd.f32 %v1259, %v1615
    %v1712 = vadd.f32 %v1260, %v1616
    %v1713 = vadd.f32 %v1261, %v1617
    %v1714 = vadd.f32 %v1262, %v1618
    %v1715 = vadd.f32 %v1263, %v1619
    %v1716 = vadd.f32 %v1264, %v1620
    %v1717 = vadd.f32 %v1265, %v1621
    %v1718 = vadd.f32 %v1266, %v1622
    %v1719 = vadd.f32 %v1267, %v1623
    %v1720 = vadd.f32 %v1268, %v1624
    %v1721 = vadd.f32 %v1269, %v1625
    %v1722 = vadd.f32 %v1270, %v1626
    %v1723 = vadd.f32 %v1271, %v1627
    %v1724 = vadd.f32 %v1272, %v1628
    %v1725 = vadd.f32 %v1273, %v1629
    %v1726 = vadd.f32 %v1274, %v1630
    %v1727 = vadd.f32 %v1275, %v1631
    %v1728 = vadd.f32 %v1276, %v1632
    %v1729 = vadd.f32 %v1277, %v1633
    %v1730 = vadd.f32 %v1278, %v1634
    %v1731 = vadd.f32 %v1279, %v1635
    %v1732 = vadd.f32 %v1280, %v1636
    %v1733 = vadd.f32 %v1281, %v1637
    %v1734 = vadd.f32 %v1282, %v1638
    %v1735 = vadd.f32 %v1283, %v1639
    %v1736 = vadd.f32 %v1284, %v1640
    %v1737 = vadd.f32 %v1285, %v1641
    %v1738 = vadd.f32 %v1286, %v1642
    %v1739 = vadd.f32 %v1287, %v1643
    %v1740 = vadd.f32 %v1288, %v1644
    %v1741 = vadd.f32 %v1289, %v1645
    %v1742 = vadd.f32 %v1290, %v1646
    %v1743 = vadd.f32 %v1291, %v1647
    %v1744 = vadd.f32 %v1292, %v1648
    %v1745 = vadd.f32 %v1293, %v1649
    %v1746 = vadd.f32 %v1294, %v1650
    %v1747 = vadd.f32 %v1295, %v1651
    %v1748 = vadd.f32 %v1296, %v1652
    %v1749 = vadd.f32 %v1297, %v1653
    %v1750 = vadd.f32 %v1298, %v1654
    %v1751 = vadd.f32 %v1299, %v1655
    %v1752 = vadd.f32 %v1300, %v1656
    %v1753 = vadd.f32 %v1301, %v1657
    %v1754 = vadd.f32 %v1302, %v1658
    %v1755 = vadd.f32 %v1303, %v1659
    %v1756 = vadd.f32 %v1304, %v1660
    %v1757 = vadd.f32 %v1305, %v1661
    %v1758 = vadd.f32 %v1306, %v1662
    %v1759 = vadd.f32 %v1307, %v1663
    %v1760 = vadd.f32 %v1308, %v1664
    %v1761 = vadd.f32 %v1309, %v1665
    %v1762 = vadd.f32 %v1310, %v1666
    %v1763 = vadd.f32 %v1311, %v1667
    %v1764 = vadd.f32 %v1312, %v1668
    %v1765 = vadd.f32 %v1313, %v1669
    %v1766 = vadd.f32 %v1314, %v1670
    %v1767 = vlaneseq
    %v1768 = vshrl.u32 %v1767, 7
    %v1769 = vsub.s32 4, %v1768
    %v1770 = vrot.slane %v50, %v1769
    %v1771 = vlaneseq
    %v1772 = vshrl.u32 %v1771, 7
    %v1773 = vsub.s32 4, %v1772
    %v1774 = vrot.slane %v51, %v1773
    %v1775 = vlaneseq
    %v1776 = vshrl.u32 %v1775, 7
    %v1777 = vsub.s32 4, %v1776
    %v1778 = vrot.slane %v52, %v1777
    %v1779 = vlaneseq
    %v1780 = vshrl.u32 %v1779, 7
    %v1781 = vsub.s32 4, %v1780
    %v1782 = vrot.slane %v53, %v1781
    %v1783 = vlaneseq
    %v1784 = vshrl.u32 %v1783, 7
    %v1785 = vsub.s32 4, %v1784
    %v1786 = vrot.slane %v54, %v1785
    %1791 = vbcast.lane.b32.xlu0 %v1778, 256
    %v1792 = vpop.permute.xlu0 %1791
    %s1794 = sor.u32 256, 8
    %1795 = vbcast.lane.b32.xlu0 %v1778, %s1794
    %v1796 = vpop.permute.xlu0 %1795
    %s1798 = sor.u32 256, 16
    %1799 = vbcast.lane.b32.xlu0 %v1778, %s1798
    %v1800 = vpop.permute.xlu0 %1799
    %s1802 = sor.u32 256, 24
    %1803 = vbcast.lane.b32.xlu0 %v1778, %s1802
    %v1804 = vpop.permute.xlu0 %1803
    %s1806 = sor.u32 256, 32
    %1807 = vbcast.lane.b32.xlu0 %v1778, %s1806
    %v1808 = vpop.permute.xlu0 %1807
    %s1810 = sor.u32 256, 40
    %1811 = vbcast.lane.b32.xlu0 %v1778, %s1810
    %v1812 = vpop.permute.xlu0 %1811
    %s1814 = sor.u32 256, 48
    %1815 = vbcast.lane.b32.xlu0 %v1778, %s1814
    %v1816 = vpop.permute.xlu0 %1815
    %s1818 = sor.u32 256, 56
    %1819 = vbcast.lane.b32.xlu0 %v1778, %s1818
    %v1820 = vpop.permute.xlu0 %1819
    %s1822 = sor.u32 256, 64
    %1823 = vbcast.lane.b32.xlu0 %v1778, %s1822
    %v1824 = vpop.permute.xlu0 %1823
    %s1826 = sor.u32 256, 72
    %1827 = vbcast.lane.b32.xlu0 %v1778, %s1826
    %v1828 = vpop.permute.xlu0 %1827
    %s1830 = sor.u32 256, 80
    %1831 = vbcast.lane.b32.xlu0 %v1778, %s1830
    %v1832 = vpop.permute.xlu0 %1831
    %s1834 = sor.u32 256, 88
    %1835 = vbcast.lane.b32.xlu0 %v1778, %s1834
    %v1836 = vpop.permute.xlu0 %1835
    %s1838 = sor.u32 256, 96
    %1839 = vbcast.lane.b32.xlu0 %v1778, %s1838
    %v1840 = vpop.permute.xlu0 %1839
    %s1842 = sor.u32 256, 104
    %1843 = vbcast.lane.b32.xlu0 %v1778, %s1842
    %v1844 = vpop.permute.xlu0 %1843
    %s1846 = sor.u32 256, 112
    %1847 = vbcast.lane.b32.xlu0 %v1778, %s1846
    %v1848 = vpop.permute.xlu0 %1847
    %s1850 = sor.u32 256, 120
    %1851 = vbcast.lane.b32.xlu0 %v1778, %s1850
    %v1852 = vpop.permute.xlu0 %1851
    %1854 = vbcast.lane.b32.xlu0 %v1782, 256
    %v1855 = vpop.permute.xlu0 %1854
    %s1857 = sor.u32 256, 8
    %1858 = vbcast.lane.b32.xlu0 %v1782, %s1857
    %v1859 = vpop.permute.xlu0 %1858
    %s1861 = sor.u32 256, 16
    %1862 = vbcast.lane.b32.xlu0 %v1782, %s1861
    %v1863 = vpop.permute.xlu0 %1862
    %s1865 = sor.u32 256, 24
    %1866 = vbcast.lane.b32.xlu0 %v1782, %s1865
    %v1867 = vpop.permute.xlu0 %1866
    %s1869 = sor.u32 256, 32
    %1870 = vbcast.lane.b32.xlu0 %v1782, %s1869
    %v1871 = vpop.permute.xlu0 %1870
    %s1873 = sor.u32 256, 40
    %1874 = vbcast.lane.b32.xlu0 %v1782, %s1873
    %v1875 = vpop.permute.xlu0 %1874
    %s1877 = sor.u32 256, 48
    %1878 = vbcast.lane.b32.xlu0 %v1782, %s1877
    %v1879 = vpop.permute.xlu0 %1878
    %s1881 = sor.u32 256, 56
    %1882 = vbcast.lane.b32.xlu0 %v1782, %s1881
    %v1883 = vpop.permute.xlu0 %1882
    %s1885 = sor.u32 256, 64
    %1886 = vbcast.lane.b32.xlu0 %v1782, %s1885
    %v1887 = vpop.permute.xlu0 %1886
    %s1889 = sor.u32 256, 72
    %1890 = vbcast.lane.b32.xlu0 %v1782, %s1889
    %v1891 = vpop.permute.xlu0 %1890
    %s1893 = sor.u32 256, 80
    %1894 = vbcast.lane.b32.xlu0 %v1782, %s1893
    %v1895 = vpop.permute.xlu0 %1894
    %s1897 = sor.u32 256, 88
    %1898 = vbcast.lane.b32.xlu0 %v1782, %s1897
    %v1899 = vpop.permute.xlu0 %1898
    %s1901 = sor.u32 256, 96
    %1902 = vbcast.lane.b32.xlu0 %v1782, %s1901
    %v1903 = vpop.permute.xlu0 %1902
    %s1905 = sor.u32 256, 104
    %1906 = vbcast.lane.b32.xlu0 %v1782, %s1905
    %v1907 = vpop.permute.xlu0 %1906
    %s1909 = sor.u32 256, 112
    %1910 = vbcast.lane.b32.xlu0 %v1782, %s1909
    %v1911 = vpop.permute.xlu0 %1910
    %s1913 = sor.u32 256, 120
    %1914 = vbcast.lane.b32.xlu0 %v1782, %s1913
    %v1915 = vpop.permute.xlu0 %1914
    %1917 = vbcast.lane.b32.xlu0 %v1786, 256
    %v1918 = vpop.permute.xlu0 %1917
    %s1920 = sor.u32 256, 8
    %1921 = vbcast.lane.b32.xlu0 %v1786, %s1920
    %v1922 = vpop.permute.xlu0 %1921
    %s1924 = sor.u32 256, 16
    %1925 = vbcast.lane.b32.xlu0 %v1786, %s1924
    %v1926 = vpop.permute.xlu0 %1925
    %s1928 = sor.u32 256, 24
    %1929 = vbcast.lane.b32.xlu0 %v1786, %s1928
    %v1930 = vpop.permute.xlu0 %1929
    %s1932 = sor.u32 256, 32
    %1933 = vbcast.lane.b32.xlu0 %v1786, %s1932
    %v1934 = vpop.permute.xlu0 %1933
    %s1936 = sor.u32 256, 40
    %1937 = vbcast.lane.b32.xlu0 %v1786, %s1936
    %v1938 = vpop.permute.xlu0 %1937
    %s1940 = sor.u32 256, 48
    %1941 = vbcast.lane.b32.xlu0 %v1786, %s1940
    %v1942 = vpop.permute.xlu0 %1941
    %s1944 = sor.u32 256, 56
    %1945 = vbcast.lane.b32.xlu0 %v1786, %s1944
    %v1946 = vpop.permute.xlu0 %1945
    %s1948 = sor.u32 256, 64
    %1949 = vbcast.lane.b32.xlu0 %v1786, %s1948
    %v1950 = vpop.permute.xlu0 %1949
    %s1952 = sor.u32 256, 72
    %1953 = vbcast.lane.b32.xlu0 %v1786, %s1952
    %v1954 = vpop.permute.xlu0 %1953
    %s1956 = sor.u32 256, 80
    %1957 = vbcast.lane.b32.xlu0 %v1786, %s1956
    %v1958 = vpop.permute.xlu0 %1957
    %s1960 = sor.u32 256, 88
    %1961 = vbcast.lane.b32.xlu0 %v1786, %s1960
    %v1962 = vpop.permute.xlu0 %1961
    %s1964 = sor.u32 256, 96
    %1965 = vbcast.lane.b32.xlu0 %v1786, %s1964
    %v1966 = vpop.permute.xlu0 %1965
    %s1968 = sor.u32 256, 104
    %1969 = vbcast.lane.b32.xlu0 %v1786, %s1968
    %v1970 = vpop.permute.xlu0 %1969
    %s1972 = sor.u32 256, 112
    %1973 = vbcast.lane.b32.xlu0 %v1786, %s1972
    %v1974 = vpop.permute.xlu0 %1973
    %s1976 = sor.u32 256, 120
    %1977 = vbcast.lane.b32.xlu0 %v1786, %s1976
    %v1978 = vpop.permute.xlu0 %1977
    %v2027 = vmul.f32 %v1770, %v1792
    %v2028 = vmul.f32 %v1770, %v1796
    %v2029 = vmul.f32 %v1770, %v1800
    %v2030 = vmul.f32 %v1770, %v1804
    %v2031 = vmul.f32 %v1770, %v1808
    %v2032 = vmul.f32 %v1770, %v1812
    %v2033 = vmul.f32 %v1770, %v1816
    %v2034 = vmul.f32 %v1770, %v1820
    %v2035 = vmul.f32 %v1770, %v1824
    %v2036 = vmul.f32 %v1770, %v1828
    %v2037 = vmul.f32 %v1770, %v1832
    %v2038 = vmul.f32 %v1770, %v1836
    %v2039 = vmul.f32 %v1770, %v1840
    %v2040 = vmul.f32 %v1770, %v1844
    %v2041 = vmul.f32 %v1770, %v1848
    %v2042 = vmul.f32 %v1770, %v1852
    %v2043 = vmul.f32 %v1770, %v1855
    %v2044 = vmul.f32 %v1770, %v1859
    %v2045 = vmul.f32 %v1770, %v1863
    %v2046 = vmul.f32 %v1770, %v1867
    %v2047 = vmul.f32 %v1770, %v1871
    %v2048 = vmul.f32 %v1770, %v1875
    %v2049 = vmul.f32 %v1770, %v1879
    %v2050 = vmul.f32 %v1770, %v1883
    %v2051 = vmul.f32 %v1770, %v1887
    %v2052 = vmul.f32 %v1770, %v1891
    %v2053 = vmul.f32 %v1770, %v1895
    %v2054 = vmul.f32 %v1770, %v1899
    %v2055 = vmul.f32 %v1770, %v1903
    %v2056 = vmul.f32 %v1770, %v1907
    %v2057 = vmul.f32 %v1770, %v1911
    %v2058 = vmul.f32 %v1770, %v1915
    %v2059 = vmul.f32 %v1770, %v1918
    %v2060 = vmul.f32 %v1770, %v1922
    %v2061 = vmul.f32 %v1770, %v1926
    %v2062 = vmul.f32 %v1770, %v1930
    %v2063 = vmul.f32 %v1770, %v1934
    %v2064 = vmul.f32 %v1770, %v1938
    %v2065 = vmul.f32 %v1770, %v1942
    %v2066 = vmul.f32 %v1770, %v1946
    %v2067 = vmul.f32 %v1770, %v1950
    %v2068 = vmul.f32 %v1770, %v1954
    %v2069 = vmul.f32 %v1770, %v1958
    %v2070 = vmul.f32 %v1770, %v1962
    %v2071 = vmul.f32 %v1770, %v1966
    %v2072 = vmul.f32 %v1770, %v1970
    %v2073 = vmul.f32 %v1770, %v1974
    %v2074 = vmul.f32 %v1770, %v1978
    %v2075 = vmul.f32 %v1774, %v1792
    %v2076 = vmul.f32 %v1774, %v1796
    %v2077 = vmul.f32 %v1774, %v1800
    %v2078 = vmul.f32 %v1774, %v1804
    %v2079 = vmul.f32 %v1774, %v1808
    %v2080 = vmul.f32 %v1774, %v1812
    %v2081 = vmul.f32 %v1774, %v1816
    %v2082 = vmul.f32 %v1774, %v1820
    %v2083 = vmul.f32 %v1774, %v1824
    %v2084 = vmul.f32 %v1774, %v1828
    %v2085 = vmul.f32 %v1774, %v1832
    %v2086 = vmul.f32 %v1774, %v1836
    %v2087 = vmul.f32 %v1774, %v1840
    %v2088 = vmul.f32 %v1774, %v1844
    %v2089 = vmul.f32 %v1774, %v1848
    %v2090 = vmul.f32 %v1774, %v1852
    %v2091 = vmul.f32 %v1774, %v1855
    %v2092 = vmul.f32 %v1774, %v1859
    %v2093 = vmul.f32 %v1774, %v1863
    %v2094 = vmul.f32 %v1774, %v1867
    %v2095 = vmul.f32 %v1774, %v1871
    %v2096 = vmul.f32 %v1774, %v1875
    %v2097 = vmul.f32 %v1774, %v1879
    %v2098 = vmul.f32 %v1774, %v1883
    %v2099 = vmul.f32 %v1774, %v1887
    %v2100 = vmul.f32 %v1774, %v1891
    %v2101 = vmul.f32 %v1774, %v1895
    %v2102 = vmul.f32 %v1774, %v1899
    %v2103 = vmul.f32 %v1774, %v1903
    %v2104 = vmul.f32 %v1774, %v1907
    %v2105 = vmul.f32 %v1774, %v1911
    %v2106 = vmul.f32 %v1774, %v1915
    %v2107 = vmul.f32 %v1774, %v1918
    %v2108 = vmul.f32 %v1774, %v1922
    %v2109 = vmul.f32 %v1774, %v1926
    %v2110 = vmul.f32 %v1774, %v1930
    %v2111 = vmul.f32 %v1774, %v1934
    %v2112 = vmul.f32 %v1774, %v1938
    %v2113 = vmul.f32 %v1774, %v1942
    %v2114 = vmul.f32 %v1774, %v1946
    %v2115 = vmul.f32 %v1774, %v1950
    %v2116 = vmul.f32 %v1774, %v1954
    %v2117 = vmul.f32 %v1774, %v1958
    %v2118 = vmul.f32 %v1774, %v1962
    %v2119 = vmul.f32 %v1774, %v1966
    %v2120 = vmul.f32 %v1774, %v1970
    %v2121 = vmul.f32 %v1774, %v1974
    %v2122 = vmul.f32 %v1774, %v1978
    %v2123 = vadd.f32 %v1671, %v2027
    %v2124 = vadd.f32 %v1672, %v2028
    %v2125 = vadd.f32 %v1673, %v2029
    %v2126 = vadd.f32 %v1674, %v2030
    %v2127 = vadd.f32 %v1675, %v2031
    %v2128 = vadd.f32 %v1676, %v2032
    %v2129 = vadd.f32 %v1677, %v2033
    %v2130 = vadd.f32 %v1678, %v2034
    %v2131 = vadd.f32 %v1679, %v2035
    %v2132 = vadd.f32 %v1680, %v2036
    %v2133 = vadd.f32 %v1681, %v2037
    %v2134 = vadd.f32 %v1682, %v2038
    %v2135 = vadd.f32 %v1683, %v2039
    %v2136 = vadd.f32 %v1684, %v2040
    %v2137 = vadd.f32 %v1685, %v2041
    %v2138 = vadd.f32 %v1686, %v2042
    %v2139 = vadd.f32 %v1687, %v2043
    %v2140 = vadd.f32 %v1688, %v2044
    %v2141 = vadd.f32 %v1689, %v2045
    %v2142 = vadd.f32 %v1690, %v2046
    %v2143 = vadd.f32 %v1691, %v2047
    %v2144 = vadd.f32 %v1692, %v2048
    %v2145 = vadd.f32 %v1693, %v2049
    %v2146 = vadd.f32 %v1694, %v2050
    %v2147 = vadd.f32 %v1695, %v2051
    %v2148 = vadd.f32 %v1696, %v2052
    %v2149 = vadd.f32 %v1697, %v2053
    %v2150 = vadd.f32 %v1698, %v2054
    %v2151 = vadd.f32 %v1699, %v2055
    %v2152 = vadd.f32 %v1700, %v2056
    %v2153 = vadd.f32 %v1701, %v2057
    %v2154 = vadd.f32 %v1702, %v2058
    %v2155 = vadd.f32 %v1703, %v2059
    %v2156 = vadd.f32 %v1704, %v2060
    %v2157 = vadd.f32 %v1705, %v2061
    %v2158 = vadd.f32 %v1706, %v2062
    %v2159 = vadd.f32 %v1707, %v2063
    %v2160 = vadd.f32 %v1708, %v2064
    %v2161 = vadd.f32 %v1709, %v2065
    %v2162 = vadd.f32 %v1710, %v2066
    %v2163 = vadd.f32 %v1711, %v2067
    %v2164 = vadd.f32 %v1712, %v2068
    %v2165 = vadd.f32 %v1713, %v2069
    %v2166 = vadd.f32 %v1714, %v2070
    %v2167 = vadd.f32 %v1715, %v2071
    %v2168 = vadd.f32 %v1716, %v2072
    %v2169 = vadd.f32 %v1717, %v2073
    %v2170 = vadd.f32 %v1718, %v2074
    %v2171 = vadd.f32 %v1719, %v2075
    %v2172 = vadd.f32 %v1720, %v2076
    %v2173 = vadd.f32 %v1721, %v2077
    %v2174 = vadd.f32 %v1722, %v2078
    %v2175 = vadd.f32 %v1723, %v2079
    %v2176 = vadd.f32 %v1724, %v2080
    %v2177 = vadd.f32 %v1725, %v2081
    %v2178 = vadd.f32 %v1726, %v2082
    %v2179 = vadd.f32 %v1727, %v2083
    %v2180 = vadd.f32 %v1728, %v2084
    %v2181 = vadd.f32 %v1729, %v2085
    %v2182 = vadd.f32 %v1730, %v2086
    %v2183 = vadd.f32 %v1731, %v2087
    %v2184 = vadd.f32 %v1732, %v2088
    %v2185 = vadd.f32 %v1733, %v2089
    %v2186 = vadd.f32 %v1734, %v2090
    %v2187 = vadd.f32 %v1735, %v2091
    %v2188 = vadd.f32 %v1736, %v2092
    %v2189 = vadd.f32 %v1737, %v2093
    %v2190 = vadd.f32 %v1738, %v2094
    %v2191 = vadd.f32 %v1739, %v2095
    %v2192 = vadd.f32 %v1740, %v2096
    %v2193 = vadd.f32 %v1741, %v2097
    %v2194 = vadd.f32 %v1742, %v2098
    %v2195 = vadd.f32 %v1743, %v2099
    %v2196 = vadd.f32 %v1744, %v2100
    %v2197 = vadd.f32 %v1745, %v2101
    %v2198 = vadd.f32 %v1746, %v2102
    %v2199 = vadd.f32 %v1747, %v2103
    %v2200 = vadd.f32 %v1748, %v2104
    %v2201 = vadd.f32 %v1749, %v2105
    %v2202 = vadd.f32 %v1750, %v2106
    %v2203 = vadd.f32 %v1751, %v2107
    %v2204 = vadd.f32 %v1752, %v2108
    %v2205 = vadd.f32 %v1753, %v2109
    %v2206 = vadd.f32 %v1754, %v2110
    %v2207 = vadd.f32 %v1755, %v2111
    %v2208 = vadd.f32 %v1756, %v2112
    %v2209 = vadd.f32 %v1757, %v2113
    %v2210 = vadd.f32 %v1758, %v2114
    %v2211 = vadd.f32 %v1759, %v2115
    %v2212 = vadd.f32 %v1760, %v2116
    %v2213 = vadd.f32 %v1761, %v2117
    %v2214 = vadd.f32 %v1762, %v2118
    %v2215 = vadd.f32 %v1763, %v2119
    %v2216 = vadd.f32 %v1764, %v2120
    %v2217 = vadd.f32 %v1765, %v2121
    %v2218 = vadd.f32 %v1766, %v2122
    %v2219 = vlaneseq
    %v2220 = vshrl.u32 %v2219, 7
    %v2221 = vsub.s32 5, %v2220
    %v2222 = vrot.slane %v50, %v2221
    %v2223 = vlaneseq
    %v2224 = vshrl.u32 %v2223, 7
    %v2225 = vsub.s32 5, %v2224
    %v2226 = vrot.slane %v51, %v2225
    %v2227 = vlaneseq
    %v2228 = vshrl.u32 %v2227, 7
    %v2229 = vsub.s32 5, %v2228
    %v2230 = vrot.slane %v52, %v2229
    %v2231 = vlaneseq
    %v2232 = vshrl.u32 %v2231, 7
    %v2233 = vsub.s32 5, %v2232
    %v2234 = vrot.slane %v53, %v2233
    %v2235 = vlaneseq
    %v2236 = vshrl.u32 %v2235, 7
    %v2237 = vsub.s32 5, %v2236
    %v2238 = vrot.slane %v54, %v2237
    %2243 = vbcast.lane.b32.xlu0 %v2230, 256
    %v2244 = vpop.permute.xlu0 %2243
    %s2246 = sor.u32 256, 8
    %2247 = vbcast.lane.b32.xlu0 %v2230, %s2246
    %v2248 = vpop.permute.xlu0 %2247
    %s2250 = sor.u32 256, 16
    %2251 = vbcast.lane.b32.xlu0 %v2230, %s2250
    %v2252 = vpop.permute.xlu0 %2251
    %s2254 = sor.u32 256, 24
    %2255 = vbcast.lane.b32.xlu0 %v2230, %s2254
    %v2256 = vpop.permute.xlu0 %2255
    %s2258 = sor.u32 256, 32
    %2259 = vbcast.lane.b32.xlu0 %v2230, %s2258
    %v2260 = vpop.permute.xlu0 %2259
    %s2262 = sor.u32 256, 40
    %2263 = vbcast.lane.b32.xlu0 %v2230, %s2262
    %v2264 = vpop.permute.xlu0 %2263
    %s2266 = sor.u32 256, 48
    %2267 = vbcast.lane.b32.xlu0 %v2230, %s2266
    %v2268 = vpop.permute.xlu0 %2267
    %s2270 = sor.u32 256, 56
    %2271 = vbcast.lane.b32.xlu0 %v2230, %s2270
    %v2272 = vpop.permute.xlu0 %2271
    %s2274 = sor.u32 256, 64
    %2275 = vbcast.lane.b32.xlu0 %v2230, %s2274
    %v2276 = vpop.permute.xlu0 %2275
    %s2278 = sor.u32 256, 72
    %2279 = vbcast.lane.b32.xlu0 %v2230, %s2278
    %v2280 = vpop.permute.xlu0 %2279
    %s2282 = sor.u32 256, 80
    %2283 = vbcast.lane.b32.xlu0 %v2230, %s2282
    %v2284 = vpop.permute.xlu0 %2283
    %s2286 = sor.u32 256, 88
    %2287 = vbcast.lane.b32.xlu0 %v2230, %s2286
    %v2288 = vpop.permute.xlu0 %2287
    %s2290 = sor.u32 256, 96
    %2291 = vbcast.lane.b32.xlu0 %v2230, %s2290
    %v2292 = vpop.permute.xlu0 %2291
    %s2294 = sor.u32 256, 104
    %2295 = vbcast.lane.b32.xlu0 %v2230, %s2294
    %v2296 = vpop.permute.xlu0 %2295
    %s2298 = sor.u32 256, 112
    %2299 = vbcast.lane.b32.xlu0 %v2230, %s2298
    %v2300 = vpop.permute.xlu0 %2299
    %s2302 = sor.u32 256, 120
    %2303 = vbcast.lane.b32.xlu0 %v2230, %s2302
    %v2304 = vpop.permute.xlu0 %2303
    %2306 = vbcast.lane.b32.xlu0 %v2234, 256
    %v2307 = vpop.permute.xlu0 %2306
    %s2309 = sor.u32 256, 8
    %2310 = vbcast.lane.b32.xlu0 %v2234, %s2309
    %v2311 = vpop.permute.xlu0 %2310
    %s2313 = sor.u32 256, 16
    %2314 = vbcast.lane.b32.xlu0 %v2234, %s2313
    %v2315 = vpop.permute.xlu0 %2314
    %s2317 = sor.u32 256, 24
    %2318 = vbcast.lane.b32.xlu0 %v2234, %s2317
    %v2319 = vpop.permute.xlu0 %2318
    %s2321 = sor.u32 256, 32
    %2322 = vbcast.lane.b32.xlu0 %v2234, %s2321
    %v2323 = vpop.permute.xlu0 %2322
    %s2325 = sor.u32 256, 40
    %2326 = vbcast.lane.b32.xlu0 %v2234, %s2325
    %v2327 = vpop.permute.xlu0 %2326
    %s2329 = sor.u32 256, 48
    %2330 = vbcast.lane.b32.xlu0 %v2234, %s2329
    %v2331 = vpop.permute.xlu0 %2330
    %s2333 = sor.u32 256, 56
    %2334 = vbcast.lane.b32.xlu0 %v2234, %s2333
    %v2335 = vpop.permute.xlu0 %2334
    %s2337 = sor.u32 256, 64
    %2338 = vbcast.lane.b32.xlu0 %v2234, %s2337
    %v2339 = vpop.permute.xlu0 %2338
    %s2341 = sor.u32 256, 72
    %2342 = vbcast.lane.b32.xlu0 %v2234, %s2341
    %v2343 = vpop.permute.xlu0 %2342
    %s2345 = sor.u32 256, 80
    %2346 = vbcast.lane.b32.xlu0 %v2234, %s2345
    %v2347 = vpop.permute.xlu0 %2346
    %s2349 = sor.u32 256, 88
    %2350 = vbcast.lane.b32.xlu0 %v2234, %s2349
    %v2351 = vpop.permute.xlu0 %2350
    %s2353 = sor.u32 256, 96
    %2354 = vbcast.lane.b32.xlu0 %v2234, %s2353
    %v2355 = vpop.permute.xlu0 %2354
    %s2357 = sor.u32 256, 104
    %2358 = vbcast.lane.b32.xlu0 %v2234, %s2357
    %v2359 = vpop.permute.xlu0 %2358
    %s2361 = sor.u32 256, 112
    %2362 = vbcast.lane.b32.xlu0 %v2234, %s2361
    %v2363 = vpop.permute.xlu0 %2362
    %s2365 = sor.u32 256, 120
    %2366 = vbcast.lane.b32.xlu0 %v2234, %s2365
    %v2367 = vpop.permute.xlu0 %2366
    %2369 = vbcast.lane.b32.xlu0 %v2238, 256
    %v2370 = vpop.permute.xlu0 %2369
    %s2372 = sor.u32 256, 8
    %2373 = vbcast.lane.b32.xlu0 %v2238, %s2372
    %v2374 = vpop.permute.xlu0 %2373
    %s2376 = sor.u32 256, 16
    %2377 = vbcast.lane.b32.xlu0 %v2238, %s2376
    %v2378 = vpop.permute.xlu0 %2377
    %s2380 = sor.u32 256, 24
    %2381 = vbcast.lane.b32.xlu0 %v2238, %s2380
    %v2382 = vpop.permute.xlu0 %2381
    %s2384 = sor.u32 256, 32
    %2385 = vbcast.lane.b32.xlu0 %v2238, %s2384
    %v2386 = vpop.permute.xlu0 %2385
    %s2388 = sor.u32 256, 40
    %2389 = vbcast.lane.b32.xlu0 %v2238, %s2388
    %v2390 = vpop.permute.xlu0 %2389
    %s2392 = sor.u32 256, 48
    %2393 = vbcast.lane.b32.xlu0 %v2238, %s2392
    %v2394 = vpop.permute.xlu0 %2393
    %s2396 = sor.u32 256, 56
    %2397 = vbcast.lane.b32.xlu0 %v2238, %s2396
    %v2398 = vpop.permute.xlu0 %2397
    %s2400 = sor.u32 256, 64
    %2401 = vbcast.lane.b32.xlu0 %v2238, %s2400
    %v2402 = vpop.permute.xlu0 %2401
    %s2404 = sor.u32 256, 72
    %2405 = vbcast.lane.b32.xlu0 %v2238, %s2404
    %v2406 = vpop.permute.xlu0 %2405
    %s2408 = sor.u32 256, 80
    %2409 = vbcast.lane.b32.xlu0 %v2238, %s2408
    %v2410 = vpop.permute.xlu0 %2409
    %s2412 = sor.u32 256, 88
    %2413 = vbcast.lane.b32.xlu0 %v2238, %s2412
    %v2414 = vpop.permute.xlu0 %2413
    %s2416 = sor.u32 256, 96
    %2417 = vbcast.lane.b32.xlu0 %v2238, %s2416
    %v2418 = vpop.permute.xlu0 %2417
    %s2420 = sor.u32 256, 104
    %2421 = vbcast.lane.b32.xlu0 %v2238, %s2420
    %v2422 = vpop.permute.xlu0 %2421
    %s2424 = sor.u32 256, 112
    %2425 = vbcast.lane.b32.xlu0 %v2238, %s2424
    %v2426 = vpop.permute.xlu0 %2425
    %s2428 = sor.u32 256, 120
    %2429 = vbcast.lane.b32.xlu0 %v2238, %s2428
    %v2430 = vpop.permute.xlu0 %2429
    %v2479 = vmul.f32 %v2222, %v2244
    %v2480 = vmul.f32 %v2222, %v2248
    %v2481 = vmul.f32 %v2222, %v2252
    %v2482 = vmul.f32 %v2222, %v2256
    %v2483 = vmul.f32 %v2222, %v2260
    %v2484 = vmul.f32 %v2222, %v2264
    %v2485 = vmul.f32 %v2222, %v2268
    %v2486 = vmul.f32 %v2222, %v2272
    %v2487 = vmul.f32 %v2222, %v2276
    %v2488 = vmul.f32 %v2222, %v2280
    %v2489 = vmul.f32 %v2222, %v2284
    %v2490 = vmul.f32 %v2222, %v2288
    %v2491 = vmul.f32 %v2222, %v2292
    %v2492 = vmul.f32 %v2222, %v2296
    %v2493 = vmul.f32 %v2222, %v2300
    %v2494 = vmul.f32 %v2222, %v2304
    %v2495 = vmul.f32 %v2222, %v2307
    %v2496 = vmul.f32 %v2222, %v2311
    %v2497 = vmul.f32 %v2222, %v2315
    %v2498 = vmul.f32 %v2222, %v2319
    %v2499 = vmul.f32 %v2222, %v2323
    %v2500 = vmul.f32 %v2222, %v2327
    %v2501 = vmul.f32 %v2222, %v2331
    %v2502 = vmul.f32 %v2222, %v2335
    %v2503 = vmul.f32 %v2222, %v2339
    %v2504 = vmul.f32 %v2222, %v2343
    %v2505 = vmul.f32 %v2222, %v2347
    %v2506 = vmul.f32 %v2222, %v2351
    %v2507 = vmul.f32 %v2222, %v2355
    %v2508 = vmul.f32 %v2222, %v2359
    %v2509 = vmul.f32 %v2222, %v2363
    %v2510 = vmul.f32 %v2222, %v2367
    %v2511 = vmul.f32 %v2222, %v2370
    %v2512 = vmul.f32 %v2222, %v2374
    %v2513 = vmul.f32 %v2222, %v2378
    %v2514 = vmul.f32 %v2222, %v2382
    %v2515 = vmul.f32 %v2222, %v2386
    %v2516 = vmul.f32 %v2222, %v2390
    %v2517 = vmul.f32 %v2222, %v2394
    %v2518 = vmul.f32 %v2222, %v2398
    %v2519 = vmul.f32 %v2222, %v2402
    %v2520 = vmul.f32 %v2222, %v2406
    %v2521 = vmul.f32 %v2222, %v2410
    %v2522 = vmul.f32 %v2222, %v2414
    %v2523 = vmul.f32 %v2222, %v2418
    %v2524 = vmul.f32 %v2222, %v2422
    %v2525 = vmul.f32 %v2222, %v2426
    %v2526 = vmul.f32 %v2222, %v2430
    %v2527 = vmul.f32 %v2226, %v2244
    %v2528 = vmul.f32 %v2226, %v2248
    %v2529 = vmul.f32 %v2226, %v2252
    %v2530 = vmul.f32 %v2226, %v2256
    %v2531 = vmul.f32 %v2226, %v2260
    %v2532 = vmul.f32 %v2226, %v2264
    %v2533 = vmul.f32 %v2226, %v2268
    %v2534 = vmul.f32 %v2226, %v2272
    %v2535 = vmul.f32 %v2226, %v2276
    %v2536 = vmul.f32 %v2226, %v2280
    %v2537 = vmul.f32 %v2226, %v2284
    %v2538 = vmul.f32 %v2226, %v2288
    %v2539 = vmul.f32 %v2226, %v2292
    %v2540 = vmul.f32 %v2226, %v2296
    %v2541 = vmul.f32 %v2226, %v2300
    %v2542 = vmul.f32 %v2226, %v2304
    %v2543 = vmul.f32 %v2226, %v2307
    %v2544 = vmul.f32 %v2226, %v2311
    %v2545 = vmul.f32 %v2226, %v2315
    %v2546 = vmul.f32 %v2226, %v2319
    %v2547 = vmul.f32 %v2226, %v2323
    %v2548 = vmul.f32 %v2226, %v2327
    %v2549 = vmul.f32 %v2226, %v2331
    %v2550 = vmul.f32 %v2226, %v2335
    %v2551 = vmul.f32 %v2226, %v2339
    %v2552 = vmul.f32 %v2226, %v2343
    %v2553 = vmul.f32 %v2226, %v2347
    %v2554 = vmul.f32 %v2226, %v2351
    %v2555 = vmul.f32 %v2226, %v2355
    %v2556 = vmul.f32 %v2226, %v2359
    %v2557 = vmul.f32 %v2226, %v2363
    %v2558 = vmul.f32 %v2226, %v2367
    %v2559 = vmul.f32 %v2226, %v2370
    %v2560 = vmul.f32 %v2226, %v2374
    %v2561 = vmul.f32 %v2226, %v2378
    %v2562 = vmul.f32 %v2226, %v2382
    %v2563 = vmul.f32 %v2226, %v2386
    %v2564 = vmul.f32 %v2226, %v2390
    %v2565 = vmul.f32 %v2226, %v2394
    %v2566 = vmul.f32 %v2226, %v2398
    %v2567 = vmul.f32 %v2226, %v2402
    %v2568 = vmul.f32 %v2226, %v2406
    %v2569 = vmul.f32 %v2226, %v2410
    %v2570 = vmul.f32 %v2226, %v2414
    %v2571 = vmul.f32 %v2226, %v2418
    %v2572 = vmul.f32 %v2226, %v2422
    %v2573 = vmul.f32 %v2226, %v2426
    %v2574 = vmul.f32 %v2226, %v2430
    %v2575 = vadd.f32 %v2123, %v2479
    %v2576 = vadd.f32 %v2124, %v2480
    %v2577 = vadd.f32 %v2125, %v2481
    %v2578 = vadd.f32 %v2126, %v2482
    %v2579 = vadd.f32 %v2127, %v2483
    %v2580 = vadd.f32 %v2128, %v2484
    %v2581 = vadd.f32 %v2129, %v2485
    %v2582 = vadd.f32 %v2130, %v2486
    %v2583 = vadd.f32 %v2131, %v2487
    %v2584 = vadd.f32 %v2132, %v2488
    %v2585 = vadd.f32 %v2133, %v2489
    %v2586 = vadd.f32 %v2134, %v2490
    %v2587 = vadd.f32 %v2135, %v2491
    %v2588 = vadd.f32 %v2136, %v2492
    %v2589 = vadd.f32 %v2137, %v2493
    %v2590 = vadd.f32 %v2138, %v2494
    %v2591 = vadd.f32 %v2139, %v2495
    %v2592 = vadd.f32 %v2140, %v2496
    %v2593 = vadd.f32 %v2141, %v2497
    %v2594 = vadd.f32 %v2142, %v2498
    %v2595 = vadd.f32 %v2143, %v2499
    %v2596 = vadd.f32 %v2144, %v2500
    %v2597 = vadd.f32 %v2145, %v2501
    %v2598 = vadd.f32 %v2146, %v2502
    %v2599 = vadd.f32 %v2147, %v2503
    %v2600 = vadd.f32 %v2148, %v2504
    %v2601 = vadd.f32 %v2149, %v2505
    %v2602 = vadd.f32 %v2150, %v2506
    %v2603 = vadd.f32 %v2151, %v2507
    %v2604 = vadd.f32 %v2152, %v2508
    %v2605 = vadd.f32 %v2153, %v2509
    %v2606 = vadd.f32 %v2154, %v2510
    %v2607 = vadd.f32 %v2155, %v2511
    %v2608 = vadd.f32 %v2156, %v2512
    %v2609 = vadd.f32 %v2157, %v2513
    %v2610 = vadd.f32 %v2158, %v2514
    %v2611 = vadd.f32 %v2159, %v2515
    %v2612 = vadd.f32 %v2160, %v2516
    %v2613 = vadd.f32 %v2161, %v2517
    %v2614 = vadd.f32 %v2162, %v2518
    %v2615 = vadd.f32 %v2163, %v2519
    %v2616 = vadd.f32 %v2164, %v2520
    %v2617 = vadd.f32 %v2165, %v2521
    %v2618 = vadd.f32 %v2166, %v2522
    %v2619 = vadd.f32 %v2167, %v2523
    %v2620 = vadd.f32 %v2168, %v2524
    %v2621 = vadd.f32 %v2169, %v2525
    %v2622 = vadd.f32 %v2170, %v2526
    %v2623 = vadd.f32 %v2171, %v2527
    %v2624 = vadd.f32 %v2172, %v2528
    %v2625 = vadd.f32 %v2173, %v2529
    %v2626 = vadd.f32 %v2174, %v2530
    %v2627 = vadd.f32 %v2175, %v2531
    %v2628 = vadd.f32 %v2176, %v2532
    %v2629 = vadd.f32 %v2177, %v2533
    %v2630 = vadd.f32 %v2178, %v2534
    %v2631 = vadd.f32 %v2179, %v2535
    %v2632 = vadd.f32 %v2180, %v2536
    %v2633 = vadd.f32 %v2181, %v2537
    %v2634 = vadd.f32 %v2182, %v2538
    %v2635 = vadd.f32 %v2183, %v2539
    %v2636 = vadd.f32 %v2184, %v2540
    %v2637 = vadd.f32 %v2185, %v2541
    %v2638 = vadd.f32 %v2186, %v2542
    %v2639 = vadd.f32 %v2187, %v2543
    %v2640 = vadd.f32 %v2188, %v2544
    %v2641 = vadd.f32 %v2189, %v2545
    %v2642 = vadd.f32 %v2190, %v2546
    %v2643 = vadd.f32 %v2191, %v2547
    %v2644 = vadd.f32 %v2192, %v2548
    %v2645 = vadd.f32 %v2193, %v2549
    %v2646 = vadd.f32 %v2194, %v2550
    %v2647 = vadd.f32 %v2195, %v2551
    %v2648 = vadd.f32 %v2196, %v2552
    %v2649 = vadd.f32 %v2197, %v2553
    %v2650 = vadd.f32 %v2198, %v2554
    %v2651 = vadd.f32 %v2199, %v2555
    %v2652 = vadd.f32 %v2200, %v2556
    %v2653 = vadd.f32 %v2201, %v2557
    %v2654 = vadd.f32 %v2202, %v2558
    %v2655 = vadd.f32 %v2203, %v2559
    %v2656 = vadd.f32 %v2204, %v2560
    %v2657 = vadd.f32 %v2205, %v2561
    %v2658 = vadd.f32 %v2206, %v2562
    %v2659 = vadd.f32 %v2207, %v2563
    %v2660 = vadd.f32 %v2208, %v2564
    %v2661 = vadd.f32 %v2209, %v2565
    %v2662 = vadd.f32 %v2210, %v2566
    %v2663 = vadd.f32 %v2211, %v2567
    %v2664 = vadd.f32 %v2212, %v2568
    %v2665 = vadd.f32 %v2213, %v2569
    %v2666 = vadd.f32 %v2214, %v2570
    %v2667 = vadd.f32 %v2215, %v2571
    %v2668 = vadd.f32 %v2216, %v2572
    %v2669 = vadd.f32 %v2217, %v2573
    %v2670 = vadd.f32 %v2218, %v2574
    %v2671 = vlaneseq
    %v2672 = vshrl.u32 %v2671, 7
    %v2673 = vsub.s32 6, %v2672
    %v2674 = vrot.slane %v50, %v2673
    %v2675 = vlaneseq
    %v2676 = vshrl.u32 %v2675, 7
    %v2677 = vsub.s32 6, %v2676
    %v2678 = vrot.slane %v51, %v2677
    %v2679 = vlaneseq
    %v2680 = vshrl.u32 %v2679, 7
    %v2681 = vsub.s32 6, %v2680
    %v2682 = vrot.slane %v52, %v2681
    %v2683 = vlaneseq
    %v2684 = vshrl.u32 %v2683, 7
    %v2685 = vsub.s32 6, %v2684
    %v2686 = vrot.slane %v53, %v2685
    %v2687 = vlaneseq
    %v2688 = vshrl.u32 %v2687, 7
    %v2689 = vsub.s32 6, %v2688
    %v2690 = vrot.slane %v54, %v2689
    %2695 = vbcast.lane.b32.xlu0 %v2682, 256
    %v2696 = vpop.permute.xlu0 %2695
    %s2698 = sor.u32 256, 8
    %2699 = vbcast.lane.b32.xlu0 %v2682, %s2698
    %v2700 = vpop.permute.xlu0 %2699
    %s2702 = sor.u32 256, 16
    %2703 = vbcast.lane.b32.xlu0 %v2682, %s2702
    %v2704 = vpop.permute.xlu0 %2703
    %s2706 = sor.u32 256, 24
    %2707 = vbcast.lane.b32.xlu0 %v2682, %s2706
    %v2708 = vpop.permute.xlu0 %2707
    %s2710 = sor.u32 256, 32
    %2711 = vbcast.lane.b32.xlu0 %v2682, %s2710
    %v2712 = vpop.permute.xlu0 %2711
    %s2714 = sor.u32 256, 40
    %2715 = vbcast.lane.b32.xlu0 %v2682, %s2714
    %v2716 = vpop.permute.xlu0 %2715
    %s2718 = sor.u32 256, 48
    %2719 = vbcast.lane.b32.xlu0 %v2682, %s2718
    %v2720 = vpop.permute.xlu0 %2719
    %s2722 = sor.u32 256, 56
    %2723 = vbcast.lane.b32.xlu0 %v2682, %s2722
    %v2724 = vpop.permute.xlu0 %2723
    %s2726 = sor.u32 256, 64
    %2727 = vbcast.lane.b32.xlu0 %v2682, %s2726
    %v2728 = vpop.permute.xlu0 %2727
    %s2730 = sor.u32 256, 72
    %2731 = vbcast.lane.b32.xlu0 %v2682, %s2730
    %v2732 = vpop.permute.xlu0 %2731
    %s2734 = sor.u32 256, 80
    %2735 = vbcast.lane.b32.xlu0 %v2682, %s2734
    %v2736 = vpop.permute.xlu0 %2735
    %s2738 = sor.u32 256, 88
    %2739 = vbcast.lane.b32.xlu0 %v2682, %s2738
    %v2740 = vpop.permute.xlu0 %2739
    %s2742 = sor.u32 256, 96
    %2743 = vbcast.lane.b32.xlu0 %v2682, %s2742
    %v2744 = vpop.permute.xlu0 %2743
    %s2746 = sor.u32 256, 104
    %2747 = vbcast.lane.b32.xlu0 %v2682, %s2746
    %v2748 = vpop.permute.xlu0 %2747
    %s2750 = sor.u32 256, 112
    %2751 = vbcast.lane.b32.xlu0 %v2682, %s2750
    %v2752 = vpop.permute.xlu0 %2751
    %s2754 = sor.u32 256, 120
    %2755 = vbcast.lane.b32.xlu0 %v2682, %s2754
    %v2756 = vpop.permute.xlu0 %2755
    %2758 = vbcast.lane.b32.xlu0 %v2686, 256
    %v2759 = vpop.permute.xlu0 %2758
    %s2761 = sor.u32 256, 8
    %2762 = vbcast.lane.b32.xlu0 %v2686, %s2761
    %v2763 = vpop.permute.xlu0 %2762
    %s2765 = sor.u32 256, 16
    %2766 = vbcast.lane.b32.xlu0 %v2686, %s2765
    %v2767 = vpop.permute.xlu0 %2766
    %s2769 = sor.u32 256, 24
    %2770 = vbcast.lane.b32.xlu0 %v2686, %s2769
    %v2771 = vpop.permute.xlu0 %2770
    %s2773 = sor.u32 256, 32
    %2774 = vbcast.lane.b32.xlu0 %v2686, %s2773
    %v2775 = vpop.permute.xlu0 %2774
    %s2777 = sor.u32 256, 40
    %2778 = vbcast.lane.b32.xlu0 %v2686, %s2777
    %v2779 = vpop.permute.xlu0 %2778
    %s2781 = sor.u32 256, 48
    %2782 = vbcast.lane.b32.xlu0 %v2686, %s2781
    %v2783 = vpop.permute.xlu0 %2782
    %s2785 = sor.u32 256, 56
    %2786 = vbcast.lane.b32.xlu0 %v2686, %s2785
    %v2787 = vpop.permute.xlu0 %2786
    %s2789 = sor.u32 256, 64
    %2790 = vbcast.lane.b32.xlu0 %v2686, %s2789
    %v2791 = vpop.permute.xlu0 %2790
    %s2793 = sor.u32 256, 72
    %2794 = vbcast.lane.b32.xlu0 %v2686, %s2793
    %v2795 = vpop.permute.xlu0 %2794
    %s2797 = sor.u32 256, 80
    %2798 = vbcast.lane.b32.xlu0 %v2686, %s2797
    %v2799 = vpop.permute.xlu0 %2798
    %s2801 = sor.u32 256, 88
    %2802 = vbcast.lane.b32.xlu0 %v2686, %s2801
    %v2803 = vpop.permute.xlu0 %2802
    %s2805 = sor.u32 256, 96
    %2806 = vbcast.lane.b32.xlu0 %v2686, %s2805
    %v2807 = vpop.permute.xlu0 %2806
    %s2809 = sor.u32 256, 104
    %2810 = vbcast.lane.b32.xlu0 %v2686, %s2809
    %v2811 = vpop.permute.xlu0 %2810
    %s2813 = sor.u32 256, 112
    %2814 = vbcast.lane.b32.xlu0 %v2686, %s2813
    %v2815 = vpop.permute.xlu0 %2814
    %s2817 = sor.u32 256, 120
    %2818 = vbcast.lane.b32.xlu0 %v2686, %s2817
    %v2819 = vpop.permute.xlu0 %2818
    %2821 = vbcast.lane.b32.xlu0 %v2690, 256
    %v2822 = vpop.permute.xlu0 %2821
    %s2824 = sor.u32 256, 8
    %2825 = vbcast.lane.b32.xlu0 %v2690, %s2824
    %v2826 = vpop.permute.xlu0 %2825
    %s2828 = sor.u32 256, 16
    %2829 = vbcast.lane.b32.xlu0 %v2690, %s2828
    %v2830 = vpop.permute.xlu0 %2829
    %s2832 = sor.u32 256, 24
    %2833 = vbcast.lane.b32.xlu0 %v2690, %s2832
    %v2834 = vpop.permute.xlu0 %2833
    %s2836 = sor.u32 256, 32
    %2837 = vbcast.lane.b32.xlu0 %v2690, %s2836
    %v2838 = vpop.permute.xlu0 %2837
    %s2840 = sor.u32 256, 40
    %2841 = vbcast.lane.b32.xlu0 %v2690, %s2840
    %v2842 = vpop.permute.xlu0 %2841
    %s2844 = sor.u32 256, 48
    %2845 = vbcast.lane.b32.xlu0 %v2690, %s2844
    %v2846 = vpop.permute.xlu0 %2845
    %s2848 = sor.u32 256, 56
    %2849 = vbcast.lane.b32.xlu0 %v2690, %s2848
    %v2850 = vpop.permute.xlu0 %2849
    %s2852 = sor.u32 256, 64
    %2853 = vbcast.lane.b32.xlu0 %v2690, %s2852
    %v2854 = vpop.permute.xlu0 %2853
    %s2856 = sor.u32 256, 72
    %2857 = vbcast.lane.b32.xlu0 %v2690, %s2856
    %v2858 = vpop.permute.xlu0 %2857
    %s2860 = sor.u32 256, 80
    %2861 = vbcast.lane.b32.xlu0 %v2690, %s2860
    %v2862 = vpop.permute.xlu0 %2861
    %s2864 = sor.u32 256, 88
    %2865 = vbcast.lane.b32.xlu0 %v2690, %s2864
    %v2866 = vpop.permute.xlu0 %2865
    %s2868 = sor.u32 256, 96
    %2869 = vbcast.lane.b32.xlu0 %v2690, %s2868
    %v2870 = vpop.permute.xlu0 %2869
    %s2872 = sor.u32 256, 104
    %2873 = vbcast.lane.b32.xlu0 %v2690, %s2872
    %v2874 = vpop.permute.xlu0 %2873
    %s2876 = sor.u32 256, 112
    %2877 = vbcast.lane.b32.xlu0 %v2690, %s2876
    %v2878 = vpop.permute.xlu0 %2877
    %s2880 = sor.u32 256, 120
    %2881 = vbcast.lane.b32.xlu0 %v2690, %s2880
    %v2882 = vpop.permute.xlu0 %2881
    %v2931 = vmul.f32 %v2674, %v2696
    %v2932 = vmul.f32 %v2674, %v2700
    %v2933 = vmul.f32 %v2674, %v2704
    %v2934 = vmul.f32 %v2674, %v2708
    %v2935 = vmul.f32 %v2674, %v2712
    %v2936 = vmul.f32 %v2674, %v2716
    %v2937 = vmul.f32 %v2674, %v2720
    %v2938 = vmul.f32 %v2674, %v2724
    %v2939 = vmul.f32 %v2674, %v2728
    %v2940 = vmul.f32 %v2674, %v2732
    %v2941 = vmul.f32 %v2674, %v2736
    %v2942 = vmul.f32 %v2674, %v2740
    %v2943 = vmul.f32 %v2674, %v2744
    %v2944 = vmul.f32 %v2674, %v2748
    %v2945 = vmul.f32 %v2674, %v2752
    %v2946 = vmul.f32 %v2674, %v2756
    %v2947 = vmul.f32 %v2674, %v2759
    %v2948 = vmul.f32 %v2674, %v2763
    %v2949 = vmul.f32 %v2674, %v2767
    %v2950 = vmul.f32 %v2674, %v2771
    %v2951 = vmul.f32 %v2674, %v2775
    %v2952 = vmul.f32 %v2674, %v2779
    %v2953 = vmul.f32 %v2674, %v2783
    %v2954 = vmul.f32 %v2674, %v2787
    %v2955 = vmul.f32 %v2674, %v2791
    %v2956 = vmul.f32 %v2674, %v2795
    %v2957 = vmul.f32 %v2674, %v2799
    %v2958 = vmul.f32 %v2674, %v2803
    %v2959 = vmul.f32 %v2674, %v2807
    %v2960 = vmul.f32 %v2674, %v2811
    %v2961 = vmul.f32 %v2674, %v2815
    %v2962 = vmul.f32 %v2674, %v2819
    %v2963 = vmul.f32 %v2674, %v2822
    %v2964 = vmul.f32 %v2674, %v2826
    %v2965 = vmul.f32 %v2674, %v2830
    %v2966 = vmul.f32 %v2674, %v2834
    %v2967 = vmul.f32 %v2674, %v2838
    %v2968 = vmul.f32 %v2674, %v2842
    %v2969 = vmul.f32 %v2674, %v2846
    %v2970 = vmul.f32 %v2674, %v2850
    %v2971 = vmul.f32 %v2674, %v2854
    %v2972 = vmul.f32 %v2674, %v2858
    %v2973 = vmul.f32 %v2674, %v2862
    %v2974 = vmul.f32 %v2674, %v2866
    %v2975 = vmul.f32 %v2674, %v2870
    %v2976 = vmul.f32 %v2674, %v2874
    %v2977 = vmul.f32 %v2674, %v2878
    %v2978 = vmul.f32 %v2674, %v2882
    %v2979 = vmul.f32 %v2678, %v2696
    %v2980 = vmul.f32 %v2678, %v2700
    %v2981 = vmul.f32 %v2678, %v2704
    %v2982 = vmul.f32 %v2678, %v2708
    %v2983 = vmul.f32 %v2678, %v2712
    %v2984 = vmul.f32 %v2678, %v2716
    %v2985 = vmul.f32 %v2678, %v2720
    %v2986 = vmul.f32 %v2678, %v2724
    %v2987 = vmul.f32 %v2678, %v2728
    %v2988 = vmul.f32 %v2678, %v2732
    %v2989 = vmul.f32 %v2678, %v2736
    %v2990 = vmul.f32 %v2678, %v2740
    %v2991 = vmul.f32 %v2678, %v2744
    %v2992 = vmul.f32 %v2678, %v2748
    %v2993 = vmul.f32 %v2678, %v2752
    %v2994 = vmul.f32 %v2678, %v2756
    %v2995 = vmul.f32 %v2678, %v2759
    %v2996 = vmul.f32 %v2678, %v2763
    %v2997 = vmul.f32 %v2678, %v2767
    %v2998 = vmul.f32 %v2678, %v2771
    %v2999 = vmul.f32 %v2678, %v2775
    %v3000 = vmul.f32 %v2678, %v2779
    %v3001 = vmul.f32 %v2678, %v2783
    %v3002 = vmul.f32 %v2678, %v2787
    %v3003 = vmul.f32 %v2678, %v2791
    %v3004 = vmul.f32 %v2678, %v2795
    %v3005 = vmul.f32 %v2678, %v2799
    %v3006 = vmul.f32 %v2678, %v2803
    %v3007 = vmul.f32 %v2678, %v2807
    %v3008 = vmul.f32 %v2678, %v2811
    %v3009 = vmul.f32 %v2678, %v2815
    %v3010 = vmul.f32 %v2678, %v2819
    %v3011 = vmul.f32 %v2678, %v2822
    %v3012 = vmul.f32 %v2678, %v2826
    %v3013 = vmul.f32 %v2678, %v2830
    %v3014 = vmul.f32 %v2678, %v2834
    %v3015 = vmul.f32 %v2678, %v2838
    %v3016 = vmul.f32 %v2678, %v2842
    %v3017 = vmul.f32 %v2678, %v2846
    %v3018 = vmul.f32 %v2678, %v2850
    %v3019 = vmul.f32 %v2678, %v2854
    %v3020 = vmul.f32 %v2678, %v2858
    %v3021 = vmul.f32 %v2678, %v2862
    %v3022 = vmul.f32 %v2678, %v2866
    %v3023 = vmul.f32 %v2678, %v2870
    %v3024 = vmul.f32 %v2678, %v2874
    %v3025 = vmul.f32 %v2678, %v2878
    %v3026 = vmul.f32 %v2678, %v2882
    %v3027 = vadd.f32 %v2575, %v2931
    %v3028 = vadd.f32 %v2576, %v2932
    %v3029 = vadd.f32 %v2577, %v2933
    %v3030 = vadd.f32 %v2578, %v2934
    %v3031 = vadd.f32 %v2579, %v2935
    %v3032 = vadd.f32 %v2580, %v2936
    %v3033 = vadd.f32 %v2581, %v2937
    %v3034 = vadd.f32 %v2582, %v2938
    %v3035 = vadd.f32 %v2583, %v2939
    %v3036 = vadd.f32 %v2584, %v2940
    %v3037 = vadd.f32 %v2585, %v2941
    %v3038 = vadd.f32 %v2586, %v2942
    %v3039 = vadd.f32 %v2587, %v2943
    %v3040 = vadd.f32 %v2588, %v2944
    %v3041 = vadd.f32 %v2589, %v2945
    %v3042 = vadd.f32 %v2590, %v2946
    %v3043 = vadd.f32 %v2591, %v2947
    %v3044 = vadd.f32 %v2592, %v2948
    %v3045 = vadd.f32 %v2593, %v2949
    %v3046 = vadd.f32 %v2594, %v2950
    %v3047 = vadd.f32 %v2595, %v2951
    %v3048 = vadd.f32 %v2596, %v2952
    %v3049 = vadd.f32 %v2597, %v2953
    %v3050 = vadd.f32 %v2598, %v2954
    %v3051 = vadd.f32 %v2599, %v2955
    %v3052 = vadd.f32 %v2600, %v2956
    %v3053 = vadd.f32 %v2601, %v2957
    %v3054 = vadd.f32 %v2602, %v2958
    %v3055 = vadd.f32 %v2603, %v2959
    %v3056 = vadd.f32 %v2604, %v2960
    %v3057 = vadd.f32 %v2605, %v2961
    %v3058 = vadd.f32 %v2606, %v2962
    %v3059 = vadd.f32 %v2607, %v2963
    %v3060 = vadd.f32 %v2608, %v2964
    %v3061 = vadd.f32 %v2609, %v2965
    %v3062 = vadd.f32 %v2610, %v2966
    %v3063 = vadd.f32 %v2611, %v2967
    %v3064 = vadd.f32 %v2612, %v2968
    %v3065 = vadd.f32 %v2613, %v2969
    %v3066 = vadd.f32 %v2614, %v2970
    %v3067 = vadd.f32 %v2615, %v2971
    %v3068 = vadd.f32 %v2616, %v2972
    %v3069 = vadd.f32 %v2617, %v2973
    %v3070 = vadd.f32 %v2618, %v2974
    %v3071 = vadd.f32 %v2619, %v2975
    %v3072 = vadd.f32 %v2620, %v2976
    %v3073 = vadd.f32 %v2621, %v2977
    %v3074 = vadd.f32 %v2622, %v2978
    %v3075 = vadd.f32 %v2623, %v2979
    %v3076 = vadd.f32 %v2624, %v2980
    %v3077 = vadd.f32 %v2625, %v2981
    %v3078 = vadd.f32 %v2626, %v2982
    %v3079 = vadd.f32 %v2627, %v2983
    %v3080 = vadd.f32 %v2628, %v2984
    %v3081 = vadd.f32 %v2629, %v2985
    %v3082 = vadd.f32 %v2630, %v2986
    %v3083 = vadd.f32 %v2631, %v2987
    %v3084 = vadd.f32 %v2632, %v2988
    %v3085 = vadd.f32 %v2633, %v2989
    %v3086 = vadd.f32 %v2634, %v2990
    %v3087 = vadd.f32 %v2635, %v2991
    %v3088 = vadd.f32 %v2636, %v2992
    %v3089 = vadd.f32 %v2637, %v2993
    %v3090 = vadd.f32 %v2638, %v2994
    %v3091 = vadd.f32 %v2639, %v2995
    %v3092 = vadd.f32 %v2640, %v2996
    %v3093 = vadd.f32 %v2641, %v2997
    %v3094 = vadd.f32 %v2642, %v2998
    %v3095 = vadd.f32 %v2643, %v2999
    %v3096 = vadd.f32 %v2644, %v3000
    %v3097 = vadd.f32 %v2645, %v3001
    %v3098 = vadd.f32 %v2646, %v3002
    %v3099 = vadd.f32 %v2647, %v3003
    %v3100 = vadd.f32 %v2648, %v3004
    %v3101 = vadd.f32 %v2649, %v3005
    %v3102 = vadd.f32 %v2650, %v3006
    %v3103 = vadd.f32 %v2651, %v3007
    %v3104 = vadd.f32 %v2652, %v3008
    %v3105 = vadd.f32 %v2653, %v3009
    %v3106 = vadd.f32 %v2654, %v3010
    %v3107 = vadd.f32 %v2655, %v3011
    %v3108 = vadd.f32 %v2656, %v3012
    %v3109 = vadd.f32 %v2657, %v3013
    %v3110 = vadd.f32 %v2658, %v3014
    %v3111 = vadd.f32 %v2659, %v3015
    %v3112 = vadd.f32 %v2660, %v3016
    %v3113 = vadd.f32 %v2661, %v3017
    %v3114 = vadd.f32 %v2662, %v3018
    %v3115 = vadd.f32 %v2663, %v3019
    %v3116 = vadd.f32 %v2664, %v3020
    %v3117 = vadd.f32 %v2665, %v3021
    %v3118 = vadd.f32 %v2666, %v3022
    %v3119 = vadd.f32 %v2667, %v3023
    %v3120 = vadd.f32 %v2668, %v3024
    %v3121 = vadd.f32 %v2669, %v3025
    %v3122 = vadd.f32 %v2670, %v3026
    %v3123 = vlaneseq
    %v3124 = vshrl.u32 %v3123, 7
    %v3125 = vsub.s32 7, %v3124
    %v3126 = vrot.slane %v50, %v3125
    %v3127 = vlaneseq
    %v3128 = vshrl.u32 %v3127, 7
    %v3129 = vsub.s32 7, %v3128
    %v3130 = vrot.slane %v51, %v3129
    %v3131 = vlaneseq
    %v3132 = vshrl.u32 %v3131, 7
    %v3133 = vsub.s32 7, %v3132
    %v3134 = vrot.slane %v52, %v3133
    %v3135 = vlaneseq
    %v3136 = vshrl.u32 %v3135, 7
    %v3137 = vsub.s32 7, %v3136
    %v3138 = vrot.slane %v53, %v3137
    %v3139 = vlaneseq
    %v3140 = vshrl.u32 %v3139, 7
    %v3141 = vsub.s32 7, %v3140
    %v3142 = vrot.slane %v54, %v3141
    %3147 = vbcast.lane.b32.xlu0 %v3134, 256
    %v3148 = vpop.permute.xlu0 %3147
    %s3150 = sor.u32 256, 8
    %3151 = vbcast.lane.b32.xlu0 %v3134, %s3150
    %v3152 = vpop.permute.xlu0 %3151
    %s3154 = sor.u32 256, 16
    %3155 = vbcast.lane.b32.xlu0 %v3134, %s3154
    %v3156 = vpop.permute.xlu0 %3155
    %s3158 = sor.u32 256, 24
    %3159 = vbcast.lane.b32.xlu0 %v3134, %s3158
    %v3160 = vpop.permute.xlu0 %3159
    %s3162 = sor.u32 256, 32
    %3163 = vbcast.lane.b32.xlu0 %v3134, %s3162
    %v3164 = vpop.permute.xlu0 %3163
    %s3166 = sor.u32 256, 40
    %3167 = vbcast.lane.b32.xlu0 %v3134, %s3166
    %v3168 = vpop.permute.xlu0 %3167
    %s3170 = sor.u32 256, 48
    %3171 = vbcast.lane.b32.xlu0 %v3134, %s3170
    %v3172 = vpop.permute.xlu0 %3171
    %s3174 = sor.u32 256, 56
    %3175 = vbcast.lane.b32.xlu0 %v3134, %s3174
    %v3176 = vpop.permute.xlu0 %3175
    %s3178 = sor.u32 256, 64
    %3179 = vbcast.lane.b32.xlu0 %v3134, %s3178
    %v3180 = vpop.permute.xlu0 %3179
    %s3182 = sor.u32 256, 72
    %3183 = vbcast.lane.b32.xlu0 %v3134, %s3182
    %v3184 = vpop.permute.xlu0 %3183
    %s3186 = sor.u32 256, 80
    %3187 = vbcast.lane.b32.xlu0 %v3134, %s3186
    %v3188 = vpop.permute.xlu0 %3187
    %s3190 = sor.u32 256, 88
    %3191 = vbcast.lane.b32.xlu0 %v3134, %s3190
    %v3192 = vpop.permute.xlu0 %3191
    %s3194 = sor.u32 256, 96
    %3195 = vbcast.lane.b32.xlu0 %v3134, %s3194
    %v3196 = vpop.permute.xlu0 %3195
    %s3198 = sor.u32 256, 104
    %3199 = vbcast.lane.b32.xlu0 %v3134, %s3198
    %v3200 = vpop.permute.xlu0 %3199
    %s3202 = sor.u32 256, 112
    %3203 = vbcast.lane.b32.xlu0 %v3134, %s3202
    %v3204 = vpop.permute.xlu0 %3203
    %s3206 = sor.u32 256, 120
    %3207 = vbcast.lane.b32.xlu0 %v3134, %s3206
    %v3208 = vpop.permute.xlu0 %3207
    %3210 = vbcast.lane.b32.xlu0 %v3138, 256
    %v3211 = vpop.permute.xlu0 %3210
    %s3213 = sor.u32 256, 8
    %3214 = vbcast.lane.b32.xlu0 %v3138, %s3213
    %v3215 = vpop.permute.xlu0 %3214
    %s3217 = sor.u32 256, 16
    %3218 = vbcast.lane.b32.xlu0 %v3138, %s3217
    %v3219 = vpop.permute.xlu0 %3218
    %s3221 = sor.u32 256, 24
    %3222 = vbcast.lane.b32.xlu0 %v3138, %s3221
    %v3223 = vpop.permute.xlu0 %3222
    %s3225 = sor.u32 256, 32
    %3226 = vbcast.lane.b32.xlu0 %v3138, %s3225
    %v3227 = vpop.permute.xlu0 %3226
    %s3229 = sor.u32 256, 40
    %3230 = vbcast.lane.b32.xlu0 %v3138, %s3229
    %v3231 = vpop.permute.xlu0 %3230
    %s3233 = sor.u32 256, 48
    %3234 = vbcast.lane.b32.xlu0 %v3138, %s3233
    %v3235 = vpop.permute.xlu0 %3234
    %s3237 = sor.u32 256, 56
    %3238 = vbcast.lane.b32.xlu0 %v3138, %s3237
    %v3239 = vpop.permute.xlu0 %3238
    %s3241 = sor.u32 256, 64
    %3242 = vbcast.lane.b32.xlu0 %v3138, %s3241
    %v3243 = vpop.permute.xlu0 %3242
    %s3245 = sor.u32 256, 72
    %3246 = vbcast.lane.b32.xlu0 %v3138, %s3245
    %v3247 = vpop.permute.xlu0 %3246
    %s3249 = sor.u32 256, 80
    %3250 = vbcast.lane.b32.xlu0 %v3138, %s3249
    %v3251 = vpop.permute.xlu0 %3250
    %s3253 = sor.u32 256, 88
    %3254 = vbcast.lane.b32.xlu0 %v3138, %s3253
    %v3255 = vpop.permute.xlu0 %3254
    %s3257 = sor.u32 256, 96
    %3258 = vbcast.lane.b32.xlu0 %v3138, %s3257
    %v3259 = vpop.permute.xlu0 %3258
    %s3261 = sor.u32 256, 104
    %3262 = vbcast.lane.b32.xlu0 %v3138, %s3261
    %v3263 = vpop.permute.xlu0 %3262
    %s3265 = sor.u32 256, 112
    %3266 = vbcast.lane.b32.xlu0 %v3138, %s3265
    %v3267 = vpop.permute.xlu0 %3266
    %s3269 = sor.u32 256, 120
    %3270 = vbcast.lane.b32.xlu0 %v3138, %s3269
    %v3271 = vpop.permute.xlu0 %3270
    %3273 = vbcast.lane.b32.xlu0 %v3142, 256
    %v3274 = vpop.permute.xlu0 %3273
    %s3276 = sor.u32 256, 8
    %3277 = vbcast.lane.b32.xlu0 %v3142, %s3276
    %v3278 = vpop.permute.xlu0 %3277
    %s3280 = sor.u32 256, 16
    %3281 = vbcast.lane.b32.xlu0 %v3142, %s3280
    %v3282 = vpop.permute.xlu0 %3281
    %s3284 = sor.u32 256, 24
    %3285 = vbcast.lane.b32.xlu0 %v3142, %s3284
    %v3286 = vpop.permute.xlu0 %3285
    %s3288 = sor.u32 256, 32
    %3289 = vbcast.lane.b32.xlu0 %v3142, %s3288
    %v3290 = vpop.permute.xlu0 %3289
    %s3292 = sor.u32 256, 40
    %3293 = vbcast.lane.b32.xlu0 %v3142, %s3292
    %v3294 = vpop.permute.xlu0 %3293
    %s3296 = sor.u32 256, 48
    %3297 = vbcast.lane.b32.xlu0 %v3142, %s3296
    %v3298 = vpop.permute.xlu0 %3297
    %s3300 = sor.u32 256, 56
    %3301 = vbcast.lane.b32.xlu0 %v3142, %s3300
    %v3302 = vpop.permute.xlu0 %3301
    %s3304 = sor.u32 256, 64
    %3305 = vbcast.lane.b32.xlu0 %v3142, %s3304
    %v3306 = vpop.permute.xlu0 %3305
    %s3308 = sor.u32 256, 72
    %3309 = vbcast.lane.b32.xlu0 %v3142, %s3308
    %v3310 = vpop.permute.xlu0 %3309
    %s3312 = sor.u32 256, 80
    %3313 = vbcast.lane.b32.xlu0 %v3142, %s3312
    %v3314 = vpop.permute.xlu0 %3313
    %s3316 = sor.u32 256, 88
    %3317 = vbcast.lane.b32.xlu0 %v3142, %s3316
    %v3318 = vpop.permute.xlu0 %3317
    %s3320 = sor.u32 256, 96
    %3321 = vbcast.lane.b32.xlu0 %v3142, %s3320
    %v3322 = vpop.permute.xlu0 %3321
    %s3324 = sor.u32 256, 104
    %3325 = vbcast.lane.b32.xlu0 %v3142, %s3324
    %v3326 = vpop.permute.xlu0 %3325
    %s3328 = sor.u32 256, 112
    %3329 = vbcast.lane.b32.xlu0 %v3142, %s3328
    %v3330 = vpop.permute.xlu0 %3329
    %s3332 = sor.u32 256, 120
    %3333 = vbcast.lane.b32.xlu0 %v3142, %s3332
    %v3334 = vpop.permute.xlu0 %3333
    %v3383 = vmul.f32 %v3126, %v3148
    %v3384 = vmul.f32 %v3126, %v3152
    %v3385 = vmul.f32 %v3126, %v3156
    %v3386 = vmul.f32 %v3126, %v3160
    %v3387 = vmul.f32 %v3126, %v3164
    %v3388 = vmul.f32 %v3126, %v3168
    %v3389 = vmul.f32 %v3126, %v3172
    %v3390 = vmul.f32 %v3126, %v3176
    %v3391 = vmul.f32 %v3126, %v3180
    %v3392 = vmul.f32 %v3126, %v3184
    %v3393 = vmul.f32 %v3126, %v3188
    %v3394 = vmul.f32 %v3126, %v3192
    %v3395 = vmul.f32 %v3126, %v3196
    %v3396 = vmul.f32 %v3126, %v3200
    %v3397 = vmul.f32 %v3126, %v3204
    %v3398 = vmul.f32 %v3126, %v3208
    %v3399 = vmul.f32 %v3126, %v3211
    %v3400 = vmul.f32 %v3126, %v3215
    %v3401 = vmul.f32 %v3126, %v3219
    %v3402 = vmul.f32 %v3126, %v3223
    %v3403 = vmul.f32 %v3126, %v3227
    %v3404 = vmul.f32 %v3126, %v3231
    %v3405 = vmul.f32 %v3126, %v3235
    %v3406 = vmul.f32 %v3126, %v3239
    %v3407 = vmul.f32 %v3126, %v3243
    %v3408 = vmul.f32 %v3126, %v3247
    %v3409 = vmul.f32 %v3126, %v3251
    %v3410 = vmul.f32 %v3126, %v3255
    %v3411 = vmul.f32 %v3126, %v3259
    %v3412 = vmul.f32 %v3126, %v3263
    %v3413 = vmul.f32 %v3126, %v3267
    %v3414 = vmul.f32 %v3126, %v3271
    %v3415 = vmul.f32 %v3126, %v3274
    %v3416 = vmul.f32 %v3126, %v3278
    %v3417 = vmul.f32 %v3126, %v3282
    %v3418 = vmul.f32 %v3126, %v3286
    %v3419 = vmul.f32 %v3126, %v3290
    %v3420 = vmul.f32 %v3126, %v3294
    %v3421 = vmul.f32 %v3126, %v3298
    %v3422 = vmul.f32 %v3126, %v3302
    %v3423 = vmul.f32 %v3126, %v3306
    %v3424 = vmul.f32 %v3126, %v3310
    %v3425 = vmul.f32 %v3126, %v3314
    %v3426 = vmul.f32 %v3126, %v3318
    %v3427 = vmul.f32 %v3126, %v3322
    %v3428 = vmul.f32 %v3126, %v3326
    %v3429 = vmul.f32 %v3126, %v3330
    %v3430 = vmul.f32 %v3126, %v3334
    %v3431 = vmul.f32 %v3130, %v3148
    %v3432 = vmul.f32 %v3130, %v3152
    %v3433 = vmul.f32 %v3130, %v3156
    %v3434 = vmul.f32 %v3130, %v3160
    %v3435 = vmul.f32 %v3130, %v3164
    %v3436 = vmul.f32 %v3130, %v3168
    %v3437 = vmul.f32 %v3130, %v3172
    %v3438 = vmul.f32 %v3130, %v3176
    %v3439 = vmul.f32 %v3130, %v3180
    %v3440 = vmul.f32 %v3130, %v3184
    %v3441 = vmul.f32 %v3130, %v3188
    %v3442 = vmul.f32 %v3130, %v3192
    %v3443 = vmul.f32 %v3130, %v3196
    %v3444 = vmul.f32 %v3130, %v3200
    %v3445 = vmul.f32 %v3130, %v3204
    %v3446 = vmul.f32 %v3130, %v3208
    %v3447 = vmul.f32 %v3130, %v3211
    %v3448 = vmul.f32 %v3130, %v3215
    %v3449 = vmul.f32 %v3130, %v3219
    %v3450 = vmul.f32 %v3130, %v3223
    %v3451 = vmul.f32 %v3130, %v3227
    %v3452 = vmul.f32 %v3130, %v3231
    %v3453 = vmul.f32 %v3130, %v3235
    %v3454 = vmul.f32 %v3130, %v3239
    %v3455 = vmul.f32 %v3130, %v3243
    %v3456 = vmul.f32 %v3130, %v3247
    %v3457 = vmul.f32 %v3130, %v3251
    %v3458 = vmul.f32 %v3130, %v3255
    %v3459 = vmul.f32 %v3130, %v3259
    %v3460 = vmul.f32 %v3130, %v3263
    %v3461 = vmul.f32 %v3130, %v3267
    %v3462 = vmul.f32 %v3130, %v3271
    %v3463 = vmul.f32 %v3130, %v3274
    %v3464 = vmul.f32 %v3130, %v3278
    %v3465 = vmul.f32 %v3130, %v3282
    %v3466 = vmul.f32 %v3130, %v3286
    %v3467 = vmul.f32 %v3130, %v3290
    %v3468 = vmul.f32 %v3130, %v3294
    %v3469 = vmul.f32 %v3130, %v3298
    %v3470 = vmul.f32 %v3130, %v3302
    %v3471 = vmul.f32 %v3130, %v3306
    %v3472 = vmul.f32 %v3130, %v3310
    %v3473 = vmul.f32 %v3130, %v3314
    %v3474 = vmul.f32 %v3130, %v3318
    %v3475 = vmul.f32 %v3130, %v3322
    %v3476 = vmul.f32 %v3130, %v3326
    %v3477 = vmul.f32 %v3130, %v3330
    %v3478 = vmul.f32 %v3130, %v3334
    %v3479 = vadd.f32 %v3027, %v3383
    %v3480 = vadd.f32 %v3028, %v3384
    %v3481 = vadd.f32 %v3029, %v3385
    %v3482 = vadd.f32 %v3030, %v3386
    %v3483 = vadd.f32 %v3031, %v3387
    %v3484 = vadd.f32 %v3032, %v3388
    %v3485 = vadd.f32 %v3033, %v3389
    %v3486 = vadd.f32 %v3034, %v3390
    %v3487 = vadd.f32 %v3035, %v3391
    %v3488 = vadd.f32 %v3036, %v3392
    %v3489 = vadd.f32 %v3037, %v3393
    %v3490 = vadd.f32 %v3038, %v3394
    %v3491 = vadd.f32 %v3039, %v3395
    %v3492 = vadd.f32 %v3040, %v3396
    %v3493 = vadd.f32 %v3041, %v3397
    %v3494 = vadd.f32 %v3042, %v3398
    %v3495 = vadd.f32 %v3043, %v3399
    %v3496 = vadd.f32 %v3044, %v3400
    %v3497 = vadd.f32 %v3045, %v3401
    %v3498 = vadd.f32 %v3046, %v3402
    %v3499 = vadd.f32 %v3047, %v3403
    %v3500 = vadd.f32 %v3048, %v3404
    %v3501 = vadd.f32 %v3049, %v3405
    %v3502 = vadd.f32 %v3050, %v3406
    %v3503 = vadd.f32 %v3051, %v3407
    %v3504 = vadd.f32 %v3052, %v3408
    %v3505 = vadd.f32 %v3053, %v3409
    %v3506 = vadd.f32 %v3054, %v3410
    %v3507 = vadd.f32 %v3055, %v3411
    %v3508 = vadd.f32 %v3056, %v3412
    %v3509 = vadd.f32 %v3057, %v3413
    %v3510 = vadd.f32 %v3058, %v3414
    %v3511 = vadd.f32 %v3059, %v3415
    %v3512 = vadd.f32 %v3060, %v3416
    %v3513 = vadd.f32 %v3061, %v3417
    %v3514 = vadd.f32 %v3062, %v3418
    %v3515 = vadd.f32 %v3063, %v3419
    %v3516 = vadd.f32 %v3064, %v3420
    %v3517 = vadd.f32 %v3065, %v3421
    %v3518 = vadd.f32 %v3066, %v3422
    %v3519 = vadd.f32 %v3067, %v3423
    %v3520 = vadd.f32 %v3068, %v3424
    %v3521 = vadd.f32 %v3069, %v3425
    %v3522 = vadd.f32 %v3070, %v3426
    %v3523 = vadd.f32 %v3071, %v3427
    %v3524 = vadd.f32 %v3072, %v3428
    %v3525 = vadd.f32 %v3073, %v3429
    %v3526 = vadd.f32 %v3074, %v3430
    %v3527 = vadd.f32 %v3075, %v3431
    %v3528 = vadd.f32 %v3076, %v3432
    %v3529 = vadd.f32 %v3077, %v3433
    %v3530 = vadd.f32 %v3078, %v3434
    %v3531 = vadd.f32 %v3079, %v3435
    %v3532 = vadd.f32 %v3080, %v3436
    %v3533 = vadd.f32 %v3081, %v3437
    %v3534 = vadd.f32 %v3082, %v3438
    %v3535 = vadd.f32 %v3083, %v3439
    %v3536 = vadd.f32 %v3084, %v3440
    %v3537 = vadd.f32 %v3085, %v3441
    %v3538 = vadd.f32 %v3086, %v3442
    %v3539 = vadd.f32 %v3087, %v3443
    %v3540 = vadd.f32 %v3088, %v3444
    %v3541 = vadd.f32 %v3089, %v3445
    %v3542 = vadd.f32 %v3090, %v3446
    %v3543 = vadd.f32 %v3091, %v3447
    %v3544 = vadd.f32 %v3092, %v3448
    %v3545 = vadd.f32 %v3093, %v3449
    %v3546 = vadd.f32 %v3094, %v3450
    %v3547 = vadd.f32 %v3095, %v3451
    %v3548 = vadd.f32 %v3096, %v3452
    %v3549 = vadd.f32 %v3097, %v3453
    %v3550 = vadd.f32 %v3098, %v3454
    %v3551 = vadd.f32 %v3099, %v3455
    %v3552 = vadd.f32 %v3100, %v3456
    %v3553 = vadd.f32 %v3101, %v3457
    %v3554 = vadd.f32 %v3102, %v3458
    %v3555 = vadd.f32 %v3103, %v3459
    %v3556 = vadd.f32 %v3104, %v3460
    %v3557 = vadd.f32 %v3105, %v3461
    %v3558 = vadd.f32 %v3106, %v3462
    %v3559 = vadd.f32 %v3107, %v3463
    %v3560 = vadd.f32 %v3108, %v3464
    %v3561 = vadd.f32 %v3109, %v3465
    %v3562 = vadd.f32 %v3110, %v3466
    %v3563 = vadd.f32 %v3111, %v3467
    %v3564 = vadd.f32 %v3112, %v3468
    %v3565 = vadd.f32 %v3113, %v3469
    %v3566 = vadd.f32 %v3114, %v3470
    %v3567 = vadd.f32 %v3115, %v3471
    %v3568 = vadd.f32 %v3116, %v3472
    %v3569 = vadd.f32 %v3117, %v3473
    %v3570 = vadd.f32 %v3118, %v3474
    %v3571 = vadd.f32 %v3119, %v3475
    %v3572 = vadd.f32 %v3120, %v3476
    %v3573 = vadd.f32 %v3121, %v3477
    %v3574 = vadd.f32 %v3122, %v3478
    %v3575 = vand.u32 2147483647, %v3479
    %v3576 = vand.u32 2147483647, %v3480
    %v3577 = vand.u32 2147483647, %v3481
    %v3578 = vand.u32 2147483647, %v3482
    %v3579 = vand.u32 2147483647, %v3483
    %v3580 = vand.u32 2147483647, %v3484
    %v3581 = vand.u32 2147483647, %v3485
    %v3582 = vand.u32 2147483647, %v3486
    %v3583 = vand.u32 2147483647, %v3487
    %v3584 = vand.u32 2147483647, %v3488
    %v3585 = vand.u32 2147483647, %v3489
    %v3586 = vand.u32 2147483647, %v3490
    %v3587 = vand.u32 2147483647, %v3491
    %v3588 = vand.u32 2147483647, %v3492
    %v3589 = vand.u32 2147483647, %v3493
    %v3590 = vand.u32 2147483647, %v3494
    %v3591 = vand.u32 2147483647, %v3495
    %v3592 = vand.u32 2147483647, %v3496
    %v3593 = vand.u32 2147483647, %v3497
    %v3594 = vand.u32 2147483647, %v3498
    %v3595 = vand.u32 2147483647, %v3499
    %v3596 = vand.u32 2147483647, %v3500
    %v3597 = vand.u32 2147483647, %v3501
    %v3598 = vand.u32 2147483647, %v3502
    %v3599 = vand.u32 2147483647, %v3503
    %v3600 = vand.u32 2147483647, %v3504
    %v3601 = vand.u32 2147483647, %v3505
    %v3602 = vand.u32 2147483647, %v3506
    %v3603 = vand.u32 2147483647, %v3507
    %v3604 = vand.u32 2147483647, %v3508
    %v3605 = vand.u32 2147483647, %v3509
    %v3606 = vand.u32 2147483647, %v3510
    %v3607 = vand.u32 2147483647, %v3511
    %v3608 = vand.u32 2147483647, %v3512
    %v3609 = vand.u32 2147483647, %v3513
    %v3610 = vand.u32 2147483647, %v3514
    %v3611 = vand.u32 2147483647, %v3515
    %v3612 = vand.u32 2147483647, %v3516
    %v3613 = vand.u32 2147483647, %v3517
    %v3614 = vand.u32 2147483647, %v3518
    %v3615 = vand.u32 2147483647, %v3519
    %v3616 = vand.u32 2147483647, %v3520
    %v3617 = vand.u32 2147483647, %v3521
    %v3618 = vand.u32 2147483647, %v3522
    %v3619 = vand.u32 2147483647, %v3523
    %v3620 = vand.u32 2147483647, %v3524
    %v3621 = vand.u32 2147483647, %v3525
    %v3622 = vand.u32 2147483647, %v3526
    %v3623 = vand.u32 2147483647, %v3527
    %v3624 = vand.u32 2147483647, %v3528
    %v3625 = vand.u32 2147483647, %v3529
    %v3626 = vand.u32 2147483647, %v3530
    %v3627 = vand.u32 2147483647, %v3531
    %v3628 = vand.u32 2147483647, %v3532
    %v3629 = vand.u32 2147483647, %v3533
    %v3630 = vand.u32 2147483647, %v3534
    %v3631 = vand.u32 2147483647, %v3535
    %v3632 = vand.u32 2147483647, %v3536
    %v3633 = vand.u32 2147483647, %v3537
    %v3634 = vand.u32 2147483647, %v3538
    %v3635 = vand.u32 2147483647, %v3539
    %v3636 = vand.u32 2147483647, %v3540
    %v3637 = vand.u32 2147483647, %v3541
    %v3638 = vand.u32 2147483647, %v3542
    %v3639 = vand.u32 2147483647, %v3543
    %v3640 = vand.u32 2147483647, %v3544
    %v3641 = vand.u32 2147483647, %v3545
    %v3642 = vand.u32 2147483647, %v3546
    %v3643 = vand.u32 2147483647, %v3547
    %v3644 = vand.u32 2147483647, %v3548
    %v3645 = vand.u32 2147483647, %v3549
    %v3646 = vand.u32 2147483647, %v3550
    %v3647 = vand.u32 2147483647, %v3551
    %v3648 = vand.u32 2147483647, %v3552
    %v3649 = vand.u32 2147483647, %v3553
    %v3650 = vand.u32 2147483647, %v3554
    %v3651 = vand.u32 2147483647, %v3555
    %v3652 = vand.u32 2147483647, %v3556
    %v3653 = vand.u32 2147483647, %v3557
    %v3654 = vand.u32 2147483647, %v3558
    %v3655 = vand.u32 2147483647, %v3559
    %v3656 = vand.u32 2147483647, %v3560
    %v3657 = vand.u32 2147483647, %v3561
    %v3658 = vand.u32 2147483647, %v3562
    %v3659 = vand.u32 2147483647, %v3563
    %v3660 = vand.u32 2147483647, %v3564
    %v3661 = vand.u32 2147483647, %v3565
    %v3662 = vand.u32 2147483647, %v3566
    %v3663 = vand.u32 2147483647, %v3567
    %v3664 = vand.u32 2147483647, %v3568
    %v3665 = vand.u32 2147483647, %v3569
    %v3666 = vand.u32 2147483647, %v3570
    %v3667 = vand.u32 2147483647, %v3571
    %v3668 = vand.u32 2147483647, %v3572
    %v3669 = vand.u32 2147483647, %v3573
    %v3670 = vand.u32 2147483647, %v3574
    %3767 = vset.pattern.permute.xlu0 0
    %3768 = vperm.xlu0 %3767, %v3575
    %v3769 = vpop.permute.xlu0 %3768
    %3770 = vset.pattern.permute.xlu0 0
    %3771 = vperm.xlu0 %3770, %v3576
    %v3772 = vpop.permute.xlu0 %3771
    %3773 = vset.pattern.permute.xlu0 0
    %3774 = vperm.xlu0 %3773, %v3577
    %v3775 = vpop.permute.xlu0 %3774
    %3776 = vset.pattern.permute.xlu0 0
    %3777 = vperm.xlu0 %3776, %v3578
    %v3778 = vpop.permute.xlu0 %3777
    %3779 = vset.pattern.permute.xlu0 0
    %3780 = vperm.xlu0 %3779, %v3579
    %v3781 = vpop.permute.xlu0 %3780
    %3782 = vset.pattern.permute.xlu0 0
    %3783 = vperm.xlu0 %3782, %v3580
    %v3784 = vpop.permute.xlu0 %3783
    %3785 = vset.pattern.permute.xlu0 0
    %3786 = vperm.xlu0 %3785, %v3581
    %v3787 = vpop.permute.xlu0 %3786
    %3788 = vset.pattern.permute.xlu0 0
    %3789 = vperm.xlu0 %3788, %v3582
    %v3790 = vpop.permute.xlu0 %3789
    %3791 = vset.pattern.permute.xlu0 0
    %3792 = vperm.xlu0 %3791, %v3583
    %v3793 = vpop.permute.xlu0 %3792
    %3794 = vset.pattern.permute.xlu0 0
    %3795 = vperm.xlu0 %3794, %v3584
    %v3796 = vpop.permute.xlu0 %3795
    %3797 = vset.pattern.permute.xlu0 0
    %3798 = vperm.xlu0 %3797, %v3585
    %v3799 = vpop.permute.xlu0 %3798
    %3800 = vset.pattern.permute.xlu0 0
    %3801 = vperm.xlu0 %3800, %v3586
    %v3802 = vpop.permute.xlu0 %3801
    %3803 = vset.pattern.permute.xlu0 0
    %3804 = vperm.xlu0 %3803, %v3587
    %v3805 = vpop.permute.xlu0 %3804
    %3806 = vset.pattern.permute.xlu0 0
    %3807 = vperm.xlu0 %3806, %v3588
    %v3808 = vpop.permute.xlu0 %3807
    %3809 = vset.pattern.permute.xlu0 0
    %3810 = vperm.xlu0 %3809, %v3589
    %v3811 = vpop.permute.xlu0 %3810
    %3812 = vset.pattern.permute.xlu0 0
    %3813 = vperm.xlu0 %3812, %v3590
    %v3814 = vpop.permute.xlu0 %3813
    %3815 = vset.pattern.permute.xlu0 0
    %3816 = vperm.xlu0 %3815, %v3591
    %v3817 = vpop.permute.xlu0 %3816
    %3818 = vset.pattern.permute.xlu0 0
    %3819 = vperm.xlu0 %3818, %v3592
    %v3820 = vpop.permute.xlu0 %3819
    %3821 = vset.pattern.permute.xlu0 0
    %3822 = vperm.xlu0 %3821, %v3593
    %v3823 = vpop.permute.xlu0 %3822
    %3824 = vset.pattern.permute.xlu0 0
    %3825 = vperm.xlu0 %3824, %v3594
    %v3826 = vpop.permute.xlu0 %3825
    %3827 = vset.pattern.permute.xlu0 0
    %3828 = vperm.xlu0 %3827, %v3595
    %v3829 = vpop.permute.xlu0 %3828
    %3830 = vset.pattern.permute.xlu0 0
    %3831 = vperm.xlu0 %3830, %v3596
    %v3832 = vpop.permute.xlu0 %3831
    %3833 = vset.pattern.permute.xlu0 0
    %3834 = vperm.xlu0 %3833, %v3597
    %v3835 = vpop.permute.xlu0 %3834
    %3836 = vset.pattern.permute.xlu0 0
    %3837 = vperm.xlu0 %3836, %v3598
    %v3838 = vpop.permute.xlu0 %3837
    %3839 = vset.pattern.permute.xlu0 0
    %3840 = vperm.xlu0 %3839, %v3599
    %v3841 = vpop.permute.xlu0 %3840
    %3842 = vset.pattern.permute.xlu0 0
    %3843 = vperm.xlu0 %3842, %v3600
    %v3844 = vpop.permute.xlu0 %3843
    %3845 = vset.pattern.permute.xlu0 0
    %3846 = vperm.xlu0 %3845, %v3601
    %v3847 = vpop.permute.xlu0 %3846
    %3848 = vset.pattern.permute.xlu0 0
    %3849 = vperm.xlu0 %3848, %v3602
    %v3850 = vpop.permute.xlu0 %3849
    %3851 = vset.pattern.permute.xlu0 0
    %3852 = vperm.xlu0 %3851, %v3603
    %v3853 = vpop.permute.xlu0 %3852
    %3854 = vset.pattern.permute.xlu0 0
    %3855 = vperm.xlu0 %3854, %v3604
    %v3856 = vpop.permute.xlu0 %3855
    %3857 = vset.pattern.permute.xlu0 0
    %3858 = vperm.xlu0 %3857, %v3605
    %v3859 = vpop.permute.xlu0 %3858
    %3860 = vset.pattern.permute.xlu0 0
    %3861 = vperm.xlu0 %3860, %v3606
    %v3862 = vpop.permute.xlu0 %3861
    %3863 = vset.pattern.permute.xlu0 0
    %3864 = vperm.xlu0 %3863, %v3607
    %v3865 = vpop.permute.xlu0 %3864
    %3866 = vset.pattern.permute.xlu0 0
    %3867 = vperm.xlu0 %3866, %v3608
    %v3868 = vpop.permute.xlu0 %3867
    %3869 = vset.pattern.permute.xlu0 0
    %3870 = vperm.xlu0 %3869, %v3609
    %v3871 = vpop.permute.xlu0 %3870
    %3872 = vset.pattern.permute.xlu0 0
    %3873 = vperm.xlu0 %3872, %v3610
    %v3874 = vpop.permute.xlu0 %3873
    %3875 = vset.pattern.permute.xlu0 0
    %3876 = vperm.xlu0 %3875, %v3611
    %v3877 = vpop.permute.xlu0 %3876
    %3878 = vset.pattern.permute.xlu0 0
    %3879 = vperm.xlu0 %3878, %v3612
    %v3880 = vpop.permute.xlu0 %3879
    %3881 = vset.pattern.permute.xlu0 0
    %3882 = vperm.xlu0 %3881, %v3613
    %v3883 = vpop.permute.xlu0 %3882
    %3884 = vset.pattern.permute.xlu0 0
    %3885 = vperm.xlu0 %3884, %v3614
    %v3886 = vpop.permute.xlu0 %3885
    %3887 = vset.pattern.permute.xlu0 0
    %3888 = vperm.xlu0 %3887, %v3615
    %v3889 = vpop.permute.xlu0 %3888
    %3890 = vset.pattern.permute.xlu0 0
    %3891 = vperm.xlu0 %3890, %v3616
    %v3892 = vpop.permute.xlu0 %3891
    %3893 = vset.pattern.permute.xlu0 0
    %3894 = vperm.xlu0 %3893, %v3617
    %v3895 = vpop.permute.xlu0 %3894
    %3896 = vset.pattern.permute.xlu0 0
    %3897 = vperm.xlu0 %3896, %v3618
    %v3898 = vpop.permute.xlu0 %3897
    %3899 = vset.pattern.permute.xlu0 0
    %3900 = vperm.xlu0 %3899, %v3619
    %v3901 = vpop.permute.xlu0 %3900
    %3902 = vset.pattern.permute.xlu0 0
    %3903 = vperm.xlu0 %3902, %v3620
    %v3904 = vpop.permute.xlu0 %3903
    %3905 = vset.pattern.permute.xlu0 0
    %3906 = vperm.xlu0 %3905, %v3621
    %v3907 = vpop.permute.xlu0 %3906
    %3908 = vset.pattern.permute.xlu0 0
    %3909 = vperm.xlu0 %3908, %v3622
    %v3910 = vpop.permute.xlu0 %3909
    %3911 = vset.pattern.permute.xlu0 0
    %3912 = vperm.xlu0 %3911, %v3623
    %v3913 = vpop.permute.xlu0 %3912
    %3914 = vset.pattern.permute.xlu0 0
    %3915 = vperm.xlu0 %3914, %v3624
    %v3916 = vpop.permute.xlu0 %3915
    %3917 = vset.pattern.permute.xlu0 0
    %3918 = vperm.xlu0 %3917, %v3625
    %v3919 = vpop.permute.xlu0 %3918
    %3920 = vset.pattern.permute.xlu0 0
    %3921 = vperm.xlu0 %3920, %v3626
    %v3922 = vpop.permute.xlu0 %3921
    %3923 = vset.pattern.permute.xlu0 0
    %3924 = vperm.xlu0 %3923, %v3627
    %v3925 = vpop.permute.xlu0 %3924
    %3926 = vset.pattern.permute.xlu0 0
    %3927 = vperm.xlu0 %3926, %v3628
    %v3928 = vpop.permute.xlu0 %3927
    %3929 = vset.pattern.permute.xlu0 0
    %3930 = vperm.xlu0 %3929, %v3629
    %v3931 = vpop.permute.xlu0 %3930
    %3932 = vset.pattern.permute.xlu0 0
    %3933 = vperm.xlu0 %3932, %v3630
    %v3934 = vpop.permute.xlu0 %3933
    %3935 = vset.pattern.permute.xlu0 0
    %3936 = vperm.xlu0 %3935, %v3631
    %v3937 = vpop.permute.xlu0 %3936
    %3938 = vset.pattern.permute.xlu0 0
    %3939 = vperm.xlu0 %3938, %v3632
    %v3940 = vpop.permute.xlu0 %3939
    %3941 = vset.pattern.permute.xlu0 0
    %3942 = vperm.xlu0 %3941, %v3633
    %v3943 = vpop.permute.xlu0 %3942
    %3944 = vset.pattern.permute.xlu0 0
    %3945 = vperm.xlu0 %3944, %v3634
    %v3946 = vpop.permute.xlu0 %3945
    %3947 = vset.pattern.permute.xlu0 0
    %3948 = vperm.xlu0 %3947, %v3635
    %v3949 = vpop.permute.xlu0 %3948
    %3950 = vset.pattern.permute.xlu0 0
    %3951 = vperm.xlu0 %3950, %v3636
    %v3952 = vpop.permute.xlu0 %3951
    %3953 = vset.pattern.permute.xlu0 0
    %3954 = vperm.xlu0 %3953, %v3637
    %v3955 = vpop.permute.xlu0 %3954
    %3956 = vset.pattern.permute.xlu0 0
    %3957 = vperm.xlu0 %3956, %v3638
    %v3958 = vpop.permute.xlu0 %3957
    %3959 = vset.pattern.permute.xlu0 0
    %3960 = vperm.xlu0 %3959, %v3639
    %v3961 = vpop.permute.xlu0 %3960
    %3962 = vset.pattern.permute.xlu0 0
    %3963 = vperm.xlu0 %3962, %v3640
    %v3964 = vpop.permute.xlu0 %3963
    %3965 = vset.pattern.permute.xlu0 0
    %3966 = vperm.xlu0 %3965, %v3641
    %v3967 = vpop.permute.xlu0 %3966
    %3968 = vset.pattern.permute.xlu0 0
    %3969 = vperm.xlu0 %3968, %v3642
    %v3970 = vpop.permute.xlu0 %3969
    %3971 = vset.pattern.permute.xlu0 0
    %3972 = vperm.xlu0 %3971, %v3643
    %v3973 = vpop.permute.xlu0 %3972
    %3974 = vset.pattern.permute.xlu0 0
    %3975 = vperm.xlu0 %3974, %v3644
    %v3976 = vpop.permute.xlu0 %3975
    %3977 = vset.pattern.permute.xlu0 0
    %3978 = vperm.xlu0 %3977, %v3645
    %v3979 = vpop.permute.xlu0 %3978
    %3980 = vset.pattern.permute.xlu0 0
    %3981 = vperm.xlu0 %3980, %v3646
    %v3982 = vpop.permute.xlu0 %3981
    %3983 = vset.pattern.permute.xlu0 0
    %3984 = vperm.xlu0 %3983, %v3647
    %v3985 = vpop.permute.xlu0 %3984
    %3986 = vset.pattern.permute.xlu0 0
    %3987 = vperm.xlu0 %3986, %v3648
    %v3988 = vpop.permute.xlu0 %3987
    %3989 = vset.pattern.permute.xlu0 0
    %3990 = vperm.xlu0 %3989, %v3649
    %v3991 = vpop.permute.xlu0 %3990
    %3992 = vset.pattern.permute.xlu0 0
    %3993 = vperm.xlu0 %3992, %v3650
    %v3994 = vpop.permute.xlu0 %3993
    %3995 = vset.pattern.permute.xlu0 0
    %3996 = vperm.xlu0 %3995, %v3651
    %v3997 = vpop.permute.xlu0 %3996
    %3998 = vset.pattern.permute.xlu0 0
    %3999 = vperm.xlu0 %3998, %v3652
    %v4000 = vpop.permute.xlu0 %3999
    %4001 = vset.pattern.permute.xlu0 0
    %4002 = vperm.xlu0 %4001, %v3653
    %v4003 = vpop.permute.xlu0 %4002
    %4004 = vset.pattern.permute.xlu0 0
    %4005 = vperm.xlu0 %4004, %v3654
    %v4006 = vpop.permute.xlu0 %4005
    %4007 = vset.pattern.permute.xlu0 0
    %4008 = vperm.xlu0 %4007, %v3655
    %v4009 = vpop.permute.xlu0 %4008
    %4010 = vset.pattern.permute.xlu0 0
    %4011 = vperm.xlu0 %4010, %v3656
    %v4012 = vpop.permute.xlu0 %4011
    %4013 = vset.pattern.permute.xlu0 0
    %4014 = vperm.xlu0 %4013, %v3657
    %v4015 = vpop.permute.xlu0 %4014
    %4016 = vset.pattern.permute.xlu0 0
    %4017 = vperm.xlu0 %4016, %v3658
    %v4018 = vpop.permute.xlu0 %4017
    %4019 = vset.pattern.permute.xlu0 0
    %4020 = vperm.xlu0 %4019, %v3659
    %v4021 = vpop.permute.xlu0 %4020
    %4022 = vset.pattern.permute.xlu0 0
    %4023 = vperm.xlu0 %4022, %v3660
    %v4024 = vpop.permute.xlu0 %4023
    %4025 = vset.pattern.permute.xlu0 0
    %4026 = vperm.xlu0 %4025, %v3661
    %v4027 = vpop.permute.xlu0 %4026
    %4028 = vset.pattern.permute.xlu0 0
    %4029 = vperm.xlu0 %4028, %v3662
    %v4030 = vpop.permute.xlu0 %4029
    %4031 = vset.pattern.permute.xlu0 0
    %4032 = vperm.xlu0 %4031, %v3663
    %v4033 = vpop.permute.xlu0 %4032
    %4034 = vset.pattern.permute.xlu0 0
    %4035 = vperm.xlu0 %4034, %v3664
    %v4036 = vpop.permute.xlu0 %4035
    %4037 = vset.pattern.permute.xlu0 0
    %4038 = vperm.xlu0 %4037, %v3665
    %v4039 = vpop.permute.xlu0 %4038
    %4040 = vset.pattern.permute.xlu0 0
    %4041 = vperm.xlu0 %4040, %v3666
    %v4042 = vpop.permute.xlu0 %4041
    %4043 = vset.pattern.permute.xlu0 0
    %4044 = vperm.xlu0 %4043, %v3667
    %v4045 = vpop.permute.xlu0 %4044
    %4046 = vset.pattern.permute.xlu0 0
    %4047 = vperm.xlu0 %4046, %v3668
    %v4048 = vpop.permute.xlu0 %4047
    %4049 = vset.pattern.permute.xlu0 0
    %4050 = vperm.xlu0 %4049, %v3669
    %v4051 = vpop.permute.xlu0 %4050
    %4052 = vset.pattern.permute.xlu0 0
    %4053 = vperm.xlu0 %4052, %v3670
    %v4054 = vpop.permute.xlu0 %4053
    %v4055 = vlaneseq
    %v4056 = vand.u32 %v4055, 127
    %v4057 = vlaneseq
    %v4058 = vshrl.u32 %v4057, 7
    %v4059 = vsub.s32 %v4056, %v4058
    %v4060 = vrot.slane %v3769, %v4059
    %v4061 = vadd.s32 %v4056, 4294967288
    %v4062 = vlaneseq
    %v4063 = vshrl.u32 %v4062, 7
    %v4064 = vsub.s32 %v4061, %v4063
    %v4065 = vrot.slane %v3772, %v4064
    %vm4066 = vcmask 130112
    %v4067 = vsel %vm4066, %v4065, %v4060
    %v4068 = vadd.s32 %v4056, 4294967280
    %v4069 = vlaneseq
    %v4070 = vshrl.u32 %v4069, 7
    %v4071 = vsub.s32 %v4068, %v4070
    %v4072 = vrot.slane %v3775, %v4071
    %vm4073 = vcmask 195712
    %v4074 = vsel %vm4073, %v4072, %v4067
    %v4075 = vadd.s32 %v4056, 4294967272
    %v4076 = vlaneseq
    %v4077 = vshrl.u32 %v4076, 7
    %v4078 = vsub.s32 %v4075, %v4077
    %v4079 = vrot.slane %v3778, %v4078
    %vm4080 = vcmask 261312
    %v4081 = vsel %vm4080, %v4079, %v4074
    %v4082 = vadd.s32 %v4056, 4294967264
    %v4083 = vlaneseq
    %v4084 = vshrl.u32 %v4083, 7
    %v4085 = vsub.s32 %v4082, %v4084
    %v4086 = vrot.slane %v3781, %v4085
    %vm4087 = vcmask 326912
    %v4088 = vsel %vm4087, %v4086, %v4081
    %v4089 = vadd.s32 %v4056, 4294967256
    %v4090 = vlaneseq
    %v4091 = vshrl.u32 %v4090, 7
    %v4092 = vsub.s32 %v4089, %v4091
    %v4093 = vrot.slane %v3784, %v4092
    %vm4094 = vcmask 392512
    %v4095 = vsel %vm4094, %v4093, %v4088
    %v4096 = vadd.s32 %v4056, 4294967248
    %v4097 = vlaneseq
    %v4098 = vshrl.u32 %v4097, 7
    %v4099 = vsub.s32 %v4096, %v4098
    %v4100 = vrot.slane %v3787, %v4099
    %vm4101 = vcmask 458112
    %v4102 = vsel %vm4101, %v4100, %v4095
    %v4103 = vadd.s32 %v4056, 4294967240
    %v4104 = vlaneseq
    %v4105 = vshrl.u32 %v4104, 7
    %v4106 = vsub.s32 %v4103, %v4105
    %v4107 = vrot.slane %v3790, %v4106
    %vm4108 = vcmask 523712
    %v4109 = vsel %vm4108, %v4107, %v4102
    %v4110 = vadd.s32 %v4056, 4294967232
    %v4111 = vlaneseq
    %v4112 = vshrl.u32 %v4111, 7
    %v4113 = vsub.s32 %v4110, %v4112
    %v4114 = vrot.slane %v3793, %v4113
    %vm4115 = vcmask 589312
    %v4116 = vsel %vm4115, %v4114, %v4109
    %v4117 = vadd.s32 %v4056, 4294967224
    %v4118 = vlaneseq
    %v4119 = vshrl.u32 %v4118, 7
    %v4120 = vsub.s32 %v4117, %v4119
    %v4121 = vrot.slane %v3796, %v4120
    %vm4122 = vcmask 654912
    %v4123 = vsel %vm4122, %v4121, %v4116
    %v4124 = vadd.s32 %v4056, 4294967216
    %v4125 = vlaneseq
    %v4126 = vshrl.u32 %v4125, 7
    %v4127 = vsub.s32 %v4124, %v4126
    %v4128 = vrot.slane %v3799, %v4127
    %vm4129 = vcmask 720512
    %v4130 = vsel %vm4129, %v4128, %v4123
    %v4131 = vadd.s32 %v4056, 4294967208
    %v4132 = vlaneseq
    %v4133 = vshrl.u32 %v4132, 7
    %v4134 = vsub.s32 %v4131, %v4133
    %v4135 = vrot.slane %v3802, %v4134
    %vm4136 = vcmask 786112
    %v4137 = vsel %vm4136, %v4135, %v4130
    %v4138 = vadd.s32 %v4056, 4294967200
    %v4139 = vlaneseq
    %v4140 = vshrl.u32 %v4139, 7
    %v4141 = vsub.s32 %v4138, %v4140
    %v4142 = vrot.slane %v3805, %v4141
    %vm4143 = vcmask 851712
    %v4144 = vsel %vm4143, %v4142, %v4137
    %v4145 = vadd.s32 %v4056, 4294967192
    %v4146 = vlaneseq
    %v4147 = vshrl.u32 %v4146, 7
    %v4148 = vsub.s32 %v4145, %v4147
    %v4149 = vrot.slane %v3808, %v4148
    %vm4150 = vcmask 917312
    %v4151 = vsel %vm4150, %v4149, %v4144
    %v4152 = vadd.s32 %v4056, 4294967184
    %v4153 = vlaneseq
    %v4154 = vshrl.u32 %v4153, 7
    %v4155 = vsub.s32 %v4152, %v4154
    %v4156 = vrot.slane %v3811, %v4155
    %vm4157 = vcmask 982912
    %v4158 = vsel %vm4157, %v4156, %v4151
    %v4159 = vadd.s32 %v4056, 4294967176
    %v4160 = vlaneseq
    %v4161 = vshrl.u32 %v4160, 7
    %v4162 = vsub.s32 %v4159, %v4161
    %v4163 = vrot.slane %v3814, %v4162
    %vm4164 = vcmask 1048512
    %v4165 = vsel %vm4164, %v4163, %v4158
    %v4166 = vlaneseq
    %v4167 = vshrl.u32 %v4166, 7
    %v4168 = vsub.s32 %v4056, %v4167
    %v4169 = vrot.slane %v3817, %v4168
    %v4170 = vlaneseq
    %v4171 = vshrl.u32 %v4170, 7
    %v4172 = vsub.s32 %v4061, %v4171
    %v4173 = vrot.slane %v3820, %v4172
    %v4174 = vsel %vm4066, %v4173, %v4169
    %v4175 = vlaneseq
    %v4176 = vshrl.u32 %v4175, 7
    %v4177 = vsub.s32 %v4068, %v4176
    %v4178 = vrot.slane %v3823, %v4177
    %v4179 = vsel %vm4073, %v4178, %v4174
    %v4180 = vlaneseq
    %v4181 = vshrl.u32 %v4180, 7
    %v4182 = vsub.s32 %v4075, %v4181
    %v4183 = vrot.slane %v3826, %v4182
    %v4184 = vsel %vm4080, %v4183, %v4179
    %v4185 = vlaneseq
    %v4186 = vshrl.u32 %v4185, 7
    %v4187 = vsub.s32 %v4082, %v4186
    %v4188 = vrot.slane %v3829, %v4187
    %v4189 = vsel %vm4087, %v4188, %v4184
    %v4190 = vlaneseq
    %v4191 = vshrl.u32 %v4190, 7
    %v4192 = vsub.s32 %v4089, %v4191
    %v4193 = vrot.slane %v3832, %v4192
    %v4194 = vsel %vm4094, %v4193, %v4189
    %v4195 = vlaneseq
    %v4196 = vshrl.u32 %v4195, 7
    %v4197 = vsub.s32 %v4096, %v4196
    %v4198 = vrot.slane %v3835, %v4197
    %v4199 = vsel %vm4101, %v4198, %v4194
    %v4200 = vlaneseq
    %v4201 = vshrl.u32 %v4200, 7
    %v4202 = vsub.s32 %v4103, %v4201
    %v4203 = vrot.slane %v3838, %v4202
    %v4204 = vsel %vm4108, %v4203, %v4199
    %v4205 = vlaneseq
    %v4206 = vshrl.u32 %v4205, 7
    %v4207 = vsub.s32 %v4110, %v4206
    %v4208 = vrot.slane %v3841, %v4207
    %v4209 = vsel %vm4115, %v4208, %v4204
    %v4210 = vlaneseq
    %v4211 = vshrl.u32 %v4210, 7
    %v4212 = vsub.s32 %v4117, %v4211
    %v4213 = vrot.slane %v3844, %v4212
    %v4214 = vsel %vm4122, %v4213, %v4209
    %v4215 = vlaneseq
    %v4216 = vshrl.u32 %v4215, 7
    %v4217 = vsub.s32 %v4124, %v4216
    %v4218 = vrot.slane %v3847, %v4217
    %v4219 = vsel %vm4129, %v4218, %v4214
    %v4220 = vlaneseq
    %v4221 = vshrl.u32 %v4220, 7
    %v4222 = vsub.s32 %v4131, %v4221
    %v4223 = vrot.slane %v3850, %v4222
    %v4224 = vsel %vm4136, %v4223, %v4219
    %v4225 = vlaneseq
    %v4226 = vshrl.u32 %v4225, 7
    %v4227 = vsub.s32 %v4138, %v4226
    %v4228 = vrot.slane %v3853, %v4227
    %v4229 = vsel %vm4143, %v4228, %v4224
    %v4230 = vlaneseq
    %v4231 = vshrl.u32 %v4230, 7
    %v4232 = vsub.s32 %v4145, %v4231
    %v4233 = vrot.slane %v3856, %v4232
    %v4234 = vsel %vm4150, %v4233, %v4229
    %v4235 = vlaneseq
    %v4236 = vshrl.u32 %v4235, 7
    %v4237 = vsub.s32 %v4152, %v4236
    %v4238 = vrot.slane %v3859, %v4237
    %v4239 = vsel %vm4157, %v4238, %v4234
    %v4240 = vlaneseq
    %v4241 = vshrl.u32 %v4240, 7
    %v4242 = vsub.s32 %v4159, %v4241
    %v4243 = vrot.slane %v3862, %v4242
    %v4244 = vsel %vm4164, %v4243, %v4239
    %v4245 = vlaneseq
    %v4246 = vshrl.u32 %v4245, 7
    %v4247 = vsub.s32 %v4056, %v4246
    %v4248 = vrot.slane %v3865, %v4247
    %v4249 = vlaneseq
    %v4250 = vshrl.u32 %v4249, 7
    %v4251 = vsub.s32 %v4061, %v4250
    %v4252 = vrot.slane %v3868, %v4251
    %v4253 = vsel %vm4066, %v4252, %v4248
    %v4254 = vlaneseq
    %v4255 = vshrl.u32 %v4254, 7
    %v4256 = vsub.s32 %v4068, %v4255
    %v4257 = vrot.slane %v3871, %v4256
    %v4258 = vsel %vm4073, %v4257, %v4253
    %v4259 = vlaneseq
    %v4260 = vshrl.u32 %v4259, 7
    %v4261 = vsub.s32 %v4075, %v4260
    %v4262 = vrot.slane %v3874, %v4261
    %v4263 = vsel %vm4080, %v4262, %v4258
    %v4264 = vlaneseq
    %v4265 = vshrl.u32 %v4264, 7
    %v4266 = vsub.s32 %v4082, %v4265
    %v4267 = vrot.slane %v3877, %v4266
    %v4268 = vsel %vm4087, %v4267, %v4263
    %v4269 = vlaneseq
    %v4270 = vshrl.u32 %v4269, 7
    %v4271 = vsub.s32 %v4089, %v4270
    %v4272 = vrot.slane %v3880, %v4271
    %v4273 = vsel %vm4094, %v4272, %v4268
    %v4274 = vlaneseq
    %v4275 = vshrl.u32 %v4274, 7
    %v4276 = vsub.s32 %v4096, %v4275
    %v4277 = vrot.slane %v3883, %v4276
    %v4278 = vsel %vm4101, %v4277, %v4273
    %v4279 = vlaneseq
    %v4280 = vshrl.u32 %v4279, 7
    %v4281 = vsub.s32 %v4103, %v4280
    %v4282 = vrot.slane %v3886, %v4281
    %v4283 = vsel %vm4108, %v4282, %v4278
    %v4284 = vlaneseq
    %v4285 = vshrl.u32 %v4284, 7
    %v4286 = vsub.s32 %v4110, %v4285
    %v4287 = vrot.slane %v3889, %v4286
    %v4288 = vsel %vm4115, %v4287, %v4283
    %v4289 = vlaneseq
    %v4290 = vshrl.u32 %v4289, 7
    %v4291 = vsub.s32 %v4117, %v4290
    %v4292 = vrot.slane %v3892, %v4291
    %v4293 = vsel %vm4122, %v4292, %v4288
    %v4294 = vlaneseq
    %v4295 = vshrl.u32 %v4294, 7
    %v4296 = vsub.s32 %v4124, %v4295
    %v4297 = vrot.slane %v3895, %v4296
    %v4298 = vsel %vm4129, %v4297, %v4293
    %v4299 = vlaneseq
    %v4300 = vshrl.u32 %v4299, 7
    %v4301 = vsub.s32 %v4131, %v4300
    %v4302 = vrot.slane %v3898, %v4301
    %v4303 = vsel %vm4136, %v4302, %v4298
    %v4304 = vlaneseq
    %v4305 = vshrl.u32 %v4304, 7
    %v4306 = vsub.s32 %v4138, %v4305
    %v4307 = vrot.slane %v3901, %v4306
    %v4308 = vsel %vm4143, %v4307, %v4303
    %v4309 = vlaneseq
    %v4310 = vshrl.u32 %v4309, 7
    %v4311 = vsub.s32 %v4145, %v4310
    %v4312 = vrot.slane %v3904, %v4311
    %v4313 = vsel %vm4150, %v4312, %v4308
    %v4314 = vlaneseq
    %v4315 = vshrl.u32 %v4314, 7
    %v4316 = vsub.s32 %v4152, %v4315
    %v4317 = vrot.slane %v3907, %v4316
    %v4318 = vsel %vm4157, %v4317, %v4313
    %v4319 = vlaneseq
    %v4320 = vshrl.u32 %v4319, 7
    %v4321 = vsub.s32 %v4159, %v4320
    %v4322 = vrot.slane %v3910, %v4321
    %v4323 = vsel %vm4164, %v4322, %v4318
    %v4324 = vlaneseq
    %v4325 = vshrl.u32 %v4324, 7
    %v4326 = vsub.s32 %v4056, %v4325
    %v4327 = vrot.slane %v3913, %v4326
    %v4328 = vlaneseq
    %v4329 = vshrl.u32 %v4328, 7
    %v4330 = vsub.s32 %v4061, %v4329
    %v4331 = vrot.slane %v3916, %v4330
    %v4332 = vsel %vm4066, %v4331, %v4327
    %v4333 = vlaneseq
    %v4334 = vshrl.u32 %v4333, 7
    %v4335 = vsub.s32 %v4068, %v4334
    %v4336 = vrot.slane %v3919, %v4335
    %v4337 = vsel %vm4073, %v4336, %v4332
    %v4338 = vlaneseq
    %v4339 = vshrl.u32 %v4338, 7
    %v4340 = vsub.s32 %v4075, %v4339
    %v4341 = vrot.slane %v3922, %v4340
    %v4342 = vsel %vm4080, %v4341, %v4337
    %v4343 = vlaneseq
    %v4344 = vshrl.u32 %v4343, 7
    %v4345 = vsub.s32 %v4082, %v4344
    %v4346 = vrot.slane %v3925, %v4345
    %v4347 = vsel %vm4087, %v4346, %v4342
    %v4348 = vlaneseq
    %v4349 = vshrl.u32 %v4348, 7
    %v4350 = vsub.s32 %v4089, %v4349
    %v4351 = vrot.slane %v3928, %v4350
    %v4352 = vsel %vm4094, %v4351, %v4347
    %v4353 = vlaneseq
    %v4354 = vshrl.u32 %v4353, 7
    %v4355 = vsub.s32 %v4096, %v4354
    %v4356 = vrot.slane %v3931, %v4355
    %v4357 = vsel %vm4101, %v4356, %v4352
    %v4358 = vlaneseq
    %v4359 = vshrl.u32 %v4358, 7
    %v4360 = vsub.s32 %v4103, %v4359
    %v4361 = vrot.slane %v3934, %v4360
    %v4362 = vsel %vm4108, %v4361, %v4357
    %v4363 = vlaneseq
    %v4364 = vshrl.u32 %v4363, 7
    %v4365 = vsub.s32 %v4110, %v4364
    %v4366 = vrot.slane %v3937, %v4365
    %v4367 = vsel %vm4115, %v4366, %v4362
    %v4368 = vlaneseq
    %v4369 = vshrl.u32 %v4368, 7
    %v4370 = vsub.s32 %v4117, %v4369
    %v4371 = vrot.slane %v3940, %v4370
    %v4372 = vsel %vm4122, %v4371, %v4367
    %v4373 = vlaneseq
    %v4374 = vshrl.u32 %v4373, 7
    %v4375 = vsub.s32 %v4124, %v4374
    %v4376 = vrot.slane %v3943, %v4375
    %v4377 = vsel %vm4129, %v4376, %v4372
    %v4378 = vlaneseq
    %v4379 = vshrl.u32 %v4378, 7
    %v4380 = vsub.s32 %v4131, %v4379
    %v4381 = vrot.slane %v3946, %v4380
    %v4382 = vsel %vm4136, %v4381, %v4377
    %v4383 = vlaneseq
    %v4384 = vshrl.u32 %v4383, 7
    %v4385 = vsub.s32 %v4138, %v4384
    %v4386 = vrot.slane %v3949, %v4385
    %v4387 = vsel %vm4143, %v4386, %v4382
    %v4388 = vlaneseq
    %v4389 = vshrl.u32 %v4388, 7
    %v4390 = vsub.s32 %v4145, %v4389
    %v4391 = vrot.slane %v3952, %v4390
    %v4392 = vsel %vm4150, %v4391, %v4387
    %v4393 = vlaneseq
    %v4394 = vshrl.u32 %v4393, 7
    %v4395 = vsub.s32 %v4152, %v4394
    %v4396 = vrot.slane %v3955, %v4395
    %v4397 = vsel %vm4157, %v4396, %v4392
    %v4398 = vlaneseq
    %v4399 = vshrl.u32 %v4398, 7
    %v4400 = vsub.s32 %v4159, %v4399
    %v4401 = vrot.slane %v3958, %v4400
    %v4402 = vsel %vm4164, %v4401, %v4397
    %v4403 = vlaneseq
    %v4404 = vshrl.u32 %v4403, 7
    %v4405 = vsub.s32 %v4056, %v4404
    %v4406 = vrot.slane %v3961, %v4405
    %v4407 = vlaneseq
    %v4408 = vshrl.u32 %v4407, 7
    %v4409 = vsub.s32 %v4061, %v4408
    %v4410 = vrot.slane %v3964, %v4409
    %v4411 = vsel %vm4066, %v4410, %v4406
    %v4412 = vlaneseq
    %v4413 = vshrl.u32 %v4412, 7
    %v4414 = vsub.s32 %v4068, %v4413
    %v4415 = vrot.slane %v3967, %v4414
    %v4416 = vsel %vm4073, %v4415, %v4411
    %v4417 = vlaneseq
    %v4418 = vshrl.u32 %v4417, 7
    %v4419 = vsub.s32 %v4075, %v4418
    %v4420 = vrot.slane %v3970, %v4419
    %v4421 = vsel %vm4080, %v4420, %v4416
    %v4422 = vlaneseq
    %v4423 = vshrl.u32 %v4422, 7
    %v4424 = vsub.s32 %v4082, %v4423
    %v4425 = vrot.slane %v3973, %v4424
    %v4426 = vsel %vm4087, %v4425, %v4421
    %v4427 = vlaneseq
    %v4428 = vshrl.u32 %v4427, 7
    %v4429 = vsub.s32 %v4089, %v4428
    %v4430 = vrot.slane %v3976, %v4429
    %v4431 = vsel %vm4094, %v4430, %v4426
    %v4432 = vlaneseq
    %v4433 = vshrl.u32 %v4432, 7
    %v4434 = vsub.s32 %v4096, %v4433
    %v4435 = vrot.slane %v3979, %v4434
    %v4436 = vsel %vm4101, %v4435, %v4431
    %v4437 = vlaneseq
    %v4438 = vshrl.u32 %v4437, 7
    %v4439 = vsub.s32 %v4103, %v4438
    %v4440 = vrot.slane %v3982, %v4439
    %v4441 = vsel %vm4108, %v4440, %v4436
    %v4442 = vlaneseq
    %v4443 = vshrl.u32 %v4442, 7
    %v4444 = vsub.s32 %v4110, %v4443
    %v4445 = vrot.slane %v3985, %v4444
    %v4446 = vsel %vm4115, %v4445, %v4441
    %v4447 = vlaneseq
    %v4448 = vshrl.u32 %v4447, 7
    %v4449 = vsub.s32 %v4117, %v4448
    %v4450 = vrot.slane %v3988, %v4449
    %v4451 = vsel %vm4122, %v4450, %v4446
    %v4452 = vlaneseq
    %v4453 = vshrl.u32 %v4452, 7
    %v4454 = vsub.s32 %v4124, %v4453
    %v4455 = vrot.slane %v3991, %v4454
    %v4456 = vsel %vm4129, %v4455, %v4451
    %v4457 = vlaneseq
    %v4458 = vshrl.u32 %v4457, 7
    %v4459 = vsub.s32 %v4131, %v4458
    %v4460 = vrot.slane %v3994, %v4459
    %v4461 = vsel %vm4136, %v4460, %v4456
    %v4462 = vlaneseq
    %v4463 = vshrl.u32 %v4462, 7
    %v4464 = vsub.s32 %v4138, %v4463
    %v4465 = vrot.slane %v3997, %v4464
    %v4466 = vsel %vm4143, %v4465, %v4461
    %v4467 = vlaneseq
    %v4468 = vshrl.u32 %v4467, 7
    %v4469 = vsub.s32 %v4145, %v4468
    %v4470 = vrot.slane %v4000, %v4469
    %v4471 = vsel %vm4150, %v4470, %v4466
    %v4472 = vlaneseq
    %v4473 = vshrl.u32 %v4472, 7
    %v4474 = vsub.s32 %v4152, %v4473
    %v4475 = vrot.slane %v4003, %v4474
    %v4476 = vsel %vm4157, %v4475, %v4471
    %v4477 = vlaneseq
    %v4478 = vshrl.u32 %v4477, 7
    %v4479 = vsub.s32 %v4159, %v4478
    %v4480 = vrot.slane %v4006, %v4479
    %v4481 = vsel %vm4164, %v4480, %v4476
    %v4482 = vlaneseq
    %v4483 = vshrl.u32 %v4482, 7
    %v4484 = vsub.s32 %v4056, %v4483
    %v4485 = vrot.slane %v4009, %v4484
    %v4486 = vlaneseq
    %v4487 = vshrl.u32 %v4486, 7
    %v4488 = vsub.s32 %v4061, %v4487
    %v4489 = vrot.slane %v4012, %v4488
    %v4490 = vsel %vm4066, %v4489, %v4485
    %v4491 = vlaneseq
    %v4492 = vshrl.u32 %v4491, 7
    %v4493 = vsub.s32 %v4068, %v4492
    %v4494 = vrot.slane %v4015, %v4493
    %v4495 = vsel %vm4073, %v4494, %v4490
    %v4496 = vlaneseq
    %v4497 = vshrl.u32 %v4496, 7
    %v4498 = vsub.s32 %v4075, %v4497
    %v4499 = vrot.slane %v4018, %v4498
    %v4500 = vsel %vm4080, %v4499, %v4495
    %v4501 = vlaneseq
    %v4502 = vshrl.u32 %v4501, 7
    %v4503 = vsub.s32 %v4082, %v4502
    %v4504 = vrot.slane %v4021, %v4503
    %v4505 = vsel %vm4087, %v4504, %v4500
    %v4506 = vlaneseq
    %v4507 = vshrl.u32 %v4506, 7
    %v4508 = vsub.s32 %v4089, %v4507
    %v4509 = vrot.slane %v4024, %v4508
    %v4510 = vsel %vm4094, %v4509, %v4505
    %v4511 = vlaneseq
    %v4512 = vshrl.u32 %v4511, 7
    %v4513 = vsub.s32 %v4096, %v4512
    %v4514 = vrot.slane %v4027, %v4513
    %v4515 = vsel %vm4101, %v4514, %v4510
    %v4516 = vlaneseq
    %v4517 = vshrl.u32 %v4516, 7
    %v4518 = vsub.s32 %v4103, %v4517
    %v4519 = vrot.slane %v4030, %v4518
    %v4520 = vsel %vm4108, %v4519, %v4515
    %v4521 = vlaneseq
    %v4522 = vshrl.u32 %v4521, 7
    %v4523 = vsub.s32 %v4110, %v4522
    %v4524 = vrot.slane %v4033, %v4523
    %v4525 = vsel %vm4115, %v4524, %v4520
    %v4526 = vlaneseq
    %v4527 = vshrl.u32 %v4526, 7
    %v4528 = vsub.s32 %v4117, %v4527
    %v4529 = vrot.slane %v4036, %v4528
    %v4530 = vsel %vm4122, %v4529, %v4525
    %v4531 = vlaneseq
    %v4532 = vshrl.u32 %v4531, 7
    %v4533 = vsub.s32 %v4124, %v4532
    %v4534 = vrot.slane %v4039, %v4533
    %v4535 = vsel %vm4129, %v4534, %v4530
    %v4536 = vlaneseq
    %v4537 = vshrl.u32 %v4536, 7
    %v4538 = vsub.s32 %v4131, %v4537
    %v4539 = vrot.slane %v4042, %v4538
    %v4540 = vsel %vm4136, %v4539, %v4535
    %v4541 = vlaneseq
    %v4542 = vshrl.u32 %v4541, 7
    %v4543 = vsub.s32 %v4138, %v4542
    %v4544 = vrot.slane %v4045, %v4543
    %v4545 = vsel %vm4143, %v4544, %v4540
    %v4546 = vlaneseq
    %v4547 = vshrl.u32 %v4546, 7
    %v4548 = vsub.s32 %v4145, %v4547
    %v4549 = vrot.slane %v4048, %v4548
    %v4550 = vsel %vm4150, %v4549, %v4545
    %v4551 = vlaneseq
    %v4552 = vshrl.u32 %v4551, 7
    %v4553 = vsub.s32 %v4152, %v4552
    %v4554 = vrot.slane %v4051, %v4553
    %v4555 = vsel %vm4157, %v4554, %v4550
    %v4556 = vlaneseq
    %v4557 = vshrl.u32 %v4556, 7
    %v4558 = vsub.s32 %v4159, %v4557
    %v4559 = vrot.slane %v4054, %v4558
    %v4560 = vsel %vm4164, %v4559, %v4555
    %vm4561 = vcmask 1041409
    %v4562 = vsel %vm4561, %v4402, %v4165
    %v4563 = vsel %vm4561, %v4481, %v4244
    %v4564 = vsel %vm4561, %v4560, %v4323
    %vm4568 = vcmask 1041408
    %v4569 = vsel %vm4568, %v4562, 0.0
    %v4570 = vsel %vm4568, %v4563, 0.0
    %v4571 = vadd.f32 %v4569, %v4570
    %v4572 = vsel %vm4568, %v4564, 0.0
    %v4573 = vadd.f32 %v4571, %v4572
    %4574 = vadd.xlane.f32.xlu0 %v4573
    %v4575 = vpop.xlane.xlu0 %4574
    %v4576 = vrot.slane %v4575, 4
    %v4577 = vadd.f32 %v4575, %v4576
    %v4578 = vrot.slane %v4577, 2
    %v4579 = vadd.f32 %v4577, %v4578
    %v4580 = vrot.slane %v4579, 1
    %v4581 = vadd.f32 %v4579, %v4580
    %s4582 = vtos %v4581
    %s4583 = smul.f32 %s4582, 0.0013020834
    %s4584 = scalar_lea.smem [#allocation2], 0
    %4585 = sst [smem:[%s4584]] %s4583
    // Predicated region
    $region10: #{tpu_custom_call.1} parent=1 // pred_check
      _
    $region11: #{tpu_custom_call.1} parent=1 // pred_check_branch
      %4587 = sbr.rel (0) target = $region13
    $region12: #{tpu_custom_call.1} parent=1 // pred_region
      %s4589 = ssub.s32 16, 16
      %4590 = vsyncadd [#allocation3], %s4589
      %4593 = dma.smem_to_hbm [#allocation2], 16, %s2, [#allocation3]
    $region13: #{tpu_custom_call.1} parent=1 // pred_fallthru
      _
    // Predicated region
    $region14: #{tpu_custom_call.1} parent=1 // pred_check
      _
    $region15: #{tpu_custom_call.1} parent=1 // pred_check_branch
      %4595 = sbr.rel (0) target = $region17
    $region16: #{tpu_custom_call.1} parent=1 // pred_region
      %4596 = dma.done [#allocation3], 16
    $region17: #{tpu_custom_call.1} parent=1 // pred_fallthru
      _
    %4597 = sfence
    %4598 = vsyncpa [#allocation3], 1

</llo_original>
